<compile_context>
chip_gen: v5e
topology: v5e:2x2
jax: 0.10.0
libtpu: 0.0.40
codegen_flags: <defaults>
</compile_context>

<pallas_src>
import functools

import jax
import jax.numpy as jnp
from jax.experimental import pallas as pl
from jax.experimental.pallas import tpu as pltpu

EPS = 1e-5
LANE = 128
_VMEM_LIMIT = 48 * 1024 * 1024
_TAPS = tuple((dy, dx) for dy in range(3) for dx in range(3))


# ---------------------------------------------------------------------------
# Pallas kernels
# ---------------------------------------------------------------------------
def _conv_relu_stats_kernel(x_ref, w_ref, out_ref, stat_ref, *, H, W):
    """conv1 (9 tap matmuls on a spatially padded block) -> ReLU.

    Also emits per-image, per-channel (sum, sum_sq) partials so BN1's batch
    statistics can be finalized across the batch grid outside the kernel.
    """
    cin = x_ref.shape[-1]
    cout = out_ref.shape[-1]
    acc = jnp.zeros((H * W, cout), jnp.float32)
    for t, (dy, dx) in enumerate(_TAPS):
        lhs = x_ref[0, dy:dy + H, dx:dx + W, :].reshape(H * W, cin)   # bf16
        acc = acc + jnp.dot(lhs, w_ref[t], preferred_element_type=jnp.float32)
    acc = jnp.maximum(acc, 0.0)                                       # ReLU
    out_ref[0] = acc
    stat_ref[0, 0:1, :] = jnp.sum(acc, axis=0, keepdims=True)
    stat_ref[0, 1:2, :] = jnp.sum(acc * acc, axis=0, keepdims=True)


def _bn_conv_stats_kernel(y_ref, a_ref, b_ref, w_ref, out_ref, stat_ref, *, H, W):
    """BN1 (folded per-channel affine) -> conv2 (9 tap matmuls).

    The input block is the spatially zero-padded ReLU(conv1) output; after the
    affine the 1-pixel border is re-zeroed so conv2's zero-padding semantics
    are preserved. Emits BN2 partial statistics.
    """
    hp, wp, c = y_ref.shape[1], y_ref.shape[2], y_ref.shape[3]
    cout = out_ref.shape[-1]

    row = jax.lax.broadcasted_iota(jnp.int32, (hp, wp), 0)
    col = jax.lax.broadcasted_iota(jnp.int32, (hp, wp), 1)
    interior = ((row >= 1) & (row <= H) & (col >= 1) & (col <= W))[:, :, None]

    y = y_ref[0] * a_ref[...] + b_ref[...]                 # bn1 affine (f32)
    y = jnp.where(interior, y, 0.0).astype(jnp.bfloat16)   # keep padding = 0

    acc = jnp.zeros((H * W, cout), jnp.float32)
    for t, (dy, dx) in enumerate(_TAPS):
        lhs = y[dy:dy + H, dx:dx + W, :].reshape(H * W, c)
        acc = acc + jnp.dot(lhs, w_ref[t], preferred_element_type=jnp.float32)
    out_ref[0] = acc
    stat_ref[0, 0:1, :] = jnp.sum(acc, axis=0, keepdims=True)
    stat_ref[0, 1:2, :] = jnp.sum(acc * acc, axis=0, keepdims=True)


def _bn_add_relu_kernel(c_ref, id_ref, a_ref, b_ref, o_ref):
    """BN2 (folded affine) + residual add + final ReLU, tiled over rows."""
    y = c_ref[...] * a_ref[...] + b_ref[...] + id_ref[...]
    o_ref[...] = jnp.maximum(y, 0.0)


# ---------------------------------------------------------------------------
# Small helpers (plain JAX glue: padding, tiny per-channel reductions)
# ---------------------------------------------------------------------------
def _round_up(x, m):
    return (x + m - 1) // m * m


def _pad_axis(x, axis, target):
    pad = target - x.shape[axis]
    if pad == 0:
        return x
    cfg = [(0, 0)] * x.ndim
    cfg[axis] = (0, pad)
    return jnp.pad(x, cfg)


def _pick_tm(m):
    for tm in (2048, 1024, 512, 256, 128, 64, 32, 16, 8):
        if m % tm == 0:
            return tm
    return m


def _finalize_bn(stats, gamma, beta, count):
    """Per-image (sum, sum_sq) partials -> per-channel affine (a, b)."""
    s = jnp.sum(stats, axis=0)                       # (2, C)
    mean = s[0] / count
    var = jnp.maximum(s[1] / count - mean * mean, 0.0)
    a = gamma * jax.lax.rsqrt(var + EPS)
    b = beta - a * mean
    return a.reshape(1, -1), b.reshape(1, -1)


# ---------------------------------------------------------------------------
# BasicBlock forward (stride=1, expansion=1, downsample=None configuration)
# ---------------------------------------------------------------------------
def basic_block_forward(x_nchw, params):
    w1, g1, b1 = params["w1"], params["g1"], params["b1"]
    w2, g2, b2 = params["w2"], params["g2"], params["b2"]

    x = jnp.transpose(x_nchw, (0, 2, 3, 1)).astype(jnp.float32)    # NHWC
    N, H, W, Cin = x.shape
    C1, C2 = w1.shape[-1], w2.shape[-1]
    assert Cin == C2, "residual add needs in_channels == out_channels*expansion"

    cin_p = _round_up(Cin, LANE)
    c1_p = _round_up(C1, LANE)
    c2_p = _round_up(C2, LANE)
    M = N * H * W

    # Lane-dense channel padding (padded channels stay exactly zero).
    x_cp = _pad_axis(x, 3, cin_p)
    identity = x_cp.reshape(M, cin_p)                               # f32
    x_pad = jnp.pad(x_cp, ((0, 0), (1, 1), (1, 1), (0, 0))).astype(jnp.bfloat16)

    w1_p = _pad_axis(_pad_axis(w1, 2, cin_p), 3, c1_p)
    w1_p = w1_p.reshape(9, cin_p, c1_p).astype(jnp.bfloat16)
    w2_p = _pad_axis(_pad_axis(w2, 2, c1_p), 3, c2_p)
    w2_p = w2_p.reshape(9, c1_p, c2_p).astype(jnp.bfloat16)
    g1_p, b1_p = _pad_axis(g1, 0, c1_p), _pad_axis(b1, 0, c1_p)
    g2_p, b2_p = _pad_axis(g2, 0, c2_p), _pad_axis(b2, 0, c2_p)

    cparams = pltpu.CompilerParams(dimension_semantics=("parallel",),
                                   vmem_limit_bytes=_VMEM_LIMIT)

    # ---- kernel 1: conv1 + ReLU (+ BN1 partial stats), grid over batch ----
    cost1 = pl.CostEstimate(
        flops=2 * M * 9 * cin_p * c1_p, transcendentals=0,
        bytes_accessed=x_pad.size * 2 + w1_p.size * 2 + M * c1_p * 4)
    out1, stat1 = pl.pallas_call(
        functools.partial(_conv_relu_stats_kernel, H=H, W=W),
        grid=(N,),
        in_specs=[
            pl.BlockSpec((1, H + 2, W + 2, cin_p), lambda n: (n, 0, 0, 0)),
            pl.BlockSpec((9, cin_p, c1_p), lambda n: (0, 0, 0)),     # resident
        ],
        out_specs=[
            pl.BlockSpec((1, H * W, c1_p), lambda n: (n, 0, 0)),
            pl.BlockSpec((1, 2, c1_p), lambda n: (n, 0, 0)),
        ],
        out_shape=[
            jax.ShapeDtypeStruct((N, H * W, c1_p), jnp.float32),
            jax.ShapeDtypeStruct((N, 2, c1_p), jnp.float32),
        ],
        compiler_params=cparams,
        cost_estimate=cost1,
    )(x_pad, w1_p)

    a1, aff_b1 = _finalize_bn(stat1, g1_p, b1_p, float(M))

    # ---- kernel 2: BN1 affine + conv2 (+ BN2 partial stats) ----
    out1_pad = jnp.pad(out1.reshape(N, H, W, c1_p),
                       ((0, 0), (1, 1), (1, 1), (0, 0)))
    cost2 = pl.CostEstimate(
        flops=2 * M * 9 * c1_p * c2_p, transcendentals=0,
        bytes_accessed=out1_pad.size * 4 + w2_p.size * 2 + M * c2_p * 4)
    out2, stat2 = pl.pallas_call(
        functools.partial(_bn_conv_stats_kernel, H=H, W=W),
        grid=(N,),
        in_specs=[
            pl.BlockSpec((1, H + 2, W + 2, c1_p), lambda n: (n, 0, 0, 0)),
            pl.BlockSpec((1, c1_p), lambda n: (0, 0)),
            pl.BlockSpec((1, c1_p), lambda n: (0, 0)),
            pl.BlockSpec((9, c1_p, c2_p), lambda n: (0, 0, 0)),      # resident
        ],
        out_specs=[
            pl.BlockSpec((1, H * W, c2_p), lambda n: (n, 0, 0)),
            pl.BlockSpec((1, 2, c2_p), lambda n: (n, 0, 0)),
        ],
        out_shape=[
            jax.ShapeDtypeStruct((N, H * W, c2_p), jnp.float32),
            jax.ShapeDtypeStruct((N, 2, c2_p), jnp.float32),
        ],
        compiler_params=cparams,
        cost_estimate=cost2,
    )(out1_pad, a1, aff_b1, w2_p)

    a2, aff_b2 = _finalize_bn(stat2, g2_p, b2_p, float(M))

    # ---- kernel 3: BN2 affine + residual add + ReLU, tiled over rows ----
    tm = _pick_tm(M)
    cost3 = pl.CostEstimate(
        flops=4 * M * c2_p, transcendentals=0,
        bytes_accessed=3 * M * c2_p * 4)
    out_flat = pl.pallas_call(
        _bn_add_relu_kernel,
        grid=(M // tm,),
        in_specs=[
            pl.BlockSpec((tm, c2_p), lambda i: (i, 0)),
            pl.BlockSpec((tm, cin_p), lambda i: (i, 0)),
            pl.BlockSpec((1, c2_p), lambda i: (0, 0)),
            pl.BlockSpec((1, c2_p), lambda i: (0, 0)),
        ],
        out_specs=pl.BlockSpec((tm, c2_p), lambda i: (i, 0)),
        out_shape=jax.ShapeDtypeStruct((M, c2_p), jnp.float32),
        compiler_params=cparams,
        cost_estimate=cost3,
    )(out2.reshape(M, c2_p), identity, a2, aff_b2)

    out = out_flat[:, :C2].reshape(N, H, W, C2)
    return jnp.transpose(out, (0, 3, 1, 2))                         # NCHW


# ---------------------------------------------------------------------------
# Deterministic parameter init (shapes from BasicBlock.__init__)
# ---------------------------------------------------------------------------
def init_params(key, in_channels, out_channels, expansion=1):
    k1, k2, k3, k4, k5, k6 = jax.random.split(key, 6)
    cexp = out_channels * expansion
    w1 = jax.random.normal(k1, (3, 3, in_channels, out_channels),
                           jnp.float32) / jnp.sqrt(9.0 * in_channels)
    w2 = jax.random.normal(k2, (3, 3, out_channels, cexp),
                           jnp.float32) / jnp.sqrt(9.0 * out_channels)
    g1 = 1.0 + 0.1 * jax.random.normal(k3, (out_channels,), jnp.float32)
    b1 = 0.1 * jax.random.normal(k4, (out_channels,), jnp.float32)
    g2 = 1.0 + 0.1 * jax.random.normal(k5, (cexp,), jnp.float32)
    b2 = 0.1 * jax.random.normal(k6, (cexp,), jnp.float32)
    return dict(w1=w1, g1=g1, b1=b1, w2=w2, g2=g2, b2=b2)


# ---------------------------------------------------------------------------
# Pure-JAX reference (mirrors the kernel's bf16 quantization points so the
# check is tight; semantics identical to the PyTorch module's forward).
# ---------------------------------------------------------------------------
def reference_forward(x_nchw, params):
    x = jnp.transpose(x_nchw, (0, 2, 3, 1)).astype(jnp.float32)

    def conv(y, w):
        return jax.lax.conv_general_dilated(
            y.astype(jnp.bfloat16), w.astype(jnp.bfloat16),
            window_strides=(1, 1), padding=((1, 1), (1, 1)),
            dimension_numbers=("NHWC", "HWIO", "NHWC"),
            preferred_element_type=jnp.float32)

    def bn(y, g, b):
        mean = jnp.mean(y, axis=(0, 1, 2), keepdims=True)
        var = jnp.mean(jnp.square(y - mean), axis=(0, 1, 2), keepdims=True)
        return (y - mean) * jax.lax.rsqrt(var + EPS) * g + b

    out = conv(x, params["w1"])
    out = jnp.maximum(out, 0.0)
    out = bn(out, params["g1"], params["b1"])
    out = conv(out, params["w2"])
    out = bn(out, params["g2"], params["b2"])
    out = jnp.maximum(out + x, 0.0)
    return jnp.transpose(out, (0, 3, 1, 2))


if __name__ == "__main__":
    key = jax.random.PRNGKey(0)
    kx, kp = jax.random.split(key)

    N, C, H, W = 2, 4, 16, 16          # in_channels == out_channels*expansion
    x = jax.random.normal(kx, (N, C, H, W), jnp.float32)
    params = init_params(kp, in_channels=C, out_channels=C, expansion=1)

    out = jax.block_until_ready(basic_block_forward(x, params))
    ref = jax.block_until_ready(reference_forward(x, params))

    max_err = float(jnp.max(jnp.abs(out - ref)))
    assert out.shape == (N, C, H, W), out.shape
    assert max_err < 2e-2, f"mismatch vs reference: {max_err}"

    print("KERNEL_OK")
</pallas_src>

<mosaic_0001>
module attributes {stable_mosaic.version = 11 : i64} {
  func.func @_conv_relu_stats_kernel(%arg0: i32, %arg1: memref<1x18x18x128xbf16, #tpu.memory_space<vmem>>, %arg2: memref<9x128x128xbf16, #tpu.memory_space<vmem>>, %arg3: memref<1x256x128xf32, #tpu.memory_space<vmem>>, %arg4: memref<1x2x128xf32, #tpu.memory_space<vmem>>) attributes {dimension_semantics = [#tpu.dimension_semantics<parallel>], iteration_bounds = array<i64: 2>, scalar_prefetch = 0 : i64, scratch_operands = 0 : i64, tpu.core_type = #tpu.core_type<tc>, window_params = [{transform_indices = @transform_0, window_bounds = array<i64: 1, 18, 18, 128>}, {pipeline_mode = #tpu.pipeline_mode<synchronous>, transform_indices = @transform_1, window_bounds = array<i64: 9, 128, 128>}, {transform_indices = @transform_2, window_bounds = array<i64: 1, 256, 128>}, {transform_indices = @transform_3, window_bounds = array<i64: 1, 2, 128>}]} {
    %cst = arith.constant 0.000000e+00 : f32
    %0 = vector.broadcast %cst : f32 to vector<256x128xf32>
    %c0 = arith.constant 0 : index
    %c0_0 = arith.constant 0 : index
    %c0_1 = arith.constant 0 : index
    %c0_2 = arith.constant 0 : index
    %1 = vector.load %arg1[%c0, %c0_0, %c0_1, %c0_2] : memref<1x18x18x128xbf16, #tpu.memory_space<vmem>>, vector<1x16x16x128xbf16>
    %2 = vector.shape_cast %1 : vector<1x16x16x128xbf16> to vector<16x16x128xbf16>
    %3 = vector.shape_cast %2 : vector<16x16x128xbf16> to vector<256x128xbf16>
    %c0_3 = arith.constant 0 : index
    %c0_4 = arith.constant 0 : index
    %c0_5 = arith.constant 0 : index
    %4 = vector.load %arg2[%c0_3, %c0_4, %c0_5] : memref<9x128x128xbf16, #tpu.memory_space<vmem>>, vector<1x128x128xbf16>
    %5 = vector.shape_cast %4 : vector<1x128x128xbf16> to vector<128x128xbf16>
    %cst_6 = arith.constant dense<0.000000e+00> : vector<256x128xf32>
    %6 = tpu.matmul %3, %5, %cst_6 {dimension_numbers = #tpu.dot_dimension_numbers<[1], [0], [0], [1], [0, 0, 1, 1], [], []>} : vector<256x128xbf16>, vector<128x128xbf16>, vector<256x128xf32> -> vector<256x128xf32>
    %7 = arith.addf %0, %6 : vector<256x128xf32>
    %c0_7 = arith.constant 0 : index
    %c0_8 = arith.constant 0 : index
    %c1 = arith.constant 1 : index
    %c0_9 = arith.constant 0 : index
    %8 = vector.load %arg1[%c0_7, %c0_8, %c1, %c0_9] : memref<1x18x18x128xbf16, #tpu.memory_space<vmem>>, vector<1x16x16x128xbf16>
    %9 = vector.shape_cast %8 : vector<1x16x16x128xbf16> to vector<16x16x128xbf16>
    %10 = vector.shape_cast %9 : vector<16x16x128xbf16> to vector<256x128xbf16>
    %c1_10 = arith.constant 1 : index
    %c0_11 = arith.constant 0 : index
    %c0_12 = arith.constant 0 : index
    %11 = vector.load %arg2[%c1_10, %c0_11, %c0_12] : memref<9x128x128xbf16, #tpu.memory_space<vmem>>, vector<1x128x128xbf16>
    %12 = vector.shape_cast %11 : vector<1x128x128xbf16> to vector<128x128xbf16>
    %cst_13 = arith.constant dense<0.000000e+00> : vector<256x128xf32>
    %13 = tpu.matmul %10, %12, %cst_13 {dimension_numbers = #tpu.dot_dimension_numbers<[1], [0], [0], [1], [0, 0, 1, 1], [], []>} : vector<256x128xbf16>, vector<128x128xbf16>, vector<256x128xf32> -> vector<256x128xf32>
    %14 = arith.addf %7, %13 : vector<256x128xf32>
    %c0_14 = arith.constant 0 : index
    %c0_15 = arith.constant 0 : index
    %c2 = arith.constant 2 : index
    %c0_16 = arith.constant 0 : index
    %15 = vector.load %arg1[%c0_14, %c0_15, %c2, %c0_16] : memref<1x18x18x128xbf16, #tpu.memory_space<vmem>>, vector<1x16x16x128xbf16>
    %16 = vector.shape_cast %15 : vector<1x16x16x128xbf16> to vector<16x16x128xbf16>
    %17 = vector.shape_cast %16 : vector<16x16x128xbf16> to vector<256x128xbf16>
    %c2_17 = arith.constant 2 : index
    %c0_18 = arith.constant 0 : index
    %c0_19 = arith.constant 0 : index
    %18 = vector.load %arg2[%c2_17, %c0_18, %c0_19] : memref<9x128x128xbf16, #tpu.memory_space<vmem>>, vector<1x128x128xbf16>
    %19 = vector.shape_cast %18 : vector<1x128x128xbf16> to vector<128x128xbf16>
    %cst_20 = arith.constant dense<0.000000e+00> : vector<256x128xf32>
    %20 = tpu.matmul %17, %19, %cst_20 {dimension_numbers = #tpu.dot_dimension_numbers<[1], [0], [0], [1], [0, 0, 1, 1], [], []>} : vector<256x128xbf16>, vector<128x128xbf16>, vector<256x128xf32> -> vector<256x128xf32>
    %21 = arith.addf %14, %20 : vector<256x128xf32>
    %c0_21 = arith.constant 0 : index
    %c1_22 = arith.constant 1 : index
    %c0_23 = arith.constant 0 : index
    %c0_24 = arith.constant 0 : index
    %22 = vector.load %arg1[%c0_21, %c1_22, %c0_23, %c0_24] : memref<1x18x18x128xbf16, #tpu.memory_space<vmem>>, vector<1x16x16x128xbf16>
    %23 = vector.shape_cast %22 : vector<1x16x16x128xbf16> to vector<16x16x128xbf16>
    %24 = vector.shape_cast %23 : vector<16x16x128xbf16> to vector<256x128xbf16>
    %c3 = arith.constant 3 : index
    %c0_25 = arith.constant 0 : index
    %c0_26 = arith.constant 0 : index
    %25 = vector.load %arg2[%c3, %c0_25, %c0_26] : memref<9x128x128xbf16, #tpu.memory_space<vmem>>, vector<1x128x128xbf16>
    %26 = vector.shape_cast %25 : vector<1x128x128xbf16> to vector<128x128xbf16>
    %cst_27 = arith.constant dense<0.000000e+00> : vector<256x128xf32>
    %27 = tpu.matmul %24, %26, %cst_27 {dimension_numbers = #tpu.dot_dimension_numbers<[1], [0], [0], [1], [0, 0, 1, 1], [], []>} : vector<256x128xbf16>, vector<128x128xbf16>, vector<256x128xf32> -> vector<256x128xf32>
    %28 = arith.addf %21, %27 : vector<256x128xf32>
    %c0_28 = arith.constant 0 : index
    %c1_29 = arith.constant 1 : index
    %c1_30 = arith.constant 1 : index
    %c0_31 = arith.constant 0 : index
    %29 = vector.load %arg1[%c0_28, %c1_29, %c1_30, %c0_31] : memref<1x18x18x128xbf16, #tpu.memory_space<vmem>>, vector<1x16x16x128xbf16>
    %30 = vector.shape_cast %29 : vector<1x16x16x128xbf16> to vector<16x16x128xbf16>
    %31 = vector.shape_cast %30 : vector<16x16x128xbf16> to vector<256x128xbf16>
    %c4 = arith.constant 4 : index
    %c0_32 = arith.constant 0 : index
    %c0_33 = arith.constant 0 : index
    %32 = vector.load %arg2[%c4, %c0_32, %c0_33] : memref<9x128x128xbf16, #tpu.memory_space<vmem>>, vector<1x128x128xbf16>
    %33 = vector.shape_cast %32 : vector<1x128x128xbf16> to vector<128x128xbf16>
    %cst_34 = arith.constant dense<0.000000e+00> : vector<256x128xf32>
    %34 = tpu.matmul %31, %33, %cst_34 {dimension_numbers = #tpu.dot_dimension_numbers<[1], [0], [0], [1], [0, 0, 1, 1], [], []>} : vector<256x128xbf16>, vector<128x128xbf16>, vector<256x128xf32> -> vector<256x128xf32>
    %35 = arith.addf %28, %34 : vector<256x128xf32>
    %c0_35 = arith.constant 0 : index
    %c1_36 = arith.constant 1 : index
    %c2_37 = arith.constant 2 : index
    %c0_38 = arith.constant 0 : index
    %36 = vector.load %arg1[%c0_35, %c1_36, %c2_37, %c0_38] : memref<1x18x18x128xbf16, #tpu.memory_space<vmem>>, vector<1x16x16x128xbf16>
    %37 = vector.shape_cast %36 : vector<1x16x16x128xbf16> to vector<16x16x128xbf16>
    %38 = vector.shape_cast %37 : vector<16x16x128xbf16> to vector<256x128xbf16>
    %c5 = arith.constant 5 : index
    %c0_39 = arith.constant 0 : index
    %c0_40 = arith.constant 0 : index
    %39 = vector.load %arg2[%c5, %c0_39, %c0_40] : memref<9x128x128xbf16, #tpu.memory_space<vmem>>, vector<1x128x128xbf16>
    %40 = vector.shape_cast %39 : vector<1x128x128xbf16> to vector<128x128xbf16>
    %cst_41 = arith.constant dense<0.000000e+00> : vector<256x128xf32>
    %41 = tpu.matmul %38, %40, %cst_41 {dimension_numbers = #tpu.dot_dimension_numbers<[1], [0], [0], [1], [0, 0, 1, 1], [], []>} : vector<256x128xbf16>, vector<128x128xbf16>, vector<256x128xf32> -> vector<256x128xf32>
    %42 = arith.addf %35, %41 : vector<256x128xf32>
    %c0_42 = arith.constant 0 : index
    %c2_43 = arith.constant 2 : index
    %c0_44 = arith.constant 0 : index
    %c0_45 = arith.constant 0 : index
    %43 = vector.load %arg1[%c0_42, %c2_43, %c0_44, %c0_45] : memref<1x18x18x128xbf16, #tpu.memory_space<vmem>>, vector<1x16x16x128xbf16>
    %44 = vector.shape_cast %43 : vector<1x16x16x128xbf16> to vector<16x16x128xbf16>
    %45 = vector.shape_cast %44 : vector<16x16x128xbf16> to vector<256x128xbf16>
    %c6 = arith.constant 6 : index
    %c0_46 = arith.constant 0 : index
    %c0_47 = arith.constant 0 : index
    %46 = vector.load %arg2[%c6, %c0_46, %c0_47] : memref<9x128x128xbf16, #tpu.memory_space<vmem>>, vector<1x128x128xbf16>
    %47 = vector.shape_cast %46 : vector<1x128x128xbf16> to vector<128x128xbf16>
    %cst_48 = arith.constant dense<0.000000e+00> : vector<256x128xf32>
    %48 = tpu.matmul %45, %47, %cst_48 {dimension_numbers = #tpu.dot_dimension_numbers<[1], [0], [0], [1], [0, 0, 1, 1], [], []>} : vector<256x128xbf16>, vector<128x128xbf16>, vector<256x128xf32> -> vector<256x128xf32>
    %49 = arith.addf %42, %48 : vector<256x128xf32>
    %c0_49 = arith.constant 0 : index
    %c2_50 = arith.constant 2 : index
    %c1_51 = arith.constant 1 : index
    %c0_52 = arith.constant 0 : index
    %50 = vector.load %arg1[%c0_49, %c2_50, %c1_51, %c0_52] : memref<1x18x18x128xbf16, #tpu.memory_space<vmem>>, vector<1x16x16x128xbf16>
    %51 = vector.shape_cast %50 : vector<1x16x16x128xbf16> to vector<16x16x128xbf16>
    %52 = vector.shape_cast %51 : vector<16x16x128xbf16> to vector<256x128xbf16>
    %c7 = arith.constant 7 : index
    %c0_53 = arith.constant 0 : index
    %c0_54 = arith.constant 0 : index
    %53 = vector.load %arg2[%c7, %c0_53, %c0_54] : memref<9x128x128xbf16, #tpu.memory_space<vmem>>, vector<1x128x128xbf16>
    %54 = vector.shape_cast %53 : vector<1x128x128xbf16> to vector<128x128xbf16>
    %cst_55 = arith.constant dense<0.000000e+00> : vector<256x128xf32>
    %55 = tpu.matmul %52, %54, %cst_55 {dimension_numbers = #tpu.dot_dimension_numbers<[1], [0], [0], [1], [0, 0, 1, 1], [], []>} : vector<256x128xbf16>, vector<128x128xbf16>, vector<256x128xf32> -> vector<256x128xf32>
    %56 = arith.addf %49, %55 : vector<256x128xf32>
    %c0_56 = arith.constant 0 : index
    %c2_57 = arith.constant 2 : index
    %c2_58 = arith.constant 2 : index
    %c0_59 = arith.constant 0 : index
    %57 = vector.load %arg1[%c0_56, %c2_57, %c2_58, %c0_59] : memref<1x18x18x128xbf16, #tpu.memory_space<vmem>>, vector<1x16x16x128xbf16>
    %58 = vector.shape_cast %57 : vector<1x16x16x128xbf16> to vector<16x16x128xbf16>
    %59 = vector.shape_cast %58 : vector<16x16x128xbf16> to vector<256x128xbf16>
    %c8 = arith.constant 8 : index
    %c0_60 = arith.constant 0 : index
    %c0_61 = arith.constant 0 : index
    %60 = vector.load %arg2[%c8, %c0_60, %c0_61] : memref<9x128x128xbf16, #tpu.memory_space<vmem>>, vector<1x128x128xbf16>
    %61 = vector.shape_cast %60 : vector<1x128x128xbf16> to vector<128x128xbf16>
    %cst_62 = arith.constant dense<0.000000e+00> : vector<256x128xf32>
    %62 = tpu.matmul %59, %61, %cst_62 {dimension_numbers = #tpu.dot_dimension_numbers<[1], [0], [0], [1], [0, 0, 1, 1], [], []>} : vector<256x128xbf16>, vector<128x128xbf16>, vector<256x128xf32> -> vector<256x128xf32>
    %63 = arith.addf %56, %62 : vector<256x128xf32>
    %cst_63 = arith.constant 0.000000e+00 : f32
    %64 = vector.broadcast %cst_63 : f32 to vector<256x128xf32>
    %65 = arith.maximumf %63, %64 : vector<256x128xf32>
    %c0_64 = arith.constant 0 : index
    %c0_65 = arith.constant 0 : index
    %c0_66 = arith.constant 0 : index
    %66 = vector.load %arg3[%c0_64, %c0_65, %c0_66] : memref<1x256x128xf32, #tpu.memory_space<vmem>>, vector<1x256x128xf32>
    %67 = vector.shape_cast %66 : vector<1x256x128xf32> to vector<256x128xf32>
    %68 = vector.shape_cast %65 : vector<256x128xf32> to vector<1x256x128xf32>
    tpu.vector_store %arg3[%c0_64, %c0_65, %c0_66], %68 {strides = array<i32>} : memref<1x256x128xf32, #tpu.memory_space<vmem>>, vector<1x256x128xf32>,
    %cst_67 = arith.constant dense<0.000000e+00> : vector<128xf32>
    %69 = vector.multi_reduction <add>, %65, %cst_67 [0] : vector<256x128xf32> to vector<128xf32>
    %70 = vector.shape_cast %69 : vector<128xf32> to vector<1x128xf32>
    %c0_68 = arith.constant 0 : index
    %c0_69 = arith.constant 0 : index
    %c0_70 = arith.constant 0 : index
    %71 = vector.load %arg4[%c0_68, %c0_69, %c0_70] : memref<1x2x128xf32, #tpu.memory_space<vmem>>, vector<1x1x128xf32>
    %72 = vector.shape_cast %71 : vector<1x1x128xf32> to vector<1x128xf32>
    %73 = vector.shape_cast %70 : vector<1x128xf32> to vector<1x1x128xf32>
    tpu.vector_store %arg4[%c0_68, %c0_69, %c0_70], %73 {strides = array<i32>} : memref<1x2x128xf32, #tpu.memory_space<vmem>>, vector<1x1x128xf32>,
    %74 = arith.mulf %65, %65 : vector<256x128xf32>
    %cst_71 = arith.constant dense<0.000000e+00> : vector<128xf32>
    %75 = vector.multi_reduction <add>, %74, %cst_71 [0] : vector<256x128xf32> to vector<128xf32>
    %76 = vector.shape_cast %75 : vector<128xf32> to vector<1x128xf32>
    %c0_72 = arith.constant 0 : index
    %c1_73 = arith.constant 1 : index
    %c0_74 = arith.constant 0 : index
    %77 = vector.load %arg4[%c0_72, %c1_73, %c0_74] : memref<1x2x128xf32, #tpu.memory_space<vmem>>, vector<1x1x128xf32>
    %78 = vector.shape_cast %77 : vector<1x1x128xf32> to vector<1x128xf32>
    %79 = vector.shape_cast %76 : vector<1x128xf32> to vector<1x1x128xf32>
    tpu.vector_store %arg4[%c0_72, %c1_73, %c0_74], %79 {strides = array<i32>} : memref<1x2x128xf32, #tpu.memory_space<vmem>>, vector<1x1x128xf32>,
    return
  }
  func.func @transform_0(%arg0: i32) -> (i32, i32, i32, i32) {
    %c0_i32 = arith.constant 0 : i32
    %c0_i32_0 = arith.constant 0 : i32
    %c0_i32_1 = arith.constant 0 : i32
    %c0_i32_2 = arith.constant 0 : i32
    return %arg0, %c0_i32, %c0_i32_0, %c0_i32_1 : i32, i32, i32, i32
  }
  func.func @transform_1(%arg0: i32) -> (i32, i32, i32) {
    %c0_i32 = arith.constant 0 : i32
    %c0_i32_0 = arith.constant 0 : i32
    %c0_i32_1 = arith.constant 0 : i32
    %c0_i32_2 = arith.constant 0 : i32
    return %c0_i32, %c0_i32_0, %c0_i32_1 : i32, i32, i32
  }
  func.func @transform_2(%arg0: i32) -> (i32, i32, i32) {
    %c0_i32 = arith.constant 0 : i32
    %c0_i32_0 = arith.constant 0 : i32
    %c0_i32_1 = arith.constant 0 : i32
    return %arg0, %c0_i32, %c0_i32_0 : i32, i32, i32
  }
  func.func @transform_3(%arg0: i32) -> (i32, i32, i32) {
    %c0_i32 = arith.constant 0 : i32
    %c0_i32_0 = arith.constant 0 : i32
    %c0_i32_1 = arith.constant 0 : i32
    return %arg0, %c0_i32, %c0_i32_0 : i32, i32, i32
  }
}

</mosaic_0001>

<llo_original>
// kernel: tpu_custom_call.1
$region0: #{tpu_custom_call.1}
  #allocation0 [shape = 'u32[]', space=smem, size = 0x4, offset = 0x4, fixed_abs, tag = 'smem constant byte address 0x4 - core index']
  #allocation1 [shape = 'u32[72,128]{1,0:T(1,128)}', space=vmem, size = 0x9000, scoped, tag = 'internal scratch']
  %s0 = inlined_call_operand.vmem [shape: bf16[2,18,18,128], index: 0, kind: input, shape index: {}]
  %s1 = inlined_call_operand.vmem [shape: bf16[9,128,128], index: 1, kind: input, shape index: {}]
  %s2 = inlined_call_operand.hbm [shape: f32[2,256,128], index: 2, kind: output, shape index: {0}]
  %s3 = inlined_call_operand.hbm [shape: f32[2,2,128], index: 3, kind: output, shape index: {1}]
  %4 = xla_tuple %s2, %s3
  %s5 = sld [smem:[#allocation0]]
  $region49: #{tpu_custom_call.1} parent=0
    _
  %s7 = ssub.s32 1, %s5
  %s8 = scalar_select 0, %s7, %s5
  $region1: #{tpu_custom_call.1} parent=0
    #allocation2 [shape = 'u8[262144]{0}', space=vmem, size = 0x40000, scoped, tag = 'output window, operand 0']
    #allocation3 [shape = 's32[2]{0}', space=sflag, size = 0x8, scoped, tag = 'scoped memory for tpu_custom_call.1']
    #allocation4 [shape = 'u8[2048]{0}', space=vmem, size = 0x800, scoped, tag = 'output window, operand 1']
    #allocation5 [shape = 's32[2]{0}', space=sflag, size = 0x8, scoped, tag = 'scoped memory for tpu_custom_call.1']
    %9 = vsyncpa [#allocation3], 0
    %s10 = scalar_lea.sflag [#allocation3], 1
    %11 = vsyncpa %s10, 0
    %12 = vsyncpa [#allocation5], 0
    %s13 = scalar_lea.sflag [#allocation5], 1
    %14 = vsyncpa %s13, 0
    loop: start=0, step=1, limit=4
    $region2: #{tpu_custom_call.1} parent=1 // loop_pre_header
      _
    $region3: #{tpu_custom_call.1} parent=1 // loop_header
      %s16 = sphi 0, %s20
      %p17 = scmp.ge.s32.totalorder %s16, 4
      %s26 = sphi 0, %s28
      %s29 = sphi 0, %s26
      %s30 = sphi 0, %s29
      %s46 = sphi 0, %s30
      %s50 = sphi 0, %s50
      %s52 = sphi 0, %s50
      %s53 = sphi 0, %s52
      %s67 = sphi 0, %s53
      %s73 = sphi 0, %s75
      %s76 = sphi 0, %s73
      %s77 = sphi 0, %s76
      %s93 = sphi 0, %s77
      %s99 = sphi 0, %s101
      %s102 = sphi 0, %s99
      %s103 = sphi 0, %s102
      %s119 = sphi 0, %s103
    $region4: #{tpu_custom_call.1} parent=1 // loop_header_branch
      %19 = sbr.rel (%p17) target = $region8
    $region5: #{tpu_custom_call.1} parent=1 // loop_body
      %s21 = ssub.s32 %s16, 1
      %s22 = ssub.s32 %s16, 2
      %s23 = sadd.s32 %s16, 1
      %s24 = ssub.s32 %s16, %s23
      %p25 = scmp.eq.s32.totalorder %s24, 0
      %s27 = sadd.s32 %s26, 1
      %s28 = scalar_select %p25, %s26, %s27
      %p31 = pneg %p25
      %p32 = scmp.eq.s32.totalorder %s16, 1
      %p33 = por %p31, %p32
      %p34 = scmp.ne.s32.totalorder %s26, %s29
      %p35 = scmp.eq.s32.totalorder %s16, 0
      %p36 = por %p34, %p35
      %p37 = scmp.ne.s32.totalorder %s26, %s29
      %p38 = scmp.eq.s32.totalorder %s21, 1
      %p39 = por %p37, %p38
      %p40 = scmp.ne.s32.totalorder %s29, %s30
      %p41 = scmp.eq.s32.totalorder %s21, 0
      %p42 = por %p40, %p41
      %p43 = scmp.ne.s32.totalorder %s29, %s30
      %p44 = scmp.eq.s32.totalorder %s22, 1
      %p45 = por %p43, %p44
      %p47 = scmp.ne.s32.totalorder %s30, %s46
      %p48 = scmp.eq.s32.totalorder %s22, 0
      %p49 = por %p47, %p48
      %s51 = sadd.s32 %s50, 1
      %p54 = scmp.eq.s32.totalorder %s16, 1
      %p55 = scmp.ne.s32.totalorder %s50, %s52
      %p56 = scmp.eq.s32.totalorder %s16, 0
      %p57 = por %p55, %p56
      %p58 = scmp.ne.s32.totalorder %s50, %s52
      %p59 = scmp.eq.s32.totalorder %s21, 1
      %p60 = por %p58, %p59
      %p61 = scmp.ne.s32.totalorder %s52, %s53
      %p62 = scmp.eq.s32.totalorder %s21, 0
      %p63 = por %p61, %p62
      %p64 = scmp.ne.s32.totalorder %s52, %s53
      %p65 = scmp.eq.s32.totalorder %s22, 1
      %p66 = por %p64, %p65
      %p68 = scmp.ne.s32.totalorder %s53, %s67
      %p69 = scmp.eq.s32.totalorder %s22, 0
      %p70 = por %p68, %p69
      %s71 = ssub.s32 %s16, %s23
      %p72 = scmp.eq.s32.totalorder %s71, 0
      %s74 = sadd.s32 %s73, 1
      %s75 = scalar_select %p72, %s73, %s74
      %p78 = pneg %p72
      %p79 = scmp.eq.s32.totalorder %s16, 1
      %p80 = por %p78, %p79
      %p81 = scmp.ne.s32.totalorder %s73, %s76
      %p82 = scmp.eq.s32.totalorder %s16, 0
      %p83 = por %p81, %p82
      %p84 = scmp.ne.s32.totalorder %s73, %s76
      %p85 = scmp.eq.s32.totalorder %s21, 1
      %p86 = por %p84, %p85
      %p87 = scmp.ne.s32.totalorder %s76, %s77
      %p88 = scmp.eq.s32.totalorder %s21, 0
      %p89 = por %p87, %p88
      %p90 = scmp.ne.s32.totalorder %s76, %s77
      %p91 = scmp.eq.s32.totalorder %s22, 1
      %p92 = por %p90, %p91
      %p94 = scmp.ne.s32.totalorder %s77, %s93
      %p95 = scmp.eq.s32.totalorder %s22, 0
      %p96 = por %p94, %p95
      %s97 = ssub.s32 %s16, %s23
      %p98 = scmp.eq.s32.totalorder %s97, 0
      %s100 = sadd.s32 %s99, 1
      %s101 = scalar_select %p98, %s99, %s100
      %p104 = pneg %p98
      %p105 = scmp.eq.s32.totalorder %s16, 1
      %p106 = por %p104, %p105
      %p107 = scmp.ne.s32.totalorder %s99, %s102
      %p108 = scmp.eq.s32.totalorder %s16, 0
      %p109 = por %p107, %p108
      %p110 = scmp.ne.s32.totalorder %s99, %s102
      %p111 = scmp.eq.s32.totalorder %s21, 1
      %p112 = por %p110, %p111
      %p113 = scmp.ne.s32.totalorder %s102, %s103
      %p114 = scmp.eq.s32.totalorder %s21, 0
      %p115 = por %p113, %p114
      %p116 = scmp.ne.s32.totalorder %s102, %s103
      %p117 = scmp.eq.s32.totalorder %s22, 1
      %p118 = por %p116, %p117
      %p120 = scmp.ne.s32.totalorder %s103, %s119
      %p121 = scmp.eq.s32.totalorder %s22, 0
      %p122 = por %p120, %p121
      %p123 = scmp.le.s32.totalorder 1, %s16
      %p124 = scmp.lt.s32.totalorder %s16, 3
      %p125 = pnand %p123, %p124
      %p126 = pneg %p125
      // Predicated region
      $region9: #{tpu_custom_call.1} parent=5 // pred_check
        _
      $region10: #{tpu_custom_call.1} parent=5 // pred_check_branch
        %128 = sbr.rel (%p125) target = $region12
      $region11: #{tpu_custom_call.1} parent=5 // pred_region
        %s129 = ssub.s32 %s16, 1
        // Predicated region
        $region13: #{tpu_custom_call.1} parent=11 // pred_check
          %p130 = pneg %p63
        $region14: #{tpu_custom_call.1} parent=11 // pred_check_branch
          %132 = sbr.rel (%p130) target = $region16
        $region15: #{tpu_custom_call.1} parent=11 // pred_region
          _
        $region16: #{tpu_custom_call.1} parent=11 // pred_fallthru
          _
      $region12: #{tpu_custom_call.1} parent=5 // pred_fallthru
        _
      %p133 = scmp.lt.s32.totalorder %s16, 2
      // Predicated region
      $region17: #{tpu_custom_call.1} parent=5 // pred_check
        %p134 = pneg %p133
      $region18: #{tpu_custom_call.1} parent=5 // pred_check_branch
        %136 = sbr.rel (%p134) target = $region20
      $region19: #{tpu_custom_call.1} parent=5 // pred_region
        // Predicated region
        $region21: #{tpu_custom_call.1} parent=19 // pred_check
          %p137 = pneg %p36
        $region22: #{tpu_custom_call.1} parent=19 // pred_check_branch
          %139 = sbr.rel (%p137) target = $region24
        $region23: #{tpu_custom_call.1} parent=19 // pred_region
          %p140 = scmp.lt.s32.totalorder %s16, 1
          %s141 = scalar_select %p140, %s16, 1
          %s142 = smul.addr %s141, 54
          %s143 = smul.addr %s142, 4
          %s144 = scalar_lea.vmem %s0, %s143
        $region24: #{tpu_custom_call.1} parent=19 // pred_fallthru
          _
      $region20: #{tpu_custom_call.1} parent=5 // pred_fallthru
        _
      %p145 = scmp.le.s32.totalorder 1, %s16
      %p146 = scmp.lt.s32.totalorder %s16, 3
      %p147 = pnand %p145, %p146
      %p148 = pneg %p147
      // Predicated region
      $region25: #{tpu_custom_call.1} parent=5 // pred_check
        _
      $region26: #{tpu_custom_call.1} parent=5 // pred_check_branch
        %150 = sbr.rel (%p147) target = $region28
      $region27: #{tpu_custom_call.1} parent=5 // pred_region
        %s151 = ssub.s32 %s16, 1
        %p152 = scmp.lt.s32.totalorder %s21, 1
        %s153 = scalar_select %p152, %s21, 1
        %s154 = smul.addr %s153, 54
        %s155 = smul.addr %s154, 4
        %s156 = scalar_lea.vmem %s0, %s155
        %p157 = pneg %p42
        %p158 = pneg %p39
        %p159 = pneg %p63
        %p160 = pneg %p60
        %p161 = pneg %p89
        %p162 = pneg %p86
        %s163 = sand.u32 %s76, 1
        %s164 = scalar_lea.sflag [#allocation3], %s163
        %s165 = sand.u32 %s76, 1
        %s166 = smul.addr %s165, 256
        %s167 = scalar_lea.vmem [#allocation2], %s166
        %p168 = pneg %p115
        %p169 = pneg %p112
        %s170 = sand.u32 %s102, 1
        %s171 = scalar_lea.sflag [#allocation5], %s170
        %s172 = sand.u32 %s102, 1
        %s173 = smul.addr %s172, 2
        %s174 = scalar_lea.vmem [#allocation4], %s173
        %p175 = scmp.lt.s32.totalorder %s21, 1
        %s176 = scalar_select %p175, %s21, 1
        %s177 = smul.addr %s176, 54
        %s178 = smul.addr %s177, 4
        %s179 = scalar_lea.vmem %s0, %s178
        %v180 = vld [vmem:[%s179] sm:$0xf]
        %v181 = vld [vmem:[%s179 + $0x4] sm:$0xf]
        %v182 = vld [vmem:[%s179 + $0xc] sm:$0xf]
        %v183 = vld [vmem:[%s179 + $0x10] sm:$0xf]
        %v184 = vld [vmem:[%s179 + $0x18] sm:$0xf]
        %v185 = vld [vmem:[%s179 + $0x1c] sm:$0xf]
        %v186 = vld [vmem:[%s179 + $0x24] sm:$0xf]
        %v187 = vld [vmem:[%s179 + $0x28] sm:$0xf]
        %v188 = vld [vmem:[%s179 + $0x30] sm:$0xf]
        %v189 = vld [vmem:[%s179 + $0x34] sm:$0xf]
        %v190 = vld [vmem:[%s179 + $0x3c] sm:$0xf]
        %v191 = vld [vmem:[%s179 + $0x40] sm:$0xf]
        %v192 = vld [vmem:[%s179 + $0x48] sm:$0xf]
        %v193 = vld [vmem:[%s179 + $0x4c] sm:$0xf]
        %v194 = vld [vmem:[%s179 + $0x54] sm:$0xf]
        %v195 = vld [vmem:[%s179 + $0x58] sm:$0xf]
        %v196 = vld [vmem:[%s179 + $0x60] sm:$0xf]
        %v197 = vld [vmem:[%s179 + $0x64] sm:$0xf]
        %v198 = vld [vmem:[%s179 + $0x6c] sm:$0xf]
        %v199 = vld [vmem:[%s179 + $0x70] sm:$0xf]
        %v200 = vld [vmem:[%s179 + $0x78] sm:$0xf]
        %v201 = vld [vmem:[%s179 + $0x7c] sm:$0xf]
        %v202 = vld [vmem:[%s179 + $0x84] sm:$0xf]
        %v203 = vld [vmem:[%s179 + $0x88] sm:$0xf]
        %v204 = vld [vmem:[%s179 + $0x90] sm:$0xf]
        %v205 = vld [vmem:[%s179 + $0x94] sm:$0xf]
        %v206 = vld [vmem:[%s179 + $0x9c] sm:$0xf]
        %v207 = vld [vmem:[%s179 + $0xa0] sm:$0xf]
        %v208 = vld [vmem:[%s179 + $0xa8] sm:$0xf]
        %v209 = vld [vmem:[%s179 + $0xac] sm:$0xf]
        %v210 = vld [vmem:[%s179 + $0xb4] sm:$0xf]
        %v211 = vld [vmem:[%s179 + $0xb8] sm:$0xf]
        %v212 = vld [vmem:[%s1] sm:$0xf]
        %v213 = vld [vmem:[%s1 + $0x4] sm:$0xf]
        %v214 = vld [vmem:[%s1 + $0x8] sm:$0xf]
        %v215 = vld [vmem:[%s1 + $0xc] sm:$0xf]
        %v216 = vld [vmem:[%s1 + $0x10] sm:$0xf]
        %v217 = vld [vmem:[%s1 + $0x14] sm:$0xf]
        %v218 = vld [vmem:[%s1 + $0x18] sm:$0xf]
        %v219 = vld [vmem:[%s1 + $0x1c] sm:$0xf]
        %v220 = vld [vmem:[%s1 + $0x20] sm:$0xf]
        %v221 = vld [vmem:[%s1 + $0x24] sm:$0xf]
        %v222 = vld [vmem:[%s1 + $0x28] sm:$0xf]
        %v223 = vld [vmem:[%s1 + $0x2c] sm:$0xf]
        %v224 = vld [vmem:[%s1 + $0x30] sm:$0xf]
        %v225 = vld [vmem:[%s1 + $0x34] sm:$0xf]
        %v226 = vld [vmem:[%s1 + $0x38] sm:$0xf]
        %v227 = vld [vmem:[%s1 + $0x3c] sm:$0xf]
        %v228 = vld [vmem:[%s179 + $0x8] sm:$0x1]
        %v229 = vld [vmem:[%s179 + $0x14] sm:$0x1]
        %v230 = vld [vmem:[%s179 + $0x20] sm:$0x1]
        %v231 = vld [vmem:[%s179 + $0x2c] sm:$0x1]
        %v232 = vld [vmem:[%s179 + $0x38] sm:$0x1]
        %v233 = vld [vmem:[%s179 + $0x44] sm:$0x1]
        %v234 = vld [vmem:[%s179 + $0x50] sm:$0x1]
        %v235 = vld [vmem:[%s179 + $0x5c] sm:$0x1]
        %v236 = vld [vmem:[%s179 + $0x68] sm:$0x1]
        %v237 = vld [vmem:[%s179 + $0x74] sm:$0x1]
        %v238 = vld [vmem:[%s179 + $0x80] sm:$0x1]
        %v239 = vld [vmem:[%s179 + $0x8c] sm:$0x1]
        %v240 = vld [vmem:[%s179 + $0x98] sm:$0x1]
        %v241 = vld [vmem:[%s179 + $0xa4] sm:$0x1]
        %v242 = vld [vmem:[%s179 + $0xb0] sm:$0x1]
        %v243 = vld [vmem:[%s179 + $0xbc] sm:$0x1]
        %vm244 = vsmask.f32 3328
        %vm245 = vsmask.f32 7440
        %vm246 = vmor %vm244, %vm245
        %v248 = vshrl.u32 %v180, 16
        %v250 = vrot.slane %v248, 4
        %v251 = vshll.u32 %v180, 16
        %v253 = vrot.slane %v251, 5
        %v254 = vor.u32 %v250, %v253
        %v255 = vrot.slane %v254, 4
        %v257 = vshll.u32 %v181, 16
        %v259 = vrot.slane %v257, 5
        %v260 = vsel %vm246, %v255, %v259
        %v261 = vshrl.u32 %v181, 16
        %v263 = vrot.slane %v261, 4
        %v264 = vor.u32 %v263, %v259
        %v265 = vrot.slane %v264, 4
        %v267 = vshll.u32 %v228, 16
        %v269 = vrot.slane %v267, 5
        %v270 = vsel %vm246, %v265, %v269
        %v272 = vshrl.u32 %v182, 16
        %v274 = vrot.slane %v272, 4
        %v275 = vshll.u32 %v182, 16
        %v277 = vrot.slane %v275, 5
        %v278 = vor.u32 %v274, %v277
        %v279 = vrot.slane %v278, 4
        %v281 = vshll.u32 %v183, 16
        %v283 = vrot.slane %v281, 5
        %v284 = vsel %vm246, %v279, %v283
        %v285 = vshrl.u32 %v183, 16
        %v287 = vrot.slane %v285, 4
        %v288 = vor.u32 %v287, %v283
        %v289 = vrot.slane %v288, 4
        %v291 = vshll.u32 %v229, 16
        %v293 = vrot.slane %v291, 5
        %v294 = vsel %vm246, %v289, %v293
        %v296 = vshrl.u32 %v184, 16
        %v298 = vrot.slane %v296, 4
        %v299 = vshll.u32 %v184, 16
        %v301 = vrot.slane %v299, 5
        %v302 = vor.u32 %v298, %v301
        %v303 = vrot.slane %v302, 4
        %v305 = vshll.u32 %v185, 16
        %v307 = vrot.slane %v305, 5
        %v308 = vsel %vm246, %v303, %v307
        %v309 = vshrl.u32 %v185, 16
        %v311 = vrot.slane %v309, 4
        %v312 = vor.u32 %v311, %v307
        %v313 = vrot.slane %v312, 4
        %v315 = vshll.u32 %v230, 16
        %v317 = vrot.slane %v315, 5
        %v318 = vsel %vm246, %v313, %v317
        %v320 = vshrl.u32 %v186, 16
        %v322 = vrot.slane %v320, 4
        %v323 = vshll.u32 %v186, 16
        %v325 = vrot.slane %v323, 5
        %v326 = vor.u32 %v322, %v325
        %v327 = vrot.slane %v326, 4
        %v329 = vshll.u32 %v187, 16
        %v331 = vrot.slane %v329, 5
        %v332 = vsel %vm246, %v327, %v331
        %v333 = vshrl.u32 %v187, 16
        %v335 = vrot.slane %v333, 4
        %v336 = vor.u32 %v335, %v331
        %v337 = vrot.slane %v336, 4
        %v339 = vshll.u32 %v231, 16
        %v341 = vrot.slane %v339, 5
        %v342 = vsel %vm246, %v337, %v341
        %v344 = vshrl.u32 %v188, 16
        %v346 = vrot.slane %v344, 4
        %v347 = vshll.u32 %v188, 16
        %v349 = vrot.slane %v347, 5
        %v350 = vor.u32 %v346, %v349
        %v351 = vrot.slane %v350, 4
        %v353 = vshll.u32 %v189, 16
        %v355 = vrot.slane %v353, 5
        %v356 = vsel %vm246, %v351, %v355
        %v357 = vshrl.u32 %v189, 16
        %v359 = vrot.slane %v357, 4
        %v360 = vor.u32 %v359, %v355
        %v361 = vrot.slane %v360, 4
        %v363 = vshll.u32 %v232, 16
        %v365 = vrot.slane %v363, 5
        %v366 = vsel %vm246, %v361, %v365
        %v368 = vshrl.u32 %v190, 16
        %v370 = vrot.slane %v368, 4
        %v371 = vshll.u32 %v190, 16
        %v373 = vrot.slane %v371, 5
        %v374 = vor.u32 %v370, %v373
        %v375 = vrot.slane %v374, 4
        %v377 = vshll.u32 %v191, 16
        %v379 = vrot.slane %v377, 5
        %v380 = vsel %vm246, %v375, %v379
        %v381 = vshrl.u32 %v191, 16
        %v383 = vrot.slane %v381, 4
        %v384 = vor.u32 %v383, %v379
        %v385 = vrot.slane %v384, 4
        %v387 = vshll.u32 %v233, 16
        %v389 = vrot.slane %v387, 5
        %v390 = vsel %vm246, %v385, %v389
        %v392 = vshrl.u32 %v192, 16
        %v394 = vrot.slane %v392, 4
        %v395 = vshll.u32 %v192, 16
        %v397 = vrot.slane %v395, 5
        %v398 = vor.u32 %v394, %v397
        %v399 = vrot.slane %v398, 4
        %v401 = vshll.u32 %v193, 16
        %v403 = vrot.slane %v401, 5
        %v404 = vsel %vm246, %v399, %v403
        %v405 = vshrl.u32 %v193, 16
        %v407 = vrot.slane %v405, 4
        %v408 = vor.u32 %v407, %v403
        %v409 = vrot.slane %v408, 4
        %v411 = vshll.u32 %v234, 16
        %v413 = vrot.slane %v411, 5
        %v414 = vsel %vm246, %v409, %v413
        %v416 = vshrl.u32 %v194, 16
        %v418 = vrot.slane %v416, 4
        %v419 = vshll.u32 %v194, 16
        %v421 = vrot.slane %v419, 5
        %v422 = vor.u32 %v418, %v421
        %v423 = vrot.slane %v422, 4
        %v425 = vshll.u32 %v195, 16
        %v427 = vrot.slane %v425, 5
        %v428 = vsel %vm246, %v423, %v427
        %v429 = vshrl.u32 %v195, 16
        %v431 = vrot.slane %v429, 4
        %v432 = vor.u32 %v431, %v427
        %v433 = vrot.slane %v432, 4
        %v435 = vshll.u32 %v235, 16
        %v437 = vrot.slane %v435, 5
        %v438 = vsel %vm246, %v433, %v437
        %v440 = vshrl.u32 %v196, 16
        %v442 = vrot.slane %v440, 4
        %v443 = vshll.u32 %v196, 16
        %v445 = vrot.slane %v443, 5
        %v446 = vor.u32 %v442, %v445
        %v447 = vrot.slane %v446, 4
        %v449 = vshll.u32 %v197, 16
        %v451 = vrot.slane %v449, 5
        %v452 = vsel %vm246, %v447, %v451
        %v453 = vshrl.u32 %v197, 16
        %v455 = vrot.slane %v453, 4
        %v456 = vor.u32 %v455, %v451
        %v457 = vrot.slane %v456, 4
        %v459 = vshll.u32 %v236, 16
        %v461 = vrot.slane %v459, 5
        %v462 = vsel %vm246, %v457, %v461
        %v464 = vshrl.u32 %v198, 16
        %v466 = vrot.slane %v464, 4
        %v467 = vshll.u32 %v198, 16
        %v469 = vrot.slane %v467, 5
        %v470 = vor.u32 %v466, %v469
        %v471 = vrot.slane %v470, 4
        %v473 = vshll.u32 %v199, 16
        %v475 = vrot.slane %v473, 5
        %v476 = vsel %vm246, %v471, %v475
        %v477 = vshrl.u32 %v199, 16
        %v479 = vrot.slane %v477, 4
        %v480 = vor.u32 %v479, %v475
        %v481 = vrot.slane %v480, 4
        %v483 = vshll.u32 %v237, 16
        %v485 = vrot.slane %v483, 5
        %v486 = vsel %vm246, %v481, %v485
        %v488 = vshrl.u32 %v200, 16
        %v490 = vrot.slane %v488, 4
        %v491 = vshll.u32 %v200, 16
        %v493 = vrot.slane %v491, 5
        %v494 = vor.u32 %v490, %v493
        %v495 = vrot.slane %v494, 4
        %v497 = vshll.u32 %v201, 16
        %v499 = vrot.slane %v497, 5
        %v500 = vsel %vm246, %v495, %v499
        %v501 = vshrl.u32 %v201, 16
        %v503 = vrot.slane %v501, 4
        %v504 = vor.u32 %v503, %v499
        %v505 = vrot.slane %v504, 4
        %v507 = vshll.u32 %v238, 16
        %v509 = vrot.slane %v507, 5
        %v510 = vsel %vm246, %v505, %v509
        %v512 = vshrl.u32 %v202, 16
        %v514 = vrot.slane %v512, 4
        %v515 = vshll.u32 %v202, 16
        %v517 = vrot.slane %v515, 5
        %v518 = vor.u32 %v514, %v517
        %v519 = vrot.slane %v518, 4
        %v521 = vshll.u32 %v203, 16
        %v523 = vrot.slane %v521, 5
        %v524 = vsel %vm246, %v519, %v523
        %v525 = vshrl.u32 %v203, 16
        %v527 = vrot.slane %v525, 4
        %v528 = vor.u32 %v527, %v523
        %v529 = vrot.slane %v528, 4
        %v531 = vshll.u32 %v239, 16
        %v533 = vrot.slane %v531, 5
        %v534 = vsel %vm246, %v529, %v533
        %v536 = vshrl.u32 %v204, 16
        %v538 = vrot.slane %v536, 4
        %v539 = vshll.u32 %v204, 16
        %v541 = vrot.slane %v539, 5
        %v542 = vor.u32 %v538, %v541
        %v543 = vrot.slane %v542, 4
        %v545 = vshll.u32 %v205, 16
        %v547 = vrot.slane %v545, 5
        %v548 = vsel %vm246, %v543, %v547
        %v549 = vshrl.u32 %v205, 16
        %v551 = vrot.slane %v549, 4
        %v552 = vor.u32 %v551, %v547
        %v553 = vrot.slane %v552, 4
        %v555 = vshll.u32 %v240, 16
        %v557 = vrot.slane %v555, 5
        %v558 = vsel %vm246, %v553, %v557
        %v560 = vshrl.u32 %v206, 16
        %v562 = vrot.slane %v560, 4
        %v563 = vshll.u32 %v206, 16
        %v565 = vrot.slane %v563, 5
        %v566 = vor.u32 %v562, %v565
        %v567 = vrot.slane %v566, 4
        %v569 = vshll.u32 %v207, 16
        %v571 = vrot.slane %v569, 5
        %v572 = vsel %vm246, %v567, %v571
        %v573 = vshrl.u32 %v207, 16
        %v575 = vrot.slane %v573, 4
        %v576 = vor.u32 %v575, %v571
        %v577 = vrot.slane %v576, 4
        %v579 = vshll.u32 %v241, 16
        %v581 = vrot.slane %v579, 5
        %v582 = vsel %vm246, %v577, %v581
        %v584 = vshrl.u32 %v208, 16
        %v586 = vrot.slane %v584, 4
        %v587 = vshll.u32 %v208, 16
        %v589 = vrot.slane %v587, 5
        %v590 = vor.u32 %v586, %v589
        %v591 = vrot.slane %v590, 4
        %v593 = vshll.u32 %v209, 16
        %v595 = vrot.slane %v593, 5
        %v596 = vsel %vm246, %v591, %v595
        %v597 = vshrl.u32 %v209, 16
        %v599 = vrot.slane %v597, 4
        %v600 = vor.u32 %v599, %v595
        %v601 = vrot.slane %v600, 4
        %v603 = vshll.u32 %v242, 16
        %v605 = vrot.slane %v603, 5
        %v606 = vsel %vm246, %v601, %v605
        %v608 = vshrl.u32 %v210, 16
        %v610 = vrot.slane %v608, 4
        %v611 = vshll.u32 %v210, 16
        %v613 = vrot.slane %v611, 5
        %v614 = vor.u32 %v610, %v613
        %v615 = vrot.slane %v614, 4
        %v617 = vshll.u32 %v211, 16
        %v619 = vrot.slane %v617, 5
        %v620 = vsel %vm246, %v615, %v619
        %v621 = vshrl.u32 %v211, 16
        %v623 = vrot.slane %v621, 4
        %v624 = vor.u32 %v623, %v619
        %v625 = vrot.slane %v624, 4
        %v627 = vshll.u32 %v243, 16
        %v629 = vrot.slane %v627, 5
        %v630 = vsel %vm246, %v625, %v629
        %s631 = scalar_lea.vmem %s1, 64
        %v632 = vld [vmem:[%s631] sm:$0xf]
        %v633 = vld [vmem:[%s631 + $0x4] sm:$0xf]
        %v634 = vld [vmem:[%s631 + $0x8] sm:$0xf]
        %v635 = vld [vmem:[%s631 + $0xc] sm:$0xf]
        %v636 = vld [vmem:[%s631 + $0x10] sm:$0xf]
        %v637 = vld [vmem:[%s631 + $0x14] sm:$0xf]
        %v638 = vld [vmem:[%s631 + $0x18] sm:$0xf]
        %v639 = vld [vmem:[%s631 + $0x1c] sm:$0xf]
        %v640 = vld [vmem:[%s631 + $0x20] sm:$0xf]
        %v641 = vld [vmem:[%s631 + $0x24] sm:$0xf]
        %v642 = vld [vmem:[%s631 + $0x28] sm:$0xf]
        %v643 = vld [vmem:[%s631 + $0x2c] sm:$0xf]
        %v644 = vld [vmem:[%s631 + $0x30] sm:$0xf]
        %v645 = vld [vmem:[%s631 + $0x34] sm:$0xf]
        %v646 = vld [vmem:[%s631 + $0x38] sm:$0xf]
        %v647 = vld [vmem:[%s631 + $0x3c] sm:$0xf]
        %v648 = vunpack.c.l.b16 %v260
        %v649 = vunpack.c.l.b16 %v270
        %v650 = vunpack.c.l.b16 %v284
        %v651 = vunpack.c.l.b16 %v294
        %v652 = vunpack.c.l.b16 %v308
        %v653 = vunpack.c.l.b16 %v318
        %v654 = vunpack.c.l.b16 %v332
        %v655 = vunpack.c.l.b16 %v342
        %v656 = vunpack.c.l.b16 %v356
        %v657 = vunpack.c.l.b16 %v366
        %v658 = vunpack.c.l.b16 %v380
        %v659 = vunpack.c.l.b16 %v390
        %v660 = vunpack.c.l.b16 %v404
        %v661 = vunpack.c.l.b16 %v414
        %v662 = vunpack.c.l.b16 %v428
        %v663 = vunpack.c.l.b16 %v438
        %v664 = vunpack.c.l.b16 %v452
        %v665 = vunpack.c.l.b16 %v462
        %v666 = vunpack.c.l.b16 %v476
        %v667 = vunpack.c.l.b16 %v486
        %v668 = vunpack.c.l.b16 %v500
        %v669 = vunpack.c.l.b16 %v510
        %v670 = vunpack.c.l.b16 %v524
        %v671 = vunpack.c.l.b16 %v534
        %v672 = vunpack.c.l.b16 %v548
        %v673 = vunpack.c.l.b16 %v558
        %v674 = vunpack.c.l.b16 %v572
        %v675 = vunpack.c.l.b16 %v582
        %v676 = vunpack.c.l.b16 %v596
        %v677 = vunpack.c.l.b16 %v606
        %v678 = vunpack.c.l.b16 %v620
        %v679 = vunpack.c.l.b16 %v630
        %v680 = vpack.c.b16 %v649, %v648
        %v681 = vpack.c.b16 %v651, %v650
        %v682 = vpack.c.b16 %v653, %v652
        %v683 = vpack.c.b16 %v655, %v654
        %v684 = vpack.c.b16 %v657, %v656
        %v685 = vpack.c.b16 %v659, %v658
        %v686 = vpack.c.b16 %v661, %v660
        %v687 = vpack.c.b16 %v663, %v662
        %v688 = vpack.c.b16 %v665, %v664
        %v689 = vpack.c.b16 %v667, %v666
        %v690 = vpack.c.b16 %v669, %v668
        %v691 = vpack.c.b16 %v671, %v670
        %v692 = vpack.c.b16 %v673, %v672
        %v693 = vpack.c.b16 %v675, %v674
        %v694 = vpack.c.b16 %v677, %v676
        %v695 = vpack.c.b16 %v679, %v678
        %v728 = vunpack.c.l.b16 %v632
        %v729 = vunpack.c.l.b16 %v633
        %v730 = vunpack.c.l.b16 %v634
        %v731 = vunpack.c.l.b16 %v635
        %v732 = vunpack.c.l.b16 %v636
        %v733 = vunpack.c.l.b16 %v637
        %v734 = vunpack.c.l.b16 %v638
        %v735 = vunpack.c.l.b16 %v639
        %v736 = vunpack.c.l.b16 %v640
        %v737 = vunpack.c.l.b16 %v641
        %v738 = vunpack.c.l.b16 %v642
        %v739 = vunpack.c.l.b16 %v643
        %v740 = vunpack.c.l.b16 %v644
        %v741 = vunpack.c.l.b16 %v645
        %v742 = vunpack.c.l.b16 %v646
        %v743 = vunpack.c.l.b16 %v647
        %v744 = vpack.c.b16 %v729, %v728
        %v745 = vpack.c.b16 %v731, %v730
        %v746 = vpack.c.b16 %v733, %v732
        %v747 = vpack.c.b16 %v735, %v734
        %v748 = vpack.c.b16 %v737, %v736
        %v749 = vpack.c.b16 %v739, %v738
        %v750 = vpack.c.b16 %v741, %v740
        %v751 = vpack.c.b16 %v743, %v742
        %760 = vmatpush.bf16.msra.mxu0 %v751
        %761 = vmatpush.bf16.msra.mxu0 %v750
        %762 = vmatpush.bf16.msra.mxu0 %v749
        %763 = vmatpush.bf16.msra.mxu0 %v748
        %764 = vmatpush.bf16.msra.mxu0 %v747
        %765 = vmatpush.bf16.msra.mxu0 %v746
        %766 = vmatpush.bf16.msra.mxu0 %v745
        %767 = vmatpush.bf16.msra.mxu0 %v744
        %768 = vmatmul.bf16.gmra.mxu0 %v680
        %v769 = vpop.f32.mrf.mxu0
        %v770 = vadd.f32 0.0, %v769
        %v771 = vpop.f32.mrf.mxu0
        %v772 = vadd.f32 0.0, %v771
        %773 = vmatmul.bf16.gmra.mxu0 %v681
        %v774 = vpop.f32.mrf.mxu0
        %v775 = vadd.f32 0.0, %v774
        %v776 = vpop.f32.mrf.mxu0
        %v777 = vadd.f32 0.0, %v776
        %778 = vmatmul.bf16.gmra.mxu0 %v682
        %v779 = vpop.f32.mrf.mxu0
        %v780 = vadd.f32 0.0, %v779
        %v781 = vpop.f32.mrf.mxu0
        %v782 = vadd.f32 0.0, %v781
        %783 = vmatmul.bf16.gmra.mxu0 %v683
        %v784 = vpop.f32.mrf.mxu0
        %v785 = vadd.f32 0.0, %v784
        %v786 = vpop.f32.mrf.mxu0
        %v787 = vadd.f32 0.0, %v786
        %788 = vmatmul.bf16.gmra.mxu0 %v684
        %v789 = vpop.f32.mrf.mxu0
        %v790 = vadd.f32 0.0, %v789
        %v791 = vpop.f32.mrf.mxu0
        %v792 = vadd.f32 0.0, %v791
        %793 = vmatmul.bf16.gmra.mxu0 %v685
        %v794 = vpop.f32.mrf.mxu0
        %v795 = vadd.f32 0.0, %v794
        %v796 = vpop.f32.mrf.mxu0
        %v797 = vadd.f32 0.0, %v796
        %798 = vmatmul.bf16.gmra.mxu0 %v686
        %v799 = vpop.f32.mrf.mxu0
        %v800 = vadd.f32 0.0, %v799
        %v801 = vpop.f32.mrf.mxu0
        %v802 = vadd.f32 0.0, %v801
        %803 = vmatmul.bf16.gmra.mxu0 %v687
        %v804 = vpop.f32.mrf.mxu0
        %v805 = vadd.f32 0.0, %v804
        %v806 = vpop.f32.mrf.mxu0
        %v807 = vadd.f32 0.0, %v806
        %808 = vmatmul.bf16.gmra.mxu0 %v688
        %v809 = vpop.f32.mrf.mxu0
        %v810 = vadd.f32 0.0, %v809
        %v811 = vpop.f32.mrf.mxu0
        %v812 = vadd.f32 0.0, %v811
        %813 = vmatmul.bf16.gmra.mxu0 %v689
        %v814 = vpop.f32.mrf.mxu0
        %v815 = vadd.f32 0.0, %v814
        %v816 = vpop.f32.mrf.mxu0
        %v817 = vadd.f32 0.0, %v816
        %818 = vmatmul.bf16.gmra.mxu0 %v690
        %v819 = vpop.f32.mrf.mxu0
        %v820 = vadd.f32 0.0, %v819
        %v821 = vpop.f32.mrf.mxu0
        %v822 = vadd.f32 0.0, %v821
        %823 = vmatmul.bf16.gmra.mxu0 %v691
        %v824 = vpop.f32.mrf.mxu0
        %v825 = vadd.f32 0.0, %v824
        %v826 = vpop.f32.mrf.mxu0
        %v827 = vadd.f32 0.0, %v826
        %828 = vmatmul.bf16.gmra.mxu0 %v692
        %v829 = vpop.f32.mrf.mxu0
        %v830 = vadd.f32 0.0, %v829
        %v831 = vpop.f32.mrf.mxu0
        %v832 = vadd.f32 0.0, %v831
        %833 = vmatmul.bf16.gmra.mxu0 %v693
        %v834 = vpop.f32.mrf.mxu0
        %v835 = vadd.f32 0.0, %v834
        %v836 = vpop.f32.mrf.mxu0
        %v837 = vadd.f32 0.0, %v836
        %838 = vmatmul.bf16.gmra.mxu0 %v694
        %v839 = vpop.f32.mrf.mxu0
        %v840 = vadd.f32 0.0, %v839
        %v841 = vpop.f32.mrf.mxu0
        %v842 = vadd.f32 0.0, %v841
        %843 = vmatmul.bf16.gmra.mxu0 %v695
        %v844 = vpop.f32.mrf.mxu0
        %v845 = vadd.f32 0.0, %v844
        %v846 = vpop.f32.mrf.mxu0
        %v847 = vadd.f32 0.0, %v846
        %848 = vdwg.mxu0
        %v881 = vunpack.c.l.b16 %v180
        %v882 = vunpack.c.l.b16 %v181
        %v883 = vunpack.c.l.b16 %v182
        %v884 = vunpack.c.l.b16 %v183
        %v885 = vunpack.c.l.b16 %v184
        %v886 = vunpack.c.l.b16 %v185
        %v887 = vunpack.c.l.b16 %v186
        %v888 = vunpack.c.l.b16 %v187
        %v889 = vunpack.c.l.b16 %v188
        %v890 = vunpack.c.l.b16 %v189
        %v891 = vunpack.c.l.b16 %v190
        %v892 = vunpack.c.l.b16 %v191
        %v893 = vunpack.c.l.b16 %v192
        %v894 = vunpack.c.l.b16 %v193
        %v895 = vunpack.c.l.b16 %v194
        %v896 = vunpack.c.l.b16 %v195
        %v897 = vunpack.c.l.b16 %v196
        %v898 = vunpack.c.l.b16 %v197
        %v899 = vunpack.c.l.b16 %v198
        %v900 = vunpack.c.l.b16 %v199
        %v901 = vunpack.c.l.b16 %v200
        %v902 = vunpack.c.l.b16 %v201
        %v903 = vunpack.c.l.b16 %v202
        %v904 = vunpack.c.l.b16 %v203
        %v905 = vunpack.c.l.b16 %v204
        %v906 = vunpack.c.l.b16 %v205
        %v907 = vunpack.c.l.b16 %v206
        %v908 = vunpack.c.l.b16 %v207
        %v909 = vunpack.c.l.b16 %v208
        %v910 = vunpack.c.l.b16 %v209
        %v911 = vunpack.c.l.b16 %v210
        %v912 = vunpack.c.l.b16 %v211
        %v913 = vpack.c.b16 %v882, %v881
        %v914 = vpack.c.b16 %v884, %v883
        %v915 = vpack.c.b16 %v886, %v885
        %v916 = vpack.c.b16 %v888, %v887
        %v917 = vpack.c.b16 %v890, %v889
        %v918 = vpack.c.b16 %v892, %v891
        %v919 = vpack.c.b16 %v894, %v893
        %v920 = vpack.c.b16 %v896, %v895
        %v921 = vpack.c.b16 %v898, %v897
        %v922 = vpack.c.b16 %v900, %v899
        %v923 = vpack.c.b16 %v902, %v901
        %v924 = vpack.c.b16 %v904, %v903
        %v925 = vpack.c.b16 %v906, %v905
        %v926 = vpack.c.b16 %v908, %v907
        %v927 = vpack.c.b16 %v910, %v909
        %v928 = vpack.c.b16 %v912, %v911
        %v961 = vunpack.c.l.b16 %v212
        %v962 = vunpack.c.l.b16 %v213
        %v963 = vunpack.c.l.b16 %v214
        %v964 = vunpack.c.l.b16 %v215
        %v965 = vunpack.c.l.b16 %v216
        %v966 = vunpack.c.l.b16 %v217
        %v967 = vunpack.c.l.b16 %v218
        %v968 = vunpack.c.l.b16 %v219
        %v969 = vunpack.c.l.b16 %v220
        %v970 = vunpack.c.l.b16 %v221
        %v971 = vunpack.c.l.b16 %v222
        %v972 = vunpack.c.l.b16 %v223
        %v973 = vunpack.c.l.b16 %v224
        %v974 = vunpack.c.l.b16 %v225
        %v975 = vunpack.c.l.b16 %v226
        %v976 = vunpack.c.l.b16 %v227
        %v977 = vpack.c.b16 %v962, %v961
        %v978 = vpack.c.b16 %v964, %v963
        %v979 = vpack.c.b16 %v966, %v965
        %v980 = vpack.c.b16 %v968, %v967
        %v981 = vpack.c.b16 %v970, %v969
        %v982 = vpack.c.b16 %v972, %v971
        %v983 = vpack.c.b16 %v974, %v973
        %v984 = vpack.c.b16 %v976, %v975
        %993 = vmatpush.bf16.msra.mxu0 %v984
        %994 = vmatpush.bf16.msra.mxu0 %v983
        %995 = vmatpush.bf16.msra.mxu0 %v982
        %996 = vmatpush.bf16.msra.mxu0 %v981
        %997 = vmatpush.bf16.msra.mxu0 %v980
        %998 = vmatpush.bf16.msra.mxu0 %v979
        %999 = vmatpush.bf16.msra.mxu0 %v978
        %1000 = vmatpush.bf16.msra.mxu0 %v977
        %1001 = vmatmul.bf16.gmra.mxu0 %v913
        %v1002 = vpop.f32.mrf.mxu0
        %v1003 = vadd.f32 %v770, %v1002
        %v1004 = vpop.f32.mrf.mxu0
        %v1005 = vadd.f32 %v772, %v1004
        %1006 = vmatmul.bf16.gmra.mxu0 %v914
        %v1007 = vpop.f32.mrf.mxu0
        %v1008 = vadd.f32 %v775, %v1007
        %v1009 = vpop.f32.mrf.mxu0
        %v1010 = vadd.f32 %v777, %v1009
        %1011 = vmatmul.bf16.gmra.mxu0 %v915
        %v1012 = vpop.f32.mrf.mxu0
        %v1013 = vadd.f32 %v780, %v1012
        %v1014 = vpop.f32.mrf.mxu0
        %v1015 = vadd.f32 %v782, %v1014
        %1016 = vmatmul.bf16.gmra.mxu0 %v916
        %v1017 = vpop.f32.mrf.mxu0
        %v1018 = vadd.f32 %v785, %v1017
        %v1019 = vpop.f32.mrf.mxu0
        %v1020 = vadd.f32 %v787, %v1019
        %1021 = vmatmul.bf16.gmra.mxu0 %v917
        %v1022 = vpop.f32.mrf.mxu0
        %v1023 = vadd.f32 %v790, %v1022
        %v1024 = vpop.f32.mrf.mxu0
        %v1025 = vadd.f32 %v792, %v1024
        %1026 = vmatmul.bf16.gmra.mxu0 %v918
        %v1027 = vpop.f32.mrf.mxu0
        %v1028 = vadd.f32 %v795, %v1027
        %v1029 = vpop.f32.mrf.mxu0
        %v1030 = vadd.f32 %v797, %v1029
        %1031 = vmatmul.bf16.gmra.mxu0 %v919
        %v1032 = vpop.f32.mrf.mxu0
        %v1033 = vadd.f32 %v800, %v1032
        %v1034 = vpop.f32.mrf.mxu0
        %v1035 = vadd.f32 %v802, %v1034
        %1036 = vmatmul.bf16.gmra.mxu0 %v920
        %v1037 = vpop.f32.mrf.mxu0
        %v1038 = vadd.f32 %v805, %v1037
        %v1039 = vpop.f32.mrf.mxu0
        %v1040 = vadd.f32 %v807, %v1039
        %1041 = vmatmul.bf16.gmra.mxu0 %v921
        %v1042 = vpop.f32.mrf.mxu0
        %v1043 = vadd.f32 %v810, %v1042
        %v1044 = vpop.f32.mrf.mxu0
        %v1045 = vadd.f32 %v812, %v1044
        %1046 = vmatmul.bf16.gmra.mxu0 %v922
        %v1047 = vpop.f32.mrf.mxu0
        %v1048 = vadd.f32 %v815, %v1047
        %v1049 = vpop.f32.mrf.mxu0
        %v1050 = vadd.f32 %v817, %v1049
        %1051 = vmatmul.bf16.gmra.mxu0 %v923
        %v1052 = vpop.f32.mrf.mxu0
        %v1053 = vadd.f32 %v820, %v1052
        %v1054 = vpop.f32.mrf.mxu0
        %v1055 = vadd.f32 %v822, %v1054
        %1056 = vmatmul.bf16.gmra.mxu0 %v924
        %v1057 = vpop.f32.mrf.mxu0
        %v1058 = vadd.f32 %v825, %v1057
        %v1059 = vpop.f32.mrf.mxu0
        %v1060 = vadd.f32 %v827, %v1059
        %1061 = vmatmul.bf16.gmra.mxu0 %v925
        %v1062 = vpop.f32.mrf.mxu0
        %v1063 = vadd.f32 %v830, %v1062
        %v1064 = vpop.f32.mrf.mxu0
        %v1065 = vadd.f32 %v832, %v1064
        %1066 = vmatmul.bf16.gmra.mxu0 %v926
        %v1067 = vpop.f32.mrf.mxu0
        %v1068 = vadd.f32 %v835, %v1067
        %v1069 = vpop.f32.mrf.mxu0
        %v1070 = vadd.f32 %v837, %v1069
        %1071 = vmatmul.bf16.gmra.mxu0 %v927
        %v1072 = vpop.f32.mrf.mxu0
        %v1073 = vadd.f32 %v840, %v1072
        %v1074 = vpop.f32.mrf.mxu0
        %v1075 = vadd.f32 %v842, %v1074
        %1076 = vmatmul.bf16.gmra.mxu0 %v928
        %v1077 = vpop.f32.mrf.mxu0
        %v1078 = vadd.f32 %v845, %v1077
        %v1079 = vpop.f32.mrf.mxu0
        %v1080 = vadd.f32 %v847, %v1079
        %1081 = vdwg.mxu0
        %v1082 = vld [vmem:[%s179] sm:$0xe]
        %v1083 = vld [vmem:[%s179 + $0xc] sm:$0xe]
        %v1084 = vld [vmem:[%s179 + $0x18] sm:$0xe]
        %v1085 = vld [vmem:[%s179 + $0x24] sm:$0xe]
        %v1086 = vld [vmem:[%s179 + $0x30] sm:$0xe]
        %v1087 = vld [vmem:[%s179 + $0x3c] sm:$0xe]
        %v1088 = vld [vmem:[%s179 + $0x48] sm:$0xe]
        %v1089 = vld [vmem:[%s179 + $0x54] sm:$0xe]
        %v1090 = vld [vmem:[%s179 + $0x60] sm:$0xe]
        %v1091 = vld [vmem:[%s179 + $0x6c] sm:$0xe]
        %v1092 = vld [vmem:[%s179 + $0x78] sm:$0xe]
        %v1093 = vld [vmem:[%s179 + $0x84] sm:$0xe]
        %v1094 = vld [vmem:[%s179 + $0x90] sm:$0xe]
        %v1095 = vld [vmem:[%s179 + $0x9c] sm:$0xe]
        %v1096 = vld [vmem:[%s179 + $0xa8] sm:$0xe]
        %v1097 = vld [vmem:[%s179 + $0xb4] sm:$0xe]
        %vm1130 = vcmask 1042432
        %vm1131 = vcmask 1046532
        %vm1132 = vmor %vm1130, %vm1131
        %v1133 = vrot.slane %v1082, 5
        %v1134 = vrot.slane %v1133, 4
        %v1135 = vrot.slane %v181, 5
        %v1136 = vsel %vm1132, %v1134, %v1135
        %v1137 = vrot.slane %v1135, 4
        %v1138 = vrot.slane %v228, 5
        %v1139 = vsel %vm1132, %v1137, %v1138
        %v1140 = vrot.slane %v1083, 5
        %v1141 = vrot.slane %v1140, 4
        %v1142 = vrot.slane %v183, 5
        %v1143 = vsel %vm1132, %v1141, %v1142
        %v1144 = vrot.slane %v1142, 4
        %v1145 = vrot.slane %v229, 5
        %v1146 = vsel %vm1132, %v1144, %v1145
        %v1147 = vrot.slane %v1084, 5
        %v1148 = vrot.slane %v1147, 4
        %v1149 = vrot.slane %v185, 5
        %v1150 = vsel %vm1132, %v1148, %v1149
        %v1151 = vrot.slane %v1149, 4
        %v1152 = vrot.slane %v230, 5
        %v1153 = vsel %vm1132, %v1151, %v1152
        %v1154 = vrot.slane %v1085, 5
        %v1155 = vrot.slane %v1154, 4
        %v1156 = vrot.slane %v187, 5
        %v1157 = vsel %vm1132, %v1155, %v1156
        %v1158 = vrot.slane %v1156, 4
        %v1159 = vrot.slane %v231, 5
        %v1160 = vsel %vm1132, %v1158, %v1159
        %v1161 = vrot.slane %v1086, 5
        %v1162 = vrot.slane %v1161, 4
        %v1163 = vrot.slane %v189, 5
        %v1164 = vsel %vm1132, %v1162, %v1163
        %v1165 = vrot.slane %v1163, 4
        %v1166 = vrot.slane %v232, 5
        %v1167 = vsel %vm1132, %v1165, %v1166
        %v1168 = vrot.slane %v1087, 5
        %v1169 = vrot.slane %v1168, 4
        %v1170 = vrot.slane %v191, 5
        %v1171 = vsel %vm1132, %v1169, %v1170
        %v1172 = vrot.slane %v1170, 4
        %v1173 = vrot.slane %v233, 5
        %v1174 = vsel %vm1132, %v1172, %v1173
        %v1175 = vrot.slane %v1088, 5
        %v1176 = vrot.slane %v1175, 4
        %v1177 = vrot.slane %v193, 5
        %v1178 = vsel %vm1132, %v1176, %v1177
        %v1179 = vrot.slane %v1177, 4
        %v1180 = vrot.slane %v234, 5
        %v1181 = vsel %vm1132, %v1179, %v1180
        %v1182 = vrot.slane %v1089, 5
        %v1183 = vrot.slane %v1182, 4
        %v1184 = vrot.slane %v195, 5
        %v1185 = vsel %vm1132, %v1183, %v1184
        %v1186 = vrot.slane %v1184, 4
        %v1187 = vrot.slane %v235, 5
        %v1188 = vsel %vm1132, %v1186, %v1187
        %v1189 = vrot.slane %v1090, 5
        %v1190 = vrot.slane %v1189, 4
        %v1191 = vrot.slane %v197, 5
        %v1192 = vsel %vm1132, %v1190, %v1191
        %v1193 = vrot.slane %v1191, 4
        %v1194 = vrot.slane %v236, 5
        %v1195 = vsel %vm1132, %v1193, %v1194
        %v1196 = vrot.slane %v1091, 5
        %v1197 = vrot.slane %v1196, 4
        %v1198 = vrot.slane %v199, 5
        %v1199 = vsel %vm1132, %v1197, %v1198
        %v1200 = vrot.slane %v1198, 4
        %v1201 = vrot.slane %v237, 5
        %v1202 = vsel %vm1132, %v1200, %v1201
        %v1203 = vrot.slane %v1092, 5
        %v1204 = vrot.slane %v1203, 4
        %v1205 = vrot.slane %v201, 5
        %v1206 = vsel %vm1132, %v1204, %v1205
        %v1207 = vrot.slane %v1205, 4
        %v1208 = vrot.slane %v238, 5
        %v1209 = vsel %vm1132, %v1207, %v1208
        %v1210 = vrot.slane %v1093, 5
        %v1211 = vrot.slane %v1210, 4
        %v1212 = vrot.slane %v203, 5
        %v1213 = vsel %vm1132, %v1211, %v1212
        %v1214 = vrot.slane %v1212, 4
        %v1215 = vrot.slane %v239, 5
        %v1216 = vsel %vm1132, %v1214, %v1215
        %v1217 = vrot.slane %v1094, 5
        %v1218 = vrot.slane %v1217, 4
        %v1219 = vrot.slane %v205, 5
        %v1220 = vsel %vm1132, %v1218, %v1219
        %v1221 = vrot.slane %v1219, 4
        %v1222 = vrot.slane %v240, 5
        %v1223 = vsel %vm1132, %v1221, %v1222
        %v1224 = vrot.slane %v1095, 5
        %v1225 = vrot.slane %v1224, 4
        %v1226 = vrot.slane %v207, 5
        %v1227 = vsel %vm1132, %v1225, %v1226
        %v1228 = vrot.slane %v1226, 4
        %v1229 = vrot.slane %v241, 5
        %v1230 = vsel %vm1132, %v1228, %v1229
        %v1231 = vrot.slane %v1096, 5
        %v1232 = vrot.slane %v1231, 4
        %v1233 = vrot.slane %v209, 5
        %v1234 = vsel %vm1132, %v1232, %v1233
        %v1235 = vrot.slane %v1233, 4
        %v1236 = vrot.slane %v242, 5
        %v1237 = vsel %vm1132, %v1235, %v1236
        %v1238 = vrot.slane %v1097, 5
        %v1239 = vrot.slane %v1238, 4
        %v1240 = vrot.slane %v211, 5
        %v1241 = vsel %vm1132, %v1239, %v1240
        %v1242 = vrot.slane %v1240, 4
        %v1243 = vrot.slane %v243, 5
        %v1244 = vsel %vm1132, %v1242, %v1243
        %s1245 = scalar_lea.vmem %s1, 128
        %v1246 = vld [vmem:[%s1245] sm:$0xf]
        %v1247 = vld [vmem:[%s1245 + $0x4] sm:$0xf]
        %v1248 = vld [vmem:[%s1245 + $0x8] sm:$0xf]
        %v1249 = vld [vmem:[%s1245 + $0xc] sm:$0xf]
        %v1250 = vld [vmem:[%s1245 + $0x10] sm:$0xf]
        %v1251 = vld [vmem:[%s1245 + $0x14] sm:$0xf]
        %v1252 = vld [vmem:[%s1245 + $0x18] sm:$0xf]
        %v1253 = vld [vmem:[%s1245 + $0x1c] sm:$0xf]
        %v1254 = vld [vmem:[%s1245 + $0x20] sm:$0xf]
        %v1255 = vld [vmem:[%s1245 + $0x24] sm:$0xf]
        %v1256 = vld [vmem:[%s1245 + $0x28] sm:$0xf]
        %v1257 = vld [vmem:[%s1245 + $0x2c] sm:$0xf]
        %v1258 = vld [vmem:[%s1245 + $0x30] sm:$0xf]
        %v1259 = vld [vmem:[%s1245 + $0x34] sm:$0xf]
        %v1260 = vld [vmem:[%s1245 + $0x38] sm:$0xf]
        %v1261 = vld [vmem:[%s1245 + $0x3c] sm:$0xf]
        %v1262 = vunpack.c.l.b16 %v1136
        %v1263 = vunpack.c.l.b16 %v1139
        %v1264 = vunpack.c.l.b16 %v1143
        %v1265 = vunpack.c.l.b16 %v1146
        %v1266 = vunpack.c.l.b16 %v1150
        %v1267 = vunpack.c.l.b16 %v1153
        %v1268 = vunpack.c.l.b16 %v1157
        %v1269 = vunpack.c.l.b16 %v1160
        %v1270 = vunpack.c.l.b16 %v1164
        %v1271 = vunpack.c.l.b16 %v1167
        %v1272 = vunpack.c.l.b16 %v1171
        %v1273 = vunpack.c.l.b16 %v1174
        %v1274 = vunpack.c.l.b16 %v1178
        %v1275 = vunpack.c.l.b16 %v1181
        %v1276 = vunpack.c.l.b16 %v1185
        %v1277 = vunpack.c.l.b16 %v1188
        %v1278 = vunpack.c.l.b16 %v1192
        %v1279 = vunpack.c.l.b16 %v1195
        %v1280 = vunpack.c.l.b16 %v1199
        %v1281 = vunpack.c.l.b16 %v1202
        %v1282 = vunpack.c.l.b16 %v1206
        %v1283 = vunpack.c.l.b16 %v1209
        %v1284 = vunpack.c.l.b16 %v1213
        %v1285 = vunpack.c.l.b16 %v1216
        %v1286 = vunpack.c.l.b16 %v1220
        %v1287 = vunpack.c.l.b16 %v1223
        %v1288 = vunpack.c.l.b16 %v1227
        %v1289 = vunpack.c.l.b16 %v1230
        %v1290 = vunpack.c.l.b16 %v1234
        %v1291 = vunpack.c.l.b16 %v1237
        %v1292 = vunpack.c.l.b16 %v1241
        %v1293 = vunpack.c.l.b16 %v1244
        %v1294 = vpack.c.b16 %v1263, %v1262
        %v1295 = vpack.c.b16 %v1265, %v1264
        %v1296 = vpack.c.b16 %v1267, %v1266
        %v1297 = vpack.c.b16 %v1269, %v1268
        %v1298 = vpack.c.b16 %v1271, %v1270
        %v1299 = vpack.c.b16 %v1273, %v1272
        %v1300 = vpack.c.b16 %v1275, %v1274
        %v1301 = vpack.c.b16 %v1277, %v1276
        %v1302 = vpack.c.b16 %v1279, %v1278
        %v1303 = vpack.c.b16 %v1281, %v1280
        %v1304 = vpack.c.b16 %v1283, %v1282
        %v1305 = vpack.c.b16 %v1285, %v1284
        %v1306 = vpack.c.b16 %v1287, %v1286
        %v1307 = vpack.c.b16 %v1289, %v1288
        %v1308 = vpack.c.b16 %v1291, %v1290
        %v1309 = vpack.c.b16 %v1293, %v1292
        %v1342 = vunpack.c.l.b16 %v1246
        %v1343 = vunpack.c.l.b16 %v1247
        %v1344 = vunpack.c.l.b16 %v1248
        %v1345 = vunpack.c.l.b16 %v1249
        %v1346 = vunpack.c.l.b16 %v1250
        %v1347 = vunpack.c.l.b16 %v1251
        %v1348 = vunpack.c.l.b16 %v1252
        %v1349 = vunpack.c.l.b16 %v1253
        %v1350 = vunpack.c.l.b16 %v1254
        %v1351 = vunpack.c.l.b16 %v1255
        %v1352 = vunpack.c.l.b16 %v1256
        %v1353 = vunpack.c.l.b16 %v1257
        %v1354 = vunpack.c.l.b16 %v1258
        %v1355 = vunpack.c.l.b16 %v1259
        %v1356 = vunpack.c.l.b16 %v1260
        %v1357 = vunpack.c.l.b16 %v1261
        %v1358 = vpack.c.b16 %v1343, %v1342
        %v1359 = vpack.c.b16 %v1345, %v1344
        %v1360 = vpack.c.b16 %v1347, %v1346
        %v1361 = vpack.c.b16 %v1349, %v1348
        %v1362 = vpack.c.b16 %v1351, %v1350
        %v1363 = vpack.c.b16 %v1353, %v1352
        %v1364 = vpack.c.b16 %v1355, %v1354
        %v1365 = vpack.c.b16 %v1357, %v1356
        %1374 = vmatpush.bf16.msra.mxu0 %v1365
        %1375 = vmatpush.bf16.msra.mxu0 %v1364
        %1376 = vmatpush.bf16.msra.mxu0 %v1363
        %1377 = vmatpush.bf16.msra.mxu0 %v1362
        %1378 = vmatpush.bf16.msra.mxu0 %v1361
        %1379 = vmatpush.bf16.msra.mxu0 %v1360
        %1380 = vmatpush.bf16.msra.mxu0 %v1359
        %1381 = vmatpush.bf16.msra.mxu0 %v1358
        %1382 = vmatmul.bf16.gmra.mxu0 %v1294
        %v1383 = vpop.f32.mrf.mxu0
        %v1384 = vadd.f32 0.0, %v1383
        %v1385 = vpop.f32.mrf.mxu0
        %v1386 = vadd.f32 0.0, %v1385
        %1387 = vmatmul.bf16.gmra.mxu0 %v1295
        %v1388 = vpop.f32.mrf.mxu0
        %v1389 = vadd.f32 0.0, %v1388
        %v1390 = vpop.f32.mrf.mxu0
        %v1391 = vadd.f32 0.0, %v1390
        %1392 = vmatmul.bf16.gmra.mxu0 %v1296
        %v1393 = vpop.f32.mrf.mxu0
        %v1394 = vadd.f32 0.0, %v1393
        %v1395 = vpop.f32.mrf.mxu0
        %v1396 = vadd.f32 0.0, %v1395
        %1397 = vmatmul.bf16.gmra.mxu0 %v1297
        %v1398 = vpop.f32.mrf.mxu0
        %v1399 = vadd.f32 0.0, %v1398
        %v1400 = vpop.f32.mrf.mxu0
        %v1401 = vadd.f32 0.0, %v1400
        %1402 = vmatmul.bf16.gmra.mxu0 %v1298
        %v1403 = vpop.f32.mrf.mxu0
        %v1404 = vadd.f32 0.0, %v1403
        %v1405 = vpop.f32.mrf.mxu0
        %v1406 = vadd.f32 0.0, %v1405
        %1407 = vmatmul.bf16.gmra.mxu0 %v1299
        %v1408 = vpop.f32.mrf.mxu0
        %v1409 = vadd.f32 0.0, %v1408
        %v1410 = vpop.f32.mrf.mxu0
        %v1411 = vadd.f32 0.0, %v1410
        %1412 = vmatmul.bf16.gmra.mxu0 %v1300
        %v1413 = vpop.f32.mrf.mxu0
        %v1414 = vadd.f32 0.0, %v1413
        %v1415 = vpop.f32.mrf.mxu0
        %v1416 = vadd.f32 0.0, %v1415
        %1417 = vmatmul.bf16.gmra.mxu0 %v1301
        %v1418 = vpop.f32.mrf.mxu0
        %v1419 = vadd.f32 0.0, %v1418
        %v1420 = vpop.f32.mrf.mxu0
        %v1421 = vadd.f32 0.0, %v1420
        %1422 = vmatmul.bf16.gmra.mxu0 %v1302
        %v1423 = vpop.f32.mrf.mxu0
        %v1424 = vadd.f32 0.0, %v1423
        %v1425 = vpop.f32.mrf.mxu0
        %v1426 = vadd.f32 0.0, %v1425
        %1427 = vmatmul.bf16.gmra.mxu0 %v1303
        %v1428 = vpop.f32.mrf.mxu0
        %v1429 = vadd.f32 0.0, %v1428
        %v1430 = vpop.f32.mrf.mxu0
        %v1431 = vadd.f32 0.0, %v1430
        %1432 = vmatmul.bf16.gmra.mxu0 %v1304
        %v1433 = vpop.f32.mrf.mxu0
        %v1434 = vadd.f32 0.0, %v1433
        %v1435 = vpop.f32.mrf.mxu0
        %v1436 = vadd.f32 0.0, %v1435
        %1437 = vmatmul.bf16.gmra.mxu0 %v1305
        %v1438 = vpop.f32.mrf.mxu0
        %v1439 = vadd.f32 0.0, %v1438
        %v1440 = vpop.f32.mrf.mxu0
        %v1441 = vadd.f32 0.0, %v1440
        %1442 = vmatmul.bf16.gmra.mxu0 %v1306
        %v1443 = vpop.f32.mrf.mxu0
        %v1444 = vadd.f32 0.0, %v1443
        %v1445 = vpop.f32.mrf.mxu0
        %v1446 = vadd.f32 0.0, %v1445
        %1447 = vmatmul.bf16.gmra.mxu0 %v1307
        %v1448 = vpop.f32.mrf.mxu0
        %v1449 = vadd.f32 0.0, %v1448
        %v1450 = vpop.f32.mrf.mxu0
        %v1451 = vadd.f32 0.0, %v1450
        %1452 = vmatmul.bf16.gmra.mxu0 %v1308
        %v1453 = vpop.f32.mrf.mxu0
        %v1454 = vadd.f32 0.0, %v1453
        %v1455 = vpop.f32.mrf.mxu0
        %v1456 = vadd.f32 0.0, %v1455
        %1457 = vmatmul.bf16.gmra.mxu0 %v1309
        %v1458 = vpop.f32.mrf.mxu0
        %v1459 = vadd.f32 0.0, %v1458
        %v1460 = vpop.f32.mrf.mxu0
        %v1461 = vadd.f32 0.0, %v1460
        %1462 = vdwg.mxu0
        %v1463 = vadd.f32 %v1003, %v1384
        %v1464 = vadd.f32 %v1005, %v1386
        %v1465 = vadd.f32 %v1008, %v1389
        %v1466 = vadd.f32 %v1010, %v1391
        %v1467 = vadd.f32 %v1013, %v1394
        %v1468 = vadd.f32 %v1015, %v1396
        %v1469 = vadd.f32 %v1018, %v1399
        %v1470 = vadd.f32 %v1020, %v1401
        %v1471 = vadd.f32 %v1023, %v1404
        %v1472 = vadd.f32 %v1025, %v1406
        %v1473 = vadd.f32 %v1028, %v1409
        %v1474 = vadd.f32 %v1030, %v1411
        %v1475 = vadd.f32 %v1033, %v1414
        %v1476 = vadd.f32 %v1035, %v1416
        %v1477 = vadd.f32 %v1038, %v1419
        %v1478 = vadd.f32 %v1040, %v1421
        %v1479 = vadd.f32 %v1043, %v1424
        %v1480 = vadd.f32 %v1045, %v1426
        %v1481 = vadd.f32 %v1048, %v1429
        %v1482 = vadd.f32 %v1050, %v1431
        %v1483 = vadd.f32 %v1053, %v1434
        %v1484 = vadd.f32 %v1055, %v1436
        %v1485 = vadd.f32 %v1058, %v1439
        %v1486 = vadd.f32 %v1060, %v1441
        %v1487 = vadd.f32 %v1063, %v1444
        %v1488 = vadd.f32 %v1065, %v1446
        %v1489 = vadd.f32 %v1068, %v1449
        %v1490 = vadd.f32 %v1070, %v1451
        %v1491 = vadd.f32 %v1073, %v1454
        %v1492 = vadd.f32 %v1075, %v1456
        %v1493 = vadd.f32 %v1078, %v1459
        %v1494 = vadd.f32 %v1080, %v1461
        %s1495 = scalar_lea.vmem %s179, 12
        %v1496 = vld [vmem:[%s1495] sm:$0xf]
        %v1497 = vld [vmem:[%s1495 + $0x4] sm:$0xf]
        %v1498 = vld [vmem:[%s1495 + $0xc] sm:$0xf]
        %v1499 = vld [vmem:[%s1495 + $0x10] sm:$0xf]
        %v1500 = vld [vmem:[%s1495 + $0x18] sm:$0xf]
        %v1501 = vld [vmem:[%s1495 + $0x1c] sm:$0xf]
        %v1502 = vld [vmem:[%s1495 + $0x24] sm:$0xf]
        %v1503 = vld [vmem:[%s1495 + $0x28] sm:$0xf]
        %v1504 = vld [vmem:[%s1495 + $0x30] sm:$0xf]
        %v1505 = vld [vmem:[%s1495 + $0x34] sm:$0xf]
        %v1506 = vld [vmem:[%s1495 + $0x3c] sm:$0xf]
        %v1507 = vld [vmem:[%s1495 + $0x40] sm:$0xf]
        %v1508 = vld [vmem:[%s1495 + $0x48] sm:$0xf]
        %v1509 = vld [vmem:[%s1495 + $0x4c] sm:$0xf]
        %v1510 = vld [vmem:[%s1495 + $0x54] sm:$0xf]
        %v1511 = vld [vmem:[%s1495 + $0x58] sm:$0xf]
        %v1512 = vld [vmem:[%s1495 + $0x60] sm:$0xf]
        %v1513 = vld [vmem:[%s1495 + $0x64] sm:$0xf]
        %v1514 = vld [vmem:[%s1495 + $0x6c] sm:$0xf]
        %v1515 = vld [vmem:[%s1495 + $0x70] sm:$0xf]
        %v1516 = vld [vmem:[%s1495 + $0x78] sm:$0xf]
        %v1517 = vld [vmem:[%s1495 + $0x7c] sm:$0xf]
        %v1518 = vld [vmem:[%s1495 + $0x84] sm:$0xf]
        %v1519 = vld [vmem:[%s1495 + $0x88] sm:$0xf]
        %v1520 = vld [vmem:[%s1495 + $0x90] sm:$0xf]
        %v1521 = vld [vmem:[%s1495 + $0x94] sm:$0xf]
        %v1522 = vld [vmem:[%s1495 + $0x9c] sm:$0xf]
        %v1523 = vld [vmem:[%s1495 + $0xa0] sm:$0xf]
        %v1524 = vld [vmem:[%s1495 + $0xa8] sm:$0xf]
        %v1525 = vld [vmem:[%s1495 + $0xac] sm:$0xf]
        %v1526 = vld [vmem:[%s1495 + $0xb4] sm:$0xf]
        %v1527 = vld [vmem:[%s1495 + $0xb8] sm:$0xf]
        %s1528 = scalar_lea.vmem %s1, 192
        %v1529 = vld [vmem:[%s1528] sm:$0xf]
        %v1530 = vld [vmem:[%s1528 + $0x4] sm:$0xf]
        %v1531 = vld [vmem:[%s1528 + $0x8] sm:$0xf]
        %v1532 = vld [vmem:[%s1528 + $0xc] sm:$0xf]
        %v1533 = vld [vmem:[%s1528 + $0x10] sm:$0xf]
        %v1534 = vld [vmem:[%s1528 + $0x14] sm:$0xf]
        %v1535 = vld [vmem:[%s1528 + $0x18] sm:$0xf]
        %v1536 = vld [vmem:[%s1528 + $0x1c] sm:$0xf]
        %v1537 = vld [vmem:[%s1528 + $0x20] sm:$0xf]
        %v1538 = vld [vmem:[%s1528 + $0x24] sm:$0xf]
        %v1539 = vld [vmem:[%s1528 + $0x28] sm:$0xf]
        %v1540 = vld [vmem:[%s1528 + $0x2c] sm:$0xf]
        %v1541 = vld [vmem:[%s1528 + $0x30] sm:$0xf]
        %v1542 = vld [vmem:[%s1528 + $0x34] sm:$0xf]
        %v1543 = vld [vmem:[%s1528 + $0x38] sm:$0xf]
        %v1544 = vld [vmem:[%s1528 + $0x3c] sm:$0xf]
        %v1577 = vunpack.c.l.b16 %v1496
        %v1578 = vunpack.c.l.b16 %v1497
        %v1579 = vunpack.c.l.b16 %v1498
        %v1580 = vunpack.c.l.b16 %v1499
        %v1581 = vunpack.c.l.b16 %v1500
        %v1582 = vunpack.c.l.b16 %v1501
        %v1583 = vunpack.c.l.b16 %v1502
        %v1584 = vunpack.c.l.b16 %v1503
        %v1585 = vunpack.c.l.b16 %v1504
        %v1586 = vunpack.c.l.b16 %v1505
        %v1587 = vunpack.c.l.b16 %v1506
        %v1588 = vunpack.c.l.b16 %v1507
        %v1589 = vunpack.c.l.b16 %v1508
        %v1590 = vunpack.c.l.b16 %v1509
        %v1591 = vunpack.c.l.b16 %v1510
        %v1592 = vunpack.c.l.b16 %v1511
        %v1593 = vunpack.c.l.b16 %v1512
        %v1594 = vunpack.c.l.b16 %v1513
        %v1595 = vunpack.c.l.b16 %v1514
        %v1596 = vunpack.c.l.b16 %v1515
        %v1597 = vunpack.c.l.b16 %v1516
        %v1598 = vunpack.c.l.b16 %v1517
        %v1599 = vunpack.c.l.b16 %v1518
        %v1600 = vunpack.c.l.b16 %v1519
        %v1601 = vunpack.c.l.b16 %v1520
        %v1602 = vunpack.c.l.b16 %v1521
        %v1603 = vunpack.c.l.b16 %v1522
        %v1604 = vunpack.c.l.b16 %v1523
        %v1605 = vunpack.c.l.b16 %v1524
        %v1606 = vunpack.c.l.b16 %v1525
        %v1607 = vunpack.c.l.b16 %v1526
        %v1608 = vunpack.c.l.b16 %v1527
        %v1609 = vpack.c.b16 %v1578, %v1577
        %v1610 = vpack.c.b16 %v1580, %v1579
        %v1611 = vpack.c.b16 %v1582, %v1581
        %v1612 = vpack.c.b16 %v1584, %v1583
        %v1613 = vpack.c.b16 %v1586, %v1585
        %v1614 = vpack.c.b16 %v1588, %v1587
        %v1615 = vpack.c.b16 %v1590, %v1589
        %v1616 = vpack.c.b16 %v1592, %v1591
        %v1617 = vpack.c.b16 %v1594, %v1593
        %v1618 = vpack.c.b16 %v1596, %v1595
        %v1619 = vpack.c.b16 %v1598, %v1597
        %v1620 = vpack.c.b16 %v1600, %v1599
        %v1621 = vpack.c.b16 %v1602, %v1601
        %v1622 = vpack.c.b16 %v1604, %v1603
        %v1623 = vpack.c.b16 %v1606, %v1605
        %v1624 = vpack.c.b16 %v1608, %v1607
        %v1657 = vunpack.c.l.b16 %v1529
        %v1658 = vunpack.c.l.b16 %v1530
        %v1659 = vunpack.c.l.b16 %v1531
        %v1660 = vunpack.c.l.b16 %v1532
        %v1661 = vunpack.c.l.b16 %v1533
        %v1662 = vunpack.c.l.b16 %v1534
        %v1663 = vunpack.c.l.b16 %v1535
        %v1664 = vunpack.c.l.b16 %v1536
        %v1665 = vunpack.c.l.b16 %v1537
        %v1666 = vunpack.c.l.b16 %v1538
        %v1667 = vunpack.c.l.b16 %v1539
        %v1668 = vunpack.c.l.b16 %v1540
        %v1669 = vunpack.c.l.b16 %v1541
        %v1670 = vunpack.c.l.b16 %v1542
        %v1671 = vunpack.c.l.b16 %v1543
        %v1672 = vunpack.c.l.b16 %v1544
        %v1673 = vpack.c.b16 %v1658, %v1657
        %v1674 = vpack.c.b16 %v1660, %v1659
        %v1675 = vpack.c.b16 %v1662, %v1661
        %v1676 = vpack.c.b16 %v1664, %v1663
        %v1677 = vpack.c.b16 %v1666, %v1665
        %v1678 = vpack.c.b16 %v1668, %v1667
        %v1679 = vpack.c.b16 %v1670, %v1669
        %v1680 = vpack.c.b16 %v1672, %v1671
        %1689 = vmatpush.bf16.msra.mxu0 %v1680
        %1690 = vmatpush.bf16.msra.mxu0 %v1679
        %1691 = vmatpush.bf16.msra.mxu0 %v1678
        %1692 = vmatpush.bf16.msra.mxu0 %v1677
        %1693 = vmatpush.bf16.msra.mxu0 %v1676
        %1694 = vmatpush.bf16.msra.mxu0 %v1675
        %1695 = vmatpush.bf16.msra.mxu0 %v1674
        %1696 = vmatpush.bf16.msra.mxu0 %v1673
        %1697 = vmatmul.bf16.gmra.mxu0 %v1609
        %v1698 = vpop.f32.mrf.mxu0
        %v1699 = vadd.f32 0.0, %v1698
        %v1700 = vpop.f32.mrf.mxu0
        %v1701 = vadd.f32 0.0, %v1700
        %1702 = vmatmul.bf16.gmra.mxu0 %v1610
        %v1703 = vpop.f32.mrf.mxu0
        %v1704 = vadd.f32 0.0, %v1703
        %v1705 = vpop.f32.mrf.mxu0
        %v1706 = vadd.f32 0.0, %v1705
        %1707 = vmatmul.bf16.gmra.mxu0 %v1611
        %v1708 = vpop.f32.mrf.mxu0
        %v1709 = vadd.f32 0.0, %v1708
        %v1710 = vpop.f32.mrf.mxu0
        %v1711 = vadd.f32 0.0, %v1710
        %1712 = vmatmul.bf16.gmra.mxu0 %v1612
        %v1713 = vpop.f32.mrf.mxu0
        %v1714 = vadd.f32 0.0, %v1713
        %v1715 = vpop.f32.mrf.mxu0
        %v1716 = vadd.f32 0.0, %v1715
        %1717 = vmatmul.bf16.gmra.mxu0 %v1613
        %v1718 = vpop.f32.mrf.mxu0
        %v1719 = vadd.f32 0.0, %v1718
        %v1720 = vpop.f32.mrf.mxu0
        %v1721 = vadd.f32 0.0, %v1720
        %1722 = vmatmul.bf16.gmra.mxu0 %v1614
        %v1723 = vpop.f32.mrf.mxu0
        %v1724 = vadd.f32 0.0, %v1723
        %v1725 = vpop.f32.mrf.mxu0
        %v1726 = vadd.f32 0.0, %v1725
        %1727 = vmatmul.bf16.gmra.mxu0 %v1615
        %v1728 = vpop.f32.mrf.mxu0
        %v1729 = vadd.f32 0.0, %v1728
        %v1730 = vpop.f32.mrf.mxu0
        %v1731 = vadd.f32 0.0, %v1730
        %1732 = vmatmul.bf16.gmra.mxu0 %v1616
        %v1733 = vpop.f32.mrf.mxu0
        %v1734 = vadd.f32 0.0, %v1733
        %v1735 = vpop.f32.mrf.mxu0
        %v1736 = vadd.f32 0.0, %v1735
        %1737 = vmatmul.bf16.gmra.mxu0 %v1617
        %v1738 = vpop.f32.mrf.mxu0
        %v1739 = vadd.f32 0.0, %v1738
        %v1740 = vpop.f32.mrf.mxu0
        %v1741 = vadd.f32 0.0, %v1740
        %1742 = vmatmul.bf16.gmra.mxu0 %v1618
        %v1743 = vpop.f32.mrf.mxu0
        %v1744 = vadd.f32 0.0, %v1743
        %v1745 = vpop.f32.mrf.mxu0
        %v1746 = vadd.f32 0.0, %v1745
        %1747 = vmatmul.bf16.gmra.mxu0 %v1619
        %v1748 = vpop.f32.mrf.mxu0
        %v1749 = vadd.f32 0.0, %v1748
        %v1750 = vpop.f32.mrf.mxu0
        %v1751 = vadd.f32 0.0, %v1750
        %1752 = vmatmul.bf16.gmra.mxu0 %v1620
        %v1753 = vpop.f32.mrf.mxu0
        %v1754 = vadd.f32 0.0, %v1753
        %v1755 = vpop.f32.mrf.mxu0
        %v1756 = vadd.f32 0.0, %v1755
        %1757 = vmatmul.bf16.gmra.mxu0 %v1621
        %v1758 = vpop.f32.mrf.mxu0
        %v1759 = vadd.f32 0.0, %v1758
        %v1760 = vpop.f32.mrf.mxu0
        %v1761 = vadd.f32 0.0, %v1760
        %1762 = vmatmul.bf16.gmra.mxu0 %v1622
        %v1763 = vpop.f32.mrf.mxu0
        %v1764 = vadd.f32 0.0, %v1763
        %v1765 = vpop.f32.mrf.mxu0
        %v1766 = vadd.f32 0.0, %v1765
        %1767 = vmatmul.bf16.gmra.mxu0 %v1623
        %v1768 = vpop.f32.mrf.mxu0
        %v1769 = vadd.f32 0.0, %v1768
        %v1770 = vpop.f32.mrf.mxu0
        %v1771 = vadd.f32 0.0, %v1770
        %1772 = vmatmul.bf16.gmra.mxu0 %v1624
        %v1773 = vpop.f32.mrf.mxu0
        %v1774 = vadd.f32 0.0, %v1773
        %v1775 = vpop.f32.mrf.mxu0
        %v1776 = vadd.f32 0.0, %v1775
        %1777 = vdwg.mxu0
        %v1778 = vadd.f32 %v1463, %v1699
        %v1779 = vadd.f32 %v1464, %v1701
        %v1780 = vadd.f32 %v1465, %v1704
        %v1781 = vadd.f32 %v1466, %v1706
        %v1782 = vadd.f32 %v1467, %v1709
        %v1783 = vadd.f32 %v1468, %v1711
        %v1784 = vadd.f32 %v1469, %v1714
        %v1785 = vadd.f32 %v1470, %v1716
        %v1786 = vadd.f32 %v1471, %v1719
        %v1787 = vadd.f32 %v1472, %v1721
        %v1788 = vadd.f32 %v1473, %v1724
        %v1789 = vadd.f32 %v1474, %v1726
        %v1790 = vadd.f32 %v1475, %v1729
        %v1791 = vadd.f32 %v1476, %v1731
        %v1792 = vadd.f32 %v1477, %v1734
        %v1793 = vadd.f32 %v1478, %v1736
        %v1794 = vadd.f32 %v1479, %v1739
        %v1795 = vadd.f32 %v1480, %v1741
        %v1796 = vadd.f32 %v1481, %v1744
        %v1797 = vadd.f32 %v1482, %v1746
        %v1798 = vadd.f32 %v1483, %v1749
        %v1799 = vadd.f32 %v1484, %v1751
        %v1800 = vadd.f32 %v1485, %v1754
        %v1801 = vadd.f32 %v1486, %v1756
        %v1802 = vadd.f32 %v1487, %v1759
        %v1803 = vadd.f32 %v1488, %v1761
        %v1804 = vadd.f32 %v1489, %v1764
        %v1805 = vadd.f32 %v1490, %v1766
        %v1806 = vadd.f32 %v1491, %v1769
        %v1807 = vadd.f32 %v1492, %v1771
        %v1808 = vadd.f32 %v1493, %v1774
        %v1809 = vadd.f32 %v1494, %v1776
        %v1810 = vld [vmem:[%s1495] sm:$0xf]
        %v1811 = vld [vmem:[%s1495 + $0x4] sm:$0xf]
        %v1812 = vld [vmem:[%s1495 + $0x8] sm:$0x1]
        %v1813 = vld [vmem:[%s1495 + $0xc] sm:$0xf]
        %v1814 = vld [vmem:[%s1495 + $0x10] sm:$0xf]
        %v1815 = vld [vmem:[%s1495 + $0x14] sm:$0x1]
        %v1816 = vld [vmem:[%s1495 + $0x18] sm:$0xf]
        %v1817 = vld [vmem:[%s1495 + $0x1c] sm:$0xf]
        %v1818 = vld [vmem:[%s1495 + $0x20] sm:$0x1]
        %v1819 = vld [vmem:[%s1495 + $0x24] sm:$0xf]
        %v1820 = vld [vmem:[%s1495 + $0x28] sm:$0xf]
        %v1821 = vld [vmem:[%s1495 + $0x2c] sm:$0x1]
        %v1822 = vld [vmem:[%s1495 + $0x30] sm:$0xf]
        %v1823 = vld [vmem:[%s1495 + $0x34] sm:$0xf]
        %v1824 = vld [vmem:[%s1495 + $0x38] sm:$0x1]
        %v1825 = vld [vmem:[%s1495 + $0x3c] sm:$0xf]
        %v1826 = vld [vmem:[%s1495 + $0x40] sm:$0xf]
        %v1827 = vld [vmem:[%s1495 + $0x44] sm:$0x1]
        %v1828 = vld [vmem:[%s1495 + $0x48] sm:$0xf]
        %v1829 = vld [vmem:[%s1495 + $0x4c] sm:$0xf]
        %v1830 = vld [vmem:[%s1495 + $0x50] sm:$0x1]
        %v1831 = vld [vmem:[%s1495 + $0x54] sm:$0xf]
        %v1832 = vld [vmem:[%s1495 + $0x58] sm:$0xf]
        %v1833 = vld [vmem:[%s1495 + $0x5c] sm:$0x1]
        %v1834 = vld [vmem:[%s1495 + $0x60] sm:$0xf]
        %v1835 = vld [vmem:[%s1495 + $0x64] sm:$0xf]
        %v1836 = vld [vmem:[%s1495 + $0x68] sm:$0x1]
        %v1837 = vld [vmem:[%s1495 + $0x6c] sm:$0xf]
        %v1838 = vld [vmem:[%s1495 + $0x70] sm:$0xf]
        %v1839 = vld [vmem:[%s1495 + $0x74] sm:$0x1]
        %v1840 = vld [vmem:[%s1495 + $0x78] sm:$0xf]
        %v1841 = vld [vmem:[%s1495 + $0x7c] sm:$0xf]
        %v1842 = vld [vmem:[%s1495 + $0x80] sm:$0x1]
        %v1843 = vld [vmem:[%s1495 + $0x84] sm:$0xf]
        %v1844 = vld [vmem:[%s1495 + $0x88] sm:$0xf]
        %v1845 = vld [vmem:[%s1495 + $0x8c] sm:$0x1]
        %v1846 = vld [vmem:[%s1495 + $0x90] sm:$0xf]
        %v1847 = vld [vmem:[%s1495 + $0x94] sm:$0xf]
        %v1848 = vld [vmem:[%s1495 + $0x98] sm:$0x1]
        %v1849 = vld [vmem:[%s1495 + $0x9c] sm:$0xf]
        %v1850 = vld [vmem:[%s1495 + $0xa0] sm:$0xf]
        %v1851 = vld [vmem:[%s1495 + $0xa4] sm:$0x1]
        %v1852 = vld [vmem:[%s1495 + $0xa8] sm:$0xf]
        %v1853 = vld [vmem:[%s1495 + $0xac] sm:$0xf]
        %v1854 = vld [vmem:[%s1495 + $0xb0] sm:$0x1]
        %v1855 = vld [vmem:[%s1495 + $0xb4] sm:$0xf]
        %v1856 = vld [vmem:[%s1495 + $0xb8] sm:$0xf]
        %v1857 = vld [vmem:[%s1495 + $0xbc] sm:$0x1]
        %v1859 = vshrl.u32 %v1810, 16
        %v1861 = vrot.slane %v1859, 4
        %v1862 = vshll.u32 %v1810, 16
        %v1864 = vrot.slane %v1862, 5
        %v1865 = vor.u32 %v1861, %v1864
        %v1866 = vrot.slane %v1865, 4
        %v1868 = vshll.u32 %v1811, 16
        %v1870 = vrot.slane %v1868, 5
        %v1871 = vsel %vm246, %v1866, %v1870
        %v1872 = vshrl.u32 %v1811, 16
        %v1874 = vrot.slane %v1872, 4
        %v1875 = vor.u32 %v1874, %v1870
        %v1876 = vrot.slane %v1875, 4
        %v1878 = vshll.u32 %v1812, 16
        %v1880 = vrot.slane %v1878, 5
        %v1881 = vsel %vm246, %v1876, %v1880
        %v1883 = vshrl.u32 %v1813, 16
        %v1885 = vrot.slane %v1883, 4
        %v1886 = vshll.u32 %v1813, 16
        %v1888 = vrot.slane %v1886, 5
        %v1889 = vor.u32 %v1885, %v1888
        %v1890 = vrot.slane %v1889, 4
        %v1892 = vshll.u32 %v1814, 16
        %v1894 = vrot.slane %v1892, 5
        %v1895 = vsel %vm246, %v1890, %v1894
        %v1896 = vshrl.u32 %v1814, 16
        %v1898 = vrot.slane %v1896, 4
        %v1899 = vor.u32 %v1898, %v1894
        %v1900 = vrot.slane %v1899, 4
        %v1902 = vshll.u32 %v1815, 16
        %v1904 = vrot.slane %v1902, 5
        %v1905 = vsel %vm246, %v1900, %v1904
        %v1907 = vshrl.u32 %v1816, 16
        %v1909 = vrot.slane %v1907, 4
        %v1910 = vshll.u32 %v1816, 16
        %v1912 = vrot.slane %v1910, 5
        %v1913 = vor.u32 %v1909, %v1912
        %v1914 = vrot.slane %v1913, 4
        %v1916 = vshll.u32 %v1817, 16
        %v1918 = vrot.slane %v1916, 5
        %v1919 = vsel %vm246, %v1914, %v1918
        %v1920 = vshrl.u32 %v1817, 16
        %v1922 = vrot.slane %v1920, 4
        %v1923 = vor.u32 %v1922, %v1918
        %v1924 = vrot.slane %v1923, 4
        %v1926 = vshll.u32 %v1818, 16
        %v1928 = vrot.slane %v1926, 5
        %v1929 = vsel %vm246, %v1924, %v1928
        %v1931 = vshrl.u32 %v1819, 16
        %v1933 = vrot.slane %v1931, 4
        %v1934 = vshll.u32 %v1819, 16
        %v1936 = vrot.slane %v1934, 5
        %v1937 = vor.u32 %v1933, %v1936
        %v1938 = vrot.slane %v1937, 4
        %v1940 = vshll.u32 %v1820, 16
        %v1942 = vrot.slane %v1940, 5
        %v1943 = vsel %vm246, %v1938, %v1942
        %v1944 = vshrl.u32 %v1820, 16
        %v1946 = vrot.slane %v1944, 4
        %v1947 = vor.u32 %v1946, %v1942
        %v1948 = vrot.slane %v1947, 4
        %v1950 = vshll.u32 %v1821, 16
        %v1952 = vrot.slane %v1950, 5
        %v1953 = vsel %vm246, %v1948, %v1952
        %v1955 = vshrl.u32 %v1822, 16
        %v1957 = vrot.slane %v1955, 4
        %v1958 = vshll.u32 %v1822, 16
        %v1960 = vrot.slane %v1958, 5
        %v1961 = vor.u32 %v1957, %v1960
        %v1962 = vrot.slane %v1961, 4
        %v1964 = vshll.u32 %v1823, 16
        %v1966 = vrot.slane %v1964, 5
        %v1967 = vsel %vm246, %v1962, %v1966
        %v1968 = vshrl.u32 %v1823, 16
        %v1970 = vrot.slane %v1968, 4
        %v1971 = vor.u32 %v1970, %v1966
        %v1972 = vrot.slane %v1971, 4
        %v1974 = vshll.u32 %v1824, 16
        %v1976 = vrot.slane %v1974, 5
        %v1977 = vsel %vm246, %v1972, %v1976
        %v1979 = vshrl.u32 %v1825, 16
        %v1981 = vrot.slane %v1979, 4
        %v1982 = vshll.u32 %v1825, 16
        %v1984 = vrot.slane %v1982, 5
        %v1985 = vor.u32 %v1981, %v1984
        %v1986 = vrot.slane %v1985, 4
        %v1988 = vshll.u32 %v1826, 16
        %v1990 = vrot.slane %v1988, 5
        %v1991 = vsel %vm246, %v1986, %v1990
        %v1992 = vshrl.u32 %v1826, 16
        %v1994 = vrot.slane %v1992, 4
        %v1995 = vor.u32 %v1994, %v1990
        %v1996 = vrot.slane %v1995, 4
        %v1998 = vshll.u32 %v1827, 16
        %v2000 = vrot.slane %v1998, 5
        %v2001 = vsel %vm246, %v1996, %v2000
        %v2003 = vshrl.u32 %v1828, 16
        %v2005 = vrot.slane %v2003, 4
        %v2006 = vshll.u32 %v1828, 16
        %v2008 = vrot.slane %v2006, 5
        %v2009 = vor.u32 %v2005, %v2008
        %v2010 = vrot.slane %v2009, 4
        %v2012 = vshll.u32 %v1829, 16
        %v2014 = vrot.slane %v2012, 5
        %v2015 = vsel %vm246, %v2010, %v2014
        %v2016 = vshrl.u32 %v1829, 16
        %v2018 = vrot.slane %v2016, 4
        %v2019 = vor.u32 %v2018, %v2014
        %v2020 = vrot.slane %v2019, 4
        %v2022 = vshll.u32 %v1830, 16
        %v2024 = vrot.slane %v2022, 5
        %v2025 = vsel %vm246, %v2020, %v2024
        %v2027 = vshrl.u32 %v1831, 16
        %v2029 = vrot.slane %v2027, 4
        %v2030 = vshll.u32 %v1831, 16
        %v2032 = vrot.slane %v2030, 5
        %v2033 = vor.u32 %v2029, %v2032
        %v2034 = vrot.slane %v2033, 4
        %v2036 = vshll.u32 %v1832, 16
        %v2038 = vrot.slane %v2036, 5
        %v2039 = vsel %vm246, %v2034, %v2038
        %v2040 = vshrl.u32 %v1832, 16
        %v2042 = vrot.slane %v2040, 4
        %v2043 = vor.u32 %v2042, %v2038
        %v2044 = vrot.slane %v2043, 4
        %v2046 = vshll.u32 %v1833, 16
        %v2048 = vrot.slane %v2046, 5
        %v2049 = vsel %vm246, %v2044, %v2048
        %v2051 = vshrl.u32 %v1834, 16
        %v2053 = vrot.slane %v2051, 4
        %v2054 = vshll.u32 %v1834, 16
        %v2056 = vrot.slane %v2054, 5
        %v2057 = vor.u32 %v2053, %v2056
        %v2058 = vrot.slane %v2057, 4
        %v2060 = vshll.u32 %v1835, 16
        %v2062 = vrot.slane %v2060, 5
        %v2063 = vsel %vm246, %v2058, %v2062
        %v2064 = vshrl.u32 %v1835, 16
        %v2066 = vrot.slane %v2064, 4
        %v2067 = vor.u32 %v2066, %v2062
        %v2068 = vrot.slane %v2067, 4
        %v2070 = vshll.u32 %v1836, 16
        %v2072 = vrot.slane %v2070, 5
        %v2073 = vsel %vm246, %v2068, %v2072
        %v2075 = vshrl.u32 %v1837, 16
        %v2077 = vrot.slane %v2075, 4
        %v2078 = vshll.u32 %v1837, 16
        %v2080 = vrot.slane %v2078, 5
        %v2081 = vor.u32 %v2077, %v2080
        %v2082 = vrot.slane %v2081, 4
        %v2084 = vshll.u32 %v1838, 16
        %v2086 = vrot.slane %v2084, 5
        %v2087 = vsel %vm246, %v2082, %v2086
        %v2088 = vshrl.u32 %v1838, 16
        %v2090 = vrot.slane %v2088, 4
        %v2091 = vor.u32 %v2090, %v2086
        %v2092 = vrot.slane %v2091, 4
        %v2094 = vshll.u32 %v1839, 16
        %v2096 = vrot.slane %v2094, 5
        %v2097 = vsel %vm246, %v2092, %v2096
        %v2099 = vshrl.u32 %v1840, 16
        %v2101 = vrot.slane %v2099, 4
        %v2102 = vshll.u32 %v1840, 16
        %v2104 = vrot.slane %v2102, 5
        %v2105 = vor.u32 %v2101, %v2104
        %v2106 = vrot.slane %v2105, 4
        %v2108 = vshll.u32 %v1841, 16
        %v2110 = vrot.slane %v2108, 5
        %v2111 = vsel %vm246, %v2106, %v2110
        %v2112 = vshrl.u32 %v1841, 16
        %v2114 = vrot.slane %v2112, 4
        %v2115 = vor.u32 %v2114, %v2110
        %v2116 = vrot.slane %v2115, 4
        %v2118 = vshll.u32 %v1842, 16
        %v2120 = vrot.slane %v2118, 5
        %v2121 = vsel %vm246, %v2116, %v2120
        %v2123 = vshrl.u32 %v1843, 16
        %v2125 = vrot.slane %v2123, 4
        %v2126 = vshll.u32 %v1843, 16
        %v2128 = vrot.slane %v2126, 5
        %v2129 = vor.u32 %v2125, %v2128
        %v2130 = vrot.slane %v2129, 4
        %v2132 = vshll.u32 %v1844, 16
        %v2134 = vrot.slane %v2132, 5
        %v2135 = vsel %vm246, %v2130, %v2134
        %v2136 = vshrl.u32 %v1844, 16
        %v2138 = vrot.slane %v2136, 4
        %v2139 = vor.u32 %v2138, %v2134
        %v2140 = vrot.slane %v2139, 4
        %v2142 = vshll.u32 %v1845, 16
        %v2144 = vrot.slane %v2142, 5
        %v2145 = vsel %vm246, %v2140, %v2144
        %v2147 = vshrl.u32 %v1846, 16
        %v2149 = vrot.slane %v2147, 4
        %v2150 = vshll.u32 %v1846, 16
        %v2152 = vrot.slane %v2150, 5
        %v2153 = vor.u32 %v2149, %v2152
        %v2154 = vrot.slane %v2153, 4
        %v2156 = vshll.u32 %v1847, 16
        %v2158 = vrot.slane %v2156, 5
        %v2159 = vsel %vm246, %v2154, %v2158
        %v2160 = vshrl.u32 %v1847, 16
        %v2162 = vrot.slane %v2160, 4
        %v2163 = vor.u32 %v2162, %v2158
        %v2164 = vrot.slane %v2163, 4
        %v2166 = vshll.u32 %v1848, 16
        %v2168 = vrot.slane %v2166, 5
        %v2169 = vsel %vm246, %v2164, %v2168
        %v2171 = vshrl.u32 %v1849, 16
        %v2173 = vrot.slane %v2171, 4
        %v2174 = vshll.u32 %v1849, 16
        %v2176 = vrot.slane %v2174, 5
        %v2177 = vor.u32 %v2173, %v2176
        %v2178 = vrot.slane %v2177, 4
        %v2180 = vshll.u32 %v1850, 16
        %v2182 = vrot.slane %v2180, 5
        %v2183 = vsel %vm246, %v2178, %v2182
        %v2184 = vshrl.u32 %v1850, 16
        %v2186 = vrot.slane %v2184, 4
        %v2187 = vor.u32 %v2186, %v2182
        %v2188 = vrot.slane %v2187, 4
        %v2190 = vshll.u32 %v1851, 16
        %v2192 = vrot.slane %v2190, 5
        %v2193 = vsel %vm246, %v2188, %v2192
        %v2195 = vshrl.u32 %v1852, 16
        %v2197 = vrot.slane %v2195, 4
        %v2198 = vshll.u32 %v1852, 16
        %v2200 = vrot.slane %v2198, 5
        %v2201 = vor.u32 %v2197, %v2200
        %v2202 = vrot.slane %v2201, 4
        %v2204 = vshll.u32 %v1853, 16
        %v2206 = vrot.slane %v2204, 5
        %v2207 = vsel %vm246, %v2202, %v2206
        %v2208 = vshrl.u32 %v1853, 16
        %v2210 = vrot.slane %v2208, 4
        %v2211 = vor.u32 %v2210, %v2206
        %v2212 = vrot.slane %v2211, 4
        %v2214 = vshll.u32 %v1854, 16
        %v2216 = vrot.slane %v2214, 5
        %v2217 = vsel %vm246, %v2212, %v2216
        %v2219 = vshrl.u32 %v1855, 16
        %v2221 = vrot.slane %v2219, 4
        %v2222 = vshll.u32 %v1855, 16
        %v2224 = vrot.slane %v2222, 5
        %v2225 = vor.u32 %v2221, %v2224
        %v2226 = vrot.slane %v2225, 4
        %v2228 = vshll.u32 %v1856, 16
        %v2230 = vrot.slane %v2228, 5
        %v2231 = vsel %vm246, %v2226, %v2230
        %v2232 = vshrl.u32 %v1856, 16
        %v2234 = vrot.slane %v2232, 4
        %v2235 = vor.u32 %v2234, %v2230
        %v2236 = vrot.slane %v2235, 4
        %v2238 = vshll.u32 %v1857, 16
        %v2240 = vrot.slane %v2238, 5
        %v2241 = vsel %vm246, %v2236, %v2240
        %s2242 = scalar_lea.vmem %s1, 256
        %v2243 = vld [vmem:[%s2242] sm:$0xf]
        %v2244 = vld [vmem:[%s2242 + $0x4] sm:$0xf]
        %v2245 = vld [vmem:[%s2242 + $0x8] sm:$0xf]
        %v2246 = vld [vmem:[%s2242 + $0xc] sm:$0xf]
        %v2247 = vld [vmem:[%s2242 + $0x10] sm:$0xf]
        %v2248 = vld [vmem:[%s2242 + $0x14] sm:$0xf]
        %v2249 = vld [vmem:[%s2242 + $0x18] sm:$0xf]
        %v2250 = vld [vmem:[%s2242 + $0x1c] sm:$0xf]
        %v2251 = vld [vmem:[%s2242 + $0x20] sm:$0xf]
        %v2252 = vld [vmem:[%s2242 + $0x24] sm:$0xf]
        %v2253 = vld [vmem:[%s2242 + $0x28] sm:$0xf]
        %v2254 = vld [vmem:[%s2242 + $0x2c] sm:$0xf]
        %v2255 = vld [vmem:[%s2242 + $0x30] sm:$0xf]
        %v2256 = vld [vmem:[%s2242 + $0x34] sm:$0xf]
        %v2257 = vld [vmem:[%s2242 + $0x38] sm:$0xf]
        %v2258 = vld [vmem:[%s2242 + $0x3c] sm:$0xf]
        %v2259 = vunpack.c.l.b16 %v1871
        %v2260 = vunpack.c.l.b16 %v1881
        %v2261 = vunpack.c.l.b16 %v1895
        %v2262 = vunpack.c.l.b16 %v1905
        %v2263 = vunpack.c.l.b16 %v1919
        %v2264 = vunpack.c.l.b16 %v1929
        %v2265 = vunpack.c.l.b16 %v1943
        %v2266 = vunpack.c.l.b16 %v1953
        %v2267 = vunpack.c.l.b16 %v1967
        %v2268 = vunpack.c.l.b16 %v1977
        %v2269 = vunpack.c.l.b16 %v1991
        %v2270 = vunpack.c.l.b16 %v2001
        %v2271 = vunpack.c.l.b16 %v2015
        %v2272 = vunpack.c.l.b16 %v2025
        %v2273 = vunpack.c.l.b16 %v2039
        %v2274 = vunpack.c.l.b16 %v2049
        %v2275 = vunpack.c.l.b16 %v2063
        %v2276 = vunpack.c.l.b16 %v2073
        %v2277 = vunpack.c.l.b16 %v2087
        %v2278 = vunpack.c.l.b16 %v2097
        %v2279 = vunpack.c.l.b16 %v2111
        %v2280 = vunpack.c.l.b16 %v2121
        %v2281 = vunpack.c.l.b16 %v2135
        %v2282 = vunpack.c.l.b16 %v2145
        %v2283 = vunpack.c.l.b16 %v2159
        %v2284 = vunpack.c.l.b16 %v2169
        %v2285 = vunpack.c.l.b16 %v2183
        %v2286 = vunpack.c.l.b16 %v2193
        %v2287 = vunpack.c.l.b16 %v2207
        %v2288 = vunpack.c.l.b16 %v2217
        %v2289 = vunpack.c.l.b16 %v2231
        %v2290 = vunpack.c.l.b16 %v2241
        %v2291 = vpack.c.b16 %v2260, %v2259
        %v2292 = vpack.c.b16 %v2262, %v2261
        %v2293 = vpack.c.b16 %v2264, %v2263
        %v2294 = vpack.c.b16 %v2266, %v2265
        %v2295 = vpack.c.b16 %v2268, %v2267
        %v2296 = vpack.c.b16 %v2270, %v2269
        %v2297 = vpack.c.b16 %v2272, %v2271
        %v2298 = vpack.c.b16 %v2274, %v2273
        %v2299 = vpack.c.b16 %v2276, %v2275
        %v2300 = vpack.c.b16 %v2278, %v2277
        %v2301 = vpack.c.b16 %v2280, %v2279
        %v2302 = vpack.c.b16 %v2282, %v2281
        %v2303 = vpack.c.b16 %v2284, %v2283
        %v2304 = vpack.c.b16 %v2286, %v2285
        %v2305 = vpack.c.b16 %v2288, %v2287
        %v2306 = vpack.c.b16 %v2290, %v2289
        %v2339 = vunpack.c.l.b16 %v2243
        %v2340 = vunpack.c.l.b16 %v2244
        %v2341 = vunpack.c.l.b16 %v2245
        %v2342 = vunpack.c.l.b16 %v2246
        %v2343 = vunpack.c.l.b16 %v2247
        %v2344 = vunpack.c.l.b16 %v2248
        %v2345 = vunpack.c.l.b16 %v2249
        %v2346 = vunpack.c.l.b16 %v2250
        %v2347 = vunpack.c.l.b16 %v2251
        %v2348 = vunpack.c.l.b16 %v2252
        %v2349 = vunpack.c.l.b16 %v2253
        %v2350 = vunpack.c.l.b16 %v2254
        %v2351 = vunpack.c.l.b16 %v2255
        %v2352 = vunpack.c.l.b16 %v2256
        %v2353 = vunpack.c.l.b16 %v2257
        %v2354 = vunpack.c.l.b16 %v2258
        %v2355 = vpack.c.b16 %v2340, %v2339
        %v2356 = vpack.c.b16 %v2342, %v2341
        %v2357 = vpack.c.b16 %v2344, %v2343
        %v2358 = vpack.c.b16 %v2346, %v2345
        %v2359 = vpack.c.b16 %v2348, %v2347
        %v2360 = vpack.c.b16 %v2350, %v2349
        %v2361 = vpack.c.b16 %v2352, %v2351
        %v2362 = vpack.c.b16 %v2354, %v2353
        %2371 = vmatpush.bf16.msra.mxu0 %v2362
        %2372 = vmatpush.bf16.msra.mxu0 %v2361
        %2373 = vmatpush.bf16.msra.mxu0 %v2360
        %2374 = vmatpush.bf16.msra.mxu0 %v2359
        %2375 = vmatpush.bf16.msra.mxu0 %v2358
        %2376 = vmatpush.bf16.msra.mxu0 %v2357
        %2377 = vmatpush.bf16.msra.mxu0 %v2356
        %2378 = vmatpush.bf16.msra.mxu0 %v2355
        %2379 = vmatmul.bf16.gmra.mxu0 %v2291
        %v2380 = vpop.f32.mrf.mxu0
        %v2381 = vadd.f32 0.0, %v2380
        %v2382 = vpop.f32.mrf.mxu0
        %v2383 = vadd.f32 0.0, %v2382
        %2384 = vmatmul.bf16.gmra.mxu0 %v2292
        %v2385 = vpop.f32.mrf.mxu0
        %v2386 = vadd.f32 0.0, %v2385
        %v2387 = vpop.f32.mrf.mxu0
        %v2388 = vadd.f32 0.0, %v2387
        %2389 = vmatmul.bf16.gmra.mxu0 %v2293
        %v2390 = vpop.f32.mrf.mxu0
        %v2391 = vadd.f32 0.0, %v2390
        %v2392 = vpop.f32.mrf.mxu0
        %v2393 = vadd.f32 0.0, %v2392
        %2394 = vmatmul.bf16.gmra.mxu0 %v2294
        %v2395 = vpop.f32.mrf.mxu0
        %v2396 = vadd.f32 0.0, %v2395
        %v2397 = vpop.f32.mrf.mxu0
        %v2398 = vadd.f32 0.0, %v2397
        %2399 = vmatmul.bf16.gmra.mxu0 %v2295
        %v2400 = vpop.f32.mrf.mxu0
        %v2401 = vadd.f32 0.0, %v2400
        %v2402 = vpop.f32.mrf.mxu0
        %v2403 = vadd.f32 0.0, %v2402
        %2404 = vmatmul.bf16.gmra.mxu0 %v2296
        %v2405 = vpop.f32.mrf.mxu0
        %v2406 = vadd.f32 0.0, %v2405
        %v2407 = vpop.f32.mrf.mxu0
        %v2408 = vadd.f32 0.0, %v2407
        %2409 = vmatmul.bf16.gmra.mxu0 %v2297
        %v2410 = vpop.f32.mrf.mxu0
        %v2411 = vadd.f32 0.0, %v2410
        %v2412 = vpop.f32.mrf.mxu0
        %v2413 = vadd.f32 0.0, %v2412
        %2414 = vmatmul.bf16.gmra.mxu0 %v2298
        %v2415 = vpop.f32.mrf.mxu0
        %v2416 = vadd.f32 0.0, %v2415
        %v2417 = vpop.f32.mrf.mxu0
        %v2418 = vadd.f32 0.0, %v2417
        %2419 = vmatmul.bf16.gmra.mxu0 %v2299
        %v2420 = vpop.f32.mrf.mxu0
        %v2421 = vadd.f32 0.0, %v2420
        %v2422 = vpop.f32.mrf.mxu0
        %v2423 = vadd.f32 0.0, %v2422
        %2424 = vmatmul.bf16.gmra.mxu0 %v2300
        %v2425 = vpop.f32.mrf.mxu0
        %v2426 = vadd.f32 0.0, %v2425
        %v2427 = vpop.f32.mrf.mxu0
        %v2428 = vadd.f32 0.0, %v2427
        %2429 = vmatmul.bf16.gmra.mxu0 %v2301
        %v2430 = vpop.f32.mrf.mxu0
        %v2431 = vadd.f32 0.0, %v2430
        %v2432 = vpop.f32.mrf.mxu0
        %v2433 = vadd.f32 0.0, %v2432
        %2434 = vmatmul.bf16.gmra.mxu0 %v2302
        %v2435 = vpop.f32.mrf.mxu0
        %v2436 = vadd.f32 0.0, %v2435
        %v2437 = vpop.f32.mrf.mxu0
        %v2438 = vadd.f32 0.0, %v2437
        %2439 = vmatmul.bf16.gmra.mxu0 %v2303
        %v2440 = vpop.f32.mrf.mxu0
        %v2441 = vadd.f32 0.0, %v2440
        %v2442 = vpop.f32.mrf.mxu0
        %v2443 = vadd.f32 0.0, %v2442
        %2444 = vmatmul.bf16.gmra.mxu0 %v2304
        %v2445 = vpop.f32.mrf.mxu0
        %v2446 = vadd.f32 0.0, %v2445
        %v2447 = vpop.f32.mrf.mxu0
        %v2448 = vadd.f32 0.0, %v2447
        %2449 = vmatmul.bf16.gmra.mxu0 %v2305
        %v2450 = vpop.f32.mrf.mxu0
        %v2451 = vadd.f32 0.0, %v2450
        %v2452 = vpop.f32.mrf.mxu0
        %v2453 = vadd.f32 0.0, %v2452
        %2454 = vmatmul.bf16.gmra.mxu0 %v2306
        %v2455 = vpop.f32.mrf.mxu0
        %v2456 = vadd.f32 0.0, %v2455
        %v2457 = vpop.f32.mrf.mxu0
        %v2458 = vadd.f32 0.0, %v2457
        %2459 = vdwg.mxu0
        %v2460 = vadd.f32 %v1778, %v2381
        %v2461 = vadd.f32 %v1779, %v2383
        %v2462 = vadd.f32 %v1780, %v2386
        %v2463 = vadd.f32 %v1781, %v2388
        %v2464 = vadd.f32 %v1782, %v2391
        %v2465 = vadd.f32 %v1783, %v2393
        %v2466 = vadd.f32 %v1784, %v2396
        %v2467 = vadd.f32 %v1785, %v2398
        %v2468 = vadd.f32 %v1786, %v2401
        %v2469 = vadd.f32 %v1787, %v2403
        %v2470 = vadd.f32 %v1788, %v2406
        %v2471 = vadd.f32 %v1789, %v2408
        %v2472 = vadd.f32 %v1790, %v2411
        %v2473 = vadd.f32 %v1791, %v2413
        %v2474 = vadd.f32 %v1792, %v2416
        %v2475 = vadd.f32 %v1793, %v2418
        %v2476 = vadd.f32 %v1794, %v2421
        %v2477 = vadd.f32 %v1795, %v2423
        %v2478 = vadd.f32 %v1796, %v2426
        %v2479 = vadd.f32 %v1797, %v2428
        %v2480 = vadd.f32 %v1798, %v2431
        %v2481 = vadd.f32 %v1799, %v2433
        %v2482 = vadd.f32 %v1800, %v2436
        %v2483 = vadd.f32 %v1801, %v2438
        %v2484 = vadd.f32 %v1802, %v2441
        %v2485 = vadd.f32 %v1803, %v2443
        %v2486 = vadd.f32 %v1804, %v2446
        %v2487 = vadd.f32 %v1805, %v2448
        %v2488 = vadd.f32 %v1806, %v2451
        %v2489 = vadd.f32 %v1807, %v2453
        %v2490 = vadd.f32 %v1808, %v2456
        %v2491 = vadd.f32 %v1809, %v2458
        %v2492 = vld [vmem:[%s1495] sm:$0xe]
        %v2493 = vld [vmem:[%s1495 + $0xc] sm:$0xe]
        %v2494 = vld [vmem:[%s1495 + $0x18] sm:$0xe]
        %v2495 = vld [vmem:[%s1495 + $0x24] sm:$0xe]
        %v2496 = vld [vmem:[%s1495 + $0x30] sm:$0xe]
        %v2497 = vld [vmem:[%s1495 + $0x3c] sm:$0xe]
        %v2498 = vld [vmem:[%s1495 + $0x48] sm:$0xe]
        %v2499 = vld [vmem:[%s1495 + $0x54] sm:$0xe]
        %v2500 = vld [vmem:[%s1495 + $0x60] sm:$0xe]
        %v2501 = vld [vmem:[%s1495 + $0x6c] sm:$0xe]
        %v2502 = vld [vmem:[%s1495 + $0x78] sm:$0xe]
        %v2503 = vld [vmem:[%s1495 + $0x84] sm:$0xe]
        %v2504 = vld [vmem:[%s1495 + $0x90] sm:$0xe]
        %v2505 = vld [vmem:[%s1495 + $0x9c] sm:$0xe]
        %v2506 = vld [vmem:[%s1495 + $0xa8] sm:$0xe]
        %v2507 = vld [vmem:[%s1495 + $0xb4] sm:$0xe]
        %v2556 = vrot.slane %v2492, 5
        %v2557 = vrot.slane %v2556, 4
        %v2558 = vrot.slane %v1811, 5
        %v2559 = vsel %vm1132, %v2557, %v2558
        %v2560 = vrot.slane %v2558, 4
        %v2561 = vrot.slane %v1812, 5
        %v2562 = vsel %vm1132, %v2560, %v2561
        %v2563 = vrot.slane %v2493, 5
        %v2564 = vrot.slane %v2563, 4
        %v2565 = vrot.slane %v1814, 5
        %v2566 = vsel %vm1132, %v2564, %v2565
        %v2567 = vrot.slane %v2565, 4
        %v2568 = vrot.slane %v1815, 5
        %v2569 = vsel %vm1132, %v2567, %v2568
        %v2570 = vrot.slane %v2494, 5
        %v2571 = vrot.slane %v2570, 4
        %v2572 = vrot.slane %v1817, 5
        %v2573 = vsel %vm1132, %v2571, %v2572
        %v2574 = vrot.slane %v2572, 4
        %v2575 = vrot.slane %v1818, 5
        %v2576 = vsel %vm1132, %v2574, %v2575
        %v2577 = vrot.slane %v2495, 5
        %v2578 = vrot.slane %v2577, 4
        %v2579 = vrot.slane %v1820, 5
        %v2580 = vsel %vm1132, %v2578, %v2579
        %v2581 = vrot.slane %v2579, 4
        %v2582 = vrot.slane %v1821, 5
        %v2583 = vsel %vm1132, %v2581, %v2582
        %v2584 = vrot.slane %v2496, 5
        %v2585 = vrot.slane %v2584, 4
        %v2586 = vrot.slane %v1823, 5
        %v2587 = vsel %vm1132, %v2585, %v2586
        %v2588 = vrot.slane %v2586, 4
        %v2589 = vrot.slane %v1824, 5
        %v2590 = vsel %vm1132, %v2588, %v2589
        %v2591 = vrot.slane %v2497, 5
        %v2592 = vrot.slane %v2591, 4
        %v2593 = vrot.slane %v1826, 5
        %v2594 = vsel %vm1132, %v2592, %v2593
        %v2595 = vrot.slane %v2593, 4
        %v2596 = vrot.slane %v1827, 5
        %v2597 = vsel %vm1132, %v2595, %v2596
        %v2598 = vrot.slane %v2498, 5
        %v2599 = vrot.slane %v2598, 4
        %v2600 = vrot.slane %v1829, 5
        %v2601 = vsel %vm1132, %v2599, %v2600
        %v2602 = vrot.slane %v2600, 4
        %v2603 = vrot.slane %v1830, 5
        %v2604 = vsel %vm1132, %v2602, %v2603
        %v2605 = vrot.slane %v2499, 5
        %v2606 = vrot.slane %v2605, 4
        %v2607 = vrot.slane %v1832, 5
        %v2608 = vsel %vm1132, %v2606, %v2607
        %v2609 = vrot.slane %v2607, 4
        %v2610 = vrot.slane %v1833, 5
        %v2611 = vsel %vm1132, %v2609, %v2610
        %v2612 = vrot.slane %v2500, 5
        %v2613 = vrot.slane %v2612, 4
        %v2614 = vrot.slane %v1835, 5
        %v2615 = vsel %vm1132, %v2613, %v2614
        %v2616 = vrot.slane %v2614, 4
        %v2617 = vrot.slane %v1836, 5
        %v2618 = vsel %vm1132, %v2616, %v2617
        %v2619 = vrot.slane %v2501, 5
        %v2620 = vrot.slane %v2619, 4
        %v2621 = vrot.slane %v1838, 5
        %v2622 = vsel %vm1132, %v2620, %v2621
        %v2623 = vrot.slane %v2621, 4
        %v2624 = vrot.slane %v1839, 5
        %v2625 = vsel %vm1132, %v2623, %v2624
        %v2626 = vrot.slane %v2502, 5
        %v2627 = vrot.slane %v2626, 4
        %v2628 = vrot.slane %v1841, 5
        %v2629 = vsel %vm1132, %v2627, %v2628
        %v2630 = vrot.slane %v2628, 4
        %v2631 = vrot.slane %v1842, 5
        %v2632 = vsel %vm1132, %v2630, %v2631
        %v2633 = vrot.slane %v2503, 5
        %v2634 = vrot.slane %v2633, 4
        %v2635 = vrot.slane %v1844, 5
        %v2636 = vsel %vm1132, %v2634, %v2635
        %v2637 = vrot.slane %v2635, 4
        %v2638 = vrot.slane %v1845, 5
        %v2639 = vsel %vm1132, %v2637, %v2638
        %v2640 = vrot.slane %v2504, 5
        %v2641 = vrot.slane %v2640, 4
        %v2642 = vrot.slane %v1847, 5
        %v2643 = vsel %vm1132, %v2641, %v2642
        %v2644 = vrot.slane %v2642, 4
        %v2645 = vrot.slane %v1848, 5
        %v2646 = vsel %vm1132, %v2644, %v2645
        %v2647 = vrot.slane %v2505, 5
        %v2648 = vrot.slane %v2647, 4
        %v2649 = vrot.slane %v1850, 5
        %v2650 = vsel %vm1132, %v2648, %v2649
        %v2651 = vrot.slane %v2649, 4
        %v2652 = vrot.slane %v1851, 5
        %v2653 = vsel %vm1132, %v2651, %v2652
        %v2654 = vrot.slane %v2506, 5
        %v2655 = vrot.slane %v2654, 4
        %v2656 = vrot.slane %v1853, 5
        %v2657 = vsel %vm1132, %v2655, %v2656
        %v2658 = vrot.slane %v2656, 4
        %v2659 = vrot.slane %v1854, 5
        %v2660 = vsel %vm1132, %v2658, %v2659
        %v2661 = vrot.slane %v2507, 5
        %v2662 = vrot.slane %v2661, 4
        %v2663 = vrot.slane %v1856, 5
        %v2664 = vsel %vm1132, %v2662, %v2663
        %v2665 = vrot.slane %v2663, 4
        %v2666 = vrot.slane %v1857, 5
        %v2667 = vsel %vm1132, %v2665, %v2666
        %s2668 = scalar_lea.vmem %s1, 320
        %v2669 = vld [vmem:[%s2668] sm:$0xf]
        %v2670 = vld [vmem:[%s2668 + $0x4] sm:$0xf]
        %v2671 = vld [vmem:[%s2668 + $0x8] sm:$0xf]
        %v2672 = vld [vmem:[%s2668 + $0xc] sm:$0xf]
        %v2673 = vld [vmem:[%s2668 + $0x10] sm:$0xf]
        %v2674 = vld [vmem:[%s2668 + $0x14] sm:$0xf]
        %v2675 = vld [vmem:[%s2668 + $0x18] sm:$0xf]
        %v2676 = vld [vmem:[%s2668 + $0x1c] sm:$0xf]
        %v2677 = vld [vmem:[%s2668 + $0x20] sm:$0xf]
        %v2678 = vld [vmem:[%s2668 + $0x24] sm:$0xf]
        %v2679 = vld [vmem:[%s2668 + $0x28] sm:$0xf]
        %v2680 = vld [vmem:[%s2668 + $0x2c] sm:$0xf]
        %v2681 = vld [vmem:[%s2668 + $0x30] sm:$0xf]
        %v2682 = vld [vmem:[%s2668 + $0x34] sm:$0xf]
        %v2683 = vld [vmem:[%s2668 + $0x38] sm:$0xf]
        %v2684 = vld [vmem:[%s2668 + $0x3c] sm:$0xf]
        %v2685 = vunpack.c.l.b16 %v2559
        %v2686 = vunpack.c.l.b16 %v2562
        %v2687 = vunpack.c.l.b16 %v2566
        %v2688 = vunpack.c.l.b16 %v2569
        %v2689 = vunpack.c.l.b16 %v2573
        %v2690 = vunpack.c.l.b16 %v2576
        %v2691 = vunpack.c.l.b16 %v2580
        %v2692 = vunpack.c.l.b16 %v2583
        %v2693 = vunpack.c.l.b16 %v2587
        %v2694 = vunpack.c.l.b16 %v2590
        %v2695 = vunpack.c.l.b16 %v2594
        %v2696 = vunpack.c.l.b16 %v2597
        %v2697 = vunpack.c.l.b16 %v2601
        %v2698 = vunpack.c.l.b16 %v2604
        %v2699 = vunpack.c.l.b16 %v2608
        %v2700 = vunpack.c.l.b16 %v2611
        %v2701 = vunpack.c.l.b16 %v2615
        %v2702 = vunpack.c.l.b16 %v2618
        %v2703 = vunpack.c.l.b16 %v2622
        %v2704 = vunpack.c.l.b16 %v2625
        %v2705 = vunpack.c.l.b16 %v2629
        %v2706 = vunpack.c.l.b16 %v2632
        %v2707 = vunpack.c.l.b16 %v2636
        %v2708 = vunpack.c.l.b16 %v2639
        %v2709 = vunpack.c.l.b16 %v2643
        %v2710 = vunpack.c.l.b16 %v2646
        %v2711 = vunpack.c.l.b16 %v2650
        %v2712 = vunpack.c.l.b16 %v2653
        %v2713 = vunpack.c.l.b16 %v2657
        %v2714 = vunpack.c.l.b16 %v2660
        %v2715 = vunpack.c.l.b16 %v2664
        %v2716 = vunpack.c.l.b16 %v2667
        %v2717 = vpack.c.b16 %v2686, %v2685
        %v2718 = vpack.c.b16 %v2688, %v2687
        %v2719 = vpack.c.b16 %v2690, %v2689
        %v2720 = vpack.c.b16 %v2692, %v2691
        %v2721 = vpack.c.b16 %v2694, %v2693
        %v2722 = vpack.c.b16 %v2696, %v2695
        %v2723 = vpack.c.b16 %v2698, %v2697
        %v2724 = vpack.c.b16 %v2700, %v2699
        %v2725 = vpack.c.b16 %v2702, %v2701
        %v2726 = vpack.c.b16 %v2704, %v2703
        %v2727 = vpack.c.b16 %v2706, %v2705
        %v2728 = vpack.c.b16 %v2708, %v2707
        %v2729 = vpack.c.b16 %v2710, %v2709
        %v2730 = vpack.c.b16 %v2712, %v2711
        %v2731 = vpack.c.b16 %v2714, %v2713
        %v2732 = vpack.c.b16 %v2716, %v2715
        %v2765 = vunpack.c.l.b16 %v2669
        %v2766 = vunpack.c.l.b16 %v2670
        %v2767 = vunpack.c.l.b16 %v2671
        %v2768 = vunpack.c.l.b16 %v2672
        %v2769 = vunpack.c.l.b16 %v2673
        %v2770 = vunpack.c.l.b16 %v2674
        %v2771 = vunpack.c.l.b16 %v2675
        %v2772 = vunpack.c.l.b16 %v2676
        %v2773 = vunpack.c.l.b16 %v2677
        %v2774 = vunpack.c.l.b16 %v2678
        %v2775 = vunpack.c.l.b16 %v2679
        %v2776 = vunpack.c.l.b16 %v2680
        %v2777 = vunpack.c.l.b16 %v2681
        %v2778 = vunpack.c.l.b16 %v2682
        %v2779 = vunpack.c.l.b16 %v2683
        %v2780 = vunpack.c.l.b16 %v2684
        %v2781 = vpack.c.b16 %v2766, %v2765
        %v2782 = vpack.c.b16 %v2768, %v2767
        %v2783 = vpack.c.b16 %v2770, %v2769
        %v2784 = vpack.c.b16 %v2772, %v2771
        %v2785 = vpack.c.b16 %v2774, %v2773
        %v2786 = vpack.c.b16 %v2776, %v2775
        %v2787 = vpack.c.b16 %v2778, %v2777
        %v2788 = vpack.c.b16 %v2780, %v2779
        %2797 = vmatpush.bf16.msra.mxu0 %v2788
        %2798 = vmatpush.bf16.msra.mxu0 %v2787
        %2799 = vmatpush.bf16.msra.mxu0 %v2786
        %2800 = vmatpush.bf16.msra.mxu0 %v2785
        %2801 = vmatpush.bf16.msra.mxu0 %v2784
        %2802 = vmatpush.bf16.msra.mxu0 %v2783
        %2803 = vmatpush.bf16.msra.mxu0 %v2782
        %2804 = vmatpush.bf16.msra.mxu0 %v2781
        %2805 = vmatmul.bf16.gmra.mxu0 %v2717
        %v2806 = vpop.f32.mrf.mxu0
        %v2807 = vadd.f32 0.0, %v2806
        %v2808 = vpop.f32.mrf.mxu0
        %v2809 = vadd.f32 0.0, %v2808
        %2810 = vmatmul.bf16.gmra.mxu0 %v2718
        %v2811 = vpop.f32.mrf.mxu0
        %v2812 = vadd.f32 0.0, %v2811
        %v2813 = vpop.f32.mrf.mxu0
        %v2814 = vadd.f32 0.0, %v2813
        %2815 = vmatmul.bf16.gmra.mxu0 %v2719
        %v2816 = vpop.f32.mrf.mxu0
        %v2817 = vadd.f32 0.0, %v2816
        %v2818 = vpop.f32.mrf.mxu0
        %v2819 = vadd.f32 0.0, %v2818
        %2820 = vmatmul.bf16.gmra.mxu0 %v2720
        %v2821 = vpop.f32.mrf.mxu0
        %v2822 = vadd.f32 0.0, %v2821
        %v2823 = vpop.f32.mrf.mxu0
        %v2824 = vadd.f32 0.0, %v2823
        %2825 = vmatmul.bf16.gmra.mxu0 %v2721
        %v2826 = vpop.f32.mrf.mxu0
        %v2827 = vadd.f32 0.0, %v2826
        %v2828 = vpop.f32.mrf.mxu0
        %v2829 = vadd.f32 0.0, %v2828
        %2830 = vmatmul.bf16.gmra.mxu0 %v2722
        %v2831 = vpop.f32.mrf.mxu0
        %v2832 = vadd.f32 0.0, %v2831
        %v2833 = vpop.f32.mrf.mxu0
        %v2834 = vadd.f32 0.0, %v2833
        %2835 = vmatmul.bf16.gmra.mxu0 %v2723
        %v2836 = vpop.f32.mrf.mxu0
        %v2837 = vadd.f32 0.0, %v2836
        %v2838 = vpop.f32.mrf.mxu0
        %v2839 = vadd.f32 0.0, %v2838
        %2840 = vmatmul.bf16.gmra.mxu0 %v2724
        %v2841 = vpop.f32.mrf.mxu0
        %v2842 = vadd.f32 0.0, %v2841
        %v2843 = vpop.f32.mrf.mxu0
        %v2844 = vadd.f32 0.0, %v2843
        %2845 = vmatmul.bf16.gmra.mxu0 %v2725
        %v2846 = vpop.f32.mrf.mxu0
        %v2847 = vadd.f32 0.0, %v2846
        %v2848 = vpop.f32.mrf.mxu0
        %v2849 = vadd.f32 0.0, %v2848
        %2850 = vmatmul.bf16.gmra.mxu0 %v2726
        %v2851 = vpop.f32.mrf.mxu0
        %v2852 = vadd.f32 0.0, %v2851
        %v2853 = vpop.f32.mrf.mxu0
        %v2854 = vadd.f32 0.0, %v2853
        %2855 = vmatmul.bf16.gmra.mxu0 %v2727
        %v2856 = vpop.f32.mrf.mxu0
        %v2857 = vadd.f32 0.0, %v2856
        %v2858 = vpop.f32.mrf.mxu0
        %v2859 = vadd.f32 0.0, %v2858
        %2860 = vmatmul.bf16.gmra.mxu0 %v2728
        %v2861 = vpop.f32.mrf.mxu0
        %v2862 = vadd.f32 0.0, %v2861
        %v2863 = vpop.f32.mrf.mxu0
        %v2864 = vadd.f32 0.0, %v2863
        %2865 = vmatmul.bf16.gmra.mxu0 %v2729
        %v2866 = vpop.f32.mrf.mxu0
        %v2867 = vadd.f32 0.0, %v2866
        %v2868 = vpop.f32.mrf.mxu0
        %v2869 = vadd.f32 0.0, %v2868
        %2870 = vmatmul.bf16.gmra.mxu0 %v2730
        %v2871 = vpop.f32.mrf.mxu0
        %v2872 = vadd.f32 0.0, %v2871
        %v2873 = vpop.f32.mrf.mxu0
        %v2874 = vadd.f32 0.0, %v2873
        %2875 = vmatmul.bf16.gmra.mxu0 %v2731
        %v2876 = vpop.f32.mrf.mxu0
        %v2877 = vadd.f32 0.0, %v2876
        %v2878 = vpop.f32.mrf.mxu0
        %v2879 = vadd.f32 0.0, %v2878
        %2880 = vmatmul.bf16.gmra.mxu0 %v2732
        %v2881 = vpop.f32.mrf.mxu0
        %v2882 = vadd.f32 0.0, %v2881
        %v2883 = vpop.f32.mrf.mxu0
        %v2884 = vadd.f32 0.0, %v2883
        %2885 = vdwg.mxu0
        %v2886 = vadd.f32 %v2460, %v2807
        %v2887 = vadd.f32 %v2461, %v2809
        %v2888 = vadd.f32 %v2462, %v2812
        %v2889 = vadd.f32 %v2463, %v2814
        %v2890 = vadd.f32 %v2464, %v2817
        %v2891 = vadd.f32 %v2465, %v2819
        %v2892 = vadd.f32 %v2466, %v2822
        %v2893 = vadd.f32 %v2467, %v2824
        %v2894 = vadd.f32 %v2468, %v2827
        %v2895 = vadd.f32 %v2469, %v2829
        %v2896 = vadd.f32 %v2470, %v2832
        %v2897 = vadd.f32 %v2471, %v2834
        %v2898 = vadd.f32 %v2472, %v2837
        %v2899 = vadd.f32 %v2473, %v2839
        %v2900 = vadd.f32 %v2474, %v2842
        %v2901 = vadd.f32 %v2475, %v2844
        %v2902 = vadd.f32 %v2476, %v2847
        %v2903 = vadd.f32 %v2477, %v2849
        %v2904 = vadd.f32 %v2478, %v2852
        %v2905 = vadd.f32 %v2479, %v2854
        %v2906 = vadd.f32 %v2480, %v2857
        %v2907 = vadd.f32 %v2481, %v2859
        %v2908 = vadd.f32 %v2482, %v2862
        %v2909 = vadd.f32 %v2483, %v2864
        %v2910 = vadd.f32 %v2484, %v2867
        %v2911 = vadd.f32 %v2485, %v2869
        %v2912 = vadd.f32 %v2486, %v2872
        %v2913 = vadd.f32 %v2487, %v2874
        %v2914 = vadd.f32 %v2488, %v2877
        %v2915 = vadd.f32 %v2489, %v2879
        %v2916 = vadd.f32 %v2490, %v2882
        %v2917 = vadd.f32 %v2491, %v2884
        %s2918 = scalar_lea.vmem %s179, 24
        %v2919 = vld [vmem:[%s2918] sm:$0xf]
        %v2920 = vld [vmem:[%s2918 + $0x4] sm:$0xf]
        %v2921 = vld [vmem:[%s2918 + $0xc] sm:$0xf]
        %v2922 = vld [vmem:[%s2918 + $0x10] sm:$0xf]
        %v2923 = vld [vmem:[%s2918 + $0x18] sm:$0xf]
        %v2924 = vld [vmem:[%s2918 + $0x1c] sm:$0xf]
        %v2925 = vld [vmem:[%s2918 + $0x24] sm:$0xf]
        %v2926 = vld [vmem:[%s2918 + $0x28] sm:$0xf]
        %v2927 = vld [vmem:[%s2918 + $0x30] sm:$0xf]
        %v2928 = vld [vmem:[%s2918 + $0x34] sm:$0xf]
        %v2929 = vld [vmem:[%s2918 + $0x3c] sm:$0xf]
        %v2930 = vld [vmem:[%s2918 + $0x40] sm:$0xf]
        %v2931 = vld [vmem:[%s2918 + $0x48] sm:$0xf]
        %v2932 = vld [vmem:[%s2918 + $0x4c] sm:$0xf]
        %v2933 = vld [vmem:[%s2918 + $0x54] sm:$0xf]
        %v2934 = vld [vmem:[%s2918 + $0x58] sm:$0xf]
        %v2935 = vld [vmem:[%s2918 + $0x60] sm:$0xf]
        %v2936 = vld [vmem:[%s2918 + $0x64] sm:$0xf]
        %v2937 = vld [vmem:[%s2918 + $0x6c] sm:$0xf]
        %v2938 = vld [vmem:[%s2918 + $0x70] sm:$0xf]
        %v2939 = vld [vmem:[%s2918 + $0x78] sm:$0xf]
        %v2940 = vld [vmem:[%s2918 + $0x7c] sm:$0xf]
        %v2941 = vld [vmem:[%s2918 + $0x84] sm:$0xf]
        %v2942 = vld [vmem:[%s2918 + $0x88] sm:$0xf]
        %v2943 = vld [vmem:[%s2918 + $0x90] sm:$0xf]
        %v2944 = vld [vmem:[%s2918 + $0x94] sm:$0xf]
        %v2945 = vld [vmem:[%s2918 + $0x9c] sm:$0xf]
        %v2946 = vld [vmem:[%s2918 + $0xa0] sm:$0xf]
        %v2947 = vld [vmem:[%s2918 + $0xa8] sm:$0xf]
        %v2948 = vld [vmem:[%s2918 + $0xac] sm:$0xf]
        %v2949 = vld [vmem:[%s2918 + $0xb4] sm:$0xf]
        %v2950 = vld [vmem:[%s2918 + $0xb8] sm:$0xf]
        %s2951 = scalar_lea.vmem %s1, 384
        %v2952 = vld [vmem:[%s2951] sm:$0xf]
        %v2953 = vld [vmem:[%s2951 + $0x4] sm:$0xf]
        %v2954 = vld [vmem:[%s2951 + $0x8] sm:$0xf]
        %v2955 = vld [vmem:[%s2951 + $0xc] sm:$0xf]
        %v2956 = vld [vmem:[%s2951 + $0x10] sm:$0xf]
        %v2957 = vld [vmem:[%s2951 + $0x14] sm:$0xf]
        %v2958 = vld [vmem:[%s2951 + $0x18] sm:$0xf]
        %v2959 = vld [vmem:[%s2951 + $0x1c] sm:$0xf]
        %v2960 = vld [vmem:[%s2951 + $0x20] sm:$0xf]
        %v2961 = vld [vmem:[%s2951 + $0x24] sm:$0xf]
        %v2962 = vld [vmem:[%s2951 + $0x28] sm:$0xf]
        %v2963 = vld [vmem:[%s2951 + $0x2c] sm:$0xf]
        %v2964 = vld [vmem:[%s2951 + $0x30] sm:$0xf]
        %v2965 = vld [vmem:[%s2951 + $0x34] sm:$0xf]
        %v2966 = vld [vmem:[%s2951 + $0x38] sm:$0xf]
        %v2967 = vld [vmem:[%s2951 + $0x3c] sm:$0xf]
        %v3000 = vunpack.c.l.b16 %v2919
        %v3001 = vunpack.c.l.b16 %v2920
        %v3002 = vunpack.c.l.b16 %v2921
        %v3003 = vunpack.c.l.b16 %v2922
        %v3004 = vunpack.c.l.b16 %v2923
        %v3005 = vunpack.c.l.b16 %v2924
        %v3006 = vunpack.c.l.b16 %v2925
        %v3007 = vunpack.c.l.b16 %v2926
        %v3008 = vunpack.c.l.b16 %v2927
        %v3009 = vunpack.c.l.b16 %v2928
        %v3010 = vunpack.c.l.b16 %v2929
        %v3011 = vunpack.c.l.b16 %v2930
        %v3012 = vunpack.c.l.b16 %v2931
        %v3013 = vunpack.c.l.b16 %v2932
        %v3014 = vunpack.c.l.b16 %v2933
        %v3015 = vunpack.c.l.b16 %v2934
        %v3016 = vunpack.c.l.b16 %v2935
        %v3017 = vunpack.c.l.b16 %v2936
        %v3018 = vunpack.c.l.b16 %v2937
        %v3019 = vunpack.c.l.b16 %v2938
        %v3020 = vunpack.c.l.b16 %v2939
        %v3021 = vunpack.c.l.b16 %v2940
        %v3022 = vunpack.c.l.b16 %v2941
        %v3023 = vunpack.c.l.b16 %v2942
        %v3024 = vunpack.c.l.b16 %v2943
        %v3025 = vunpack.c.l.b16 %v2944
        %v3026 = vunpack.c.l.b16 %v2945
        %v3027 = vunpack.c.l.b16 %v2946
        %v3028 = vunpack.c.l.b16 %v2947
        %v3029 = vunpack.c.l.b16 %v2948
        %v3030 = vunpack.c.l.b16 %v2949
        %v3031 = vunpack.c.l.b16 %v2950
        %v3032 = vpack.c.b16 %v3001, %v3000
        %v3033 = vpack.c.b16 %v3003, %v3002
        %v3034 = vpack.c.b16 %v3005, %v3004
        %v3035 = vpack.c.b16 %v3007, %v3006
        %v3036 = vpack.c.b16 %v3009, %v3008
        %v3037 = vpack.c.b16 %v3011, %v3010
        %v3038 = vpack.c.b16 %v3013, %v3012
        %v3039 = vpack.c.b16 %v3015, %v3014
        %v3040 = vpack.c.b16 %v3017, %v3016
        %v3041 = vpack.c.b16 %v3019, %v3018
        %v3042 = vpack.c.b16 %v3021, %v3020
        %v3043 = vpack.c.b16 %v3023, %v3022
        %v3044 = vpack.c.b16 %v3025, %v3024
        %v3045 = vpack.c.b16 %v3027, %v3026
        %v3046 = vpack.c.b16 %v3029, %v3028
        %v3047 = vpack.c.b16 %v3031, %v3030
        %v3080 = vunpack.c.l.b16 %v2952
        %v3081 = vunpack.c.l.b16 %v2953
        %v3082 = vunpack.c.l.b16 %v2954
        %v3083 = vunpack.c.l.b16 %v2955
        %v3084 = vunpack.c.l.b16 %v2956
        %v3085 = vunpack.c.l.b16 %v2957
        %v3086 = vunpack.c.l.b16 %v2958
        %v3087 = vunpack.c.l.b16 %v2959
        %v3088 = vunpack.c.l.b16 %v2960
        %v3089 = vunpack.c.l.b16 %v2961
        %v3090 = vunpack.c.l.b16 %v2962
        %v3091 = vunpack.c.l.b16 %v2963
        %v3092 = vunpack.c.l.b16 %v2964
        %v3093 = vunpack.c.l.b16 %v2965
        %v3094 = vunpack.c.l.b16 %v2966
        %v3095 = vunpack.c.l.b16 %v2967
        %v3096 = vpack.c.b16 %v3081, %v3080
        %v3097 = vpack.c.b16 %v3083, %v3082
        %v3098 = vpack.c.b16 %v3085, %v3084
        %v3099 = vpack.c.b16 %v3087, %v3086
        %v3100 = vpack.c.b16 %v3089, %v3088
        %v3101 = vpack.c.b16 %v3091, %v3090
        %v3102 = vpack.c.b16 %v3093, %v3092
        %v3103 = vpack.c.b16 %v3095, %v3094
        %3112 = vmatpush.bf16.msra.mxu0 %v3103
        %3113 = vmatpush.bf16.msra.mxu0 %v3102
        %3114 = vmatpush.bf16.msra.mxu0 %v3101
        %3115 = vmatpush.bf16.msra.mxu0 %v3100
        %3116 = vmatpush.bf16.msra.mxu0 %v3099
        %3117 = vmatpush.bf16.msra.mxu0 %v3098
        %3118 = vmatpush.bf16.msra.mxu0 %v3097
        %3119 = vmatpush.bf16.msra.mxu0 %v3096
        %3120 = vmatmul.bf16.gmra.mxu0 %v3032
        %v3121 = vpop.f32.mrf.mxu0
        %v3122 = vadd.f32 0.0, %v3121
        %v3123 = vpop.f32.mrf.mxu0
        %v3124 = vadd.f32 0.0, %v3123
        %3125 = vmatmul.bf16.gmra.mxu0 %v3033
        %v3126 = vpop.f32.mrf.mxu0
        %v3127 = vadd.f32 0.0, %v3126
        %v3128 = vpop.f32.mrf.mxu0
        %v3129 = vadd.f32 0.0, %v3128
        %3130 = vmatmul.bf16.gmra.mxu0 %v3034
        %v3131 = vpop.f32.mrf.mxu0
        %v3132 = vadd.f32 0.0, %v3131
        %v3133 = vpop.f32.mrf.mxu0
        %v3134 = vadd.f32 0.0, %v3133
        %3135 = vmatmul.bf16.gmra.mxu0 %v3035
        %v3136 = vpop.f32.mrf.mxu0
        %v3137 = vadd.f32 0.0, %v3136
        %v3138 = vpop.f32.mrf.mxu0
        %v3139 = vadd.f32 0.0, %v3138
        %3140 = vmatmul.bf16.gmra.mxu0 %v3036
        %v3141 = vpop.f32.mrf.mxu0
        %v3142 = vadd.f32 0.0, %v3141
        %v3143 = vpop.f32.mrf.mxu0
        %v3144 = vadd.f32 0.0, %v3143
        %3145 = vmatmul.bf16.gmra.mxu0 %v3037
        %v3146 = vpop.f32.mrf.mxu0
        %v3147 = vadd.f32 0.0, %v3146
        %v3148 = vpop.f32.mrf.mxu0
        %v3149 = vadd.f32 0.0, %v3148
        %3150 = vmatmul.bf16.gmra.mxu0 %v3038
        %v3151 = vpop.f32.mrf.mxu0
        %v3152 = vadd.f32 0.0, %v3151
        %v3153 = vpop.f32.mrf.mxu0
        %v3154 = vadd.f32 0.0, %v3153
        %3155 = vmatmul.bf16.gmra.mxu0 %v3039
        %v3156 = vpop.f32.mrf.mxu0
        %v3157 = vadd.f32 0.0, %v3156
        %v3158 = vpop.f32.mrf.mxu0
        %v3159 = vadd.f32 0.0, %v3158
        %3160 = vmatmul.bf16.gmra.mxu0 %v3040
        %v3161 = vpop.f32.mrf.mxu0
        %v3162 = vadd.f32 0.0, %v3161
        %v3163 = vpop.f32.mrf.mxu0
        %v3164 = vadd.f32 0.0, %v3163
        %3165 = vmatmul.bf16.gmra.mxu0 %v3041
        %v3166 = vpop.f32.mrf.mxu0
        %v3167 = vadd.f32 0.0, %v3166
        %v3168 = vpop.f32.mrf.mxu0
        %v3169 = vadd.f32 0.0, %v3168
        %3170 = vmatmul.bf16.gmra.mxu0 %v3042
        %v3171 = vpop.f32.mrf.mxu0
        %v3172 = vadd.f32 0.0, %v3171
        %v3173 = vpop.f32.mrf.mxu0
        %v3174 = vadd.f32 0.0, %v3173
        %3175 = vmatmul.bf16.gmra.mxu0 %v3043
        %v3176 = vpop.f32.mrf.mxu0
        %v3177 = vadd.f32 0.0, %v3176
        %v3178 = vpop.f32.mrf.mxu0
        %v3179 = vadd.f32 0.0, %v3178
        %3180 = vmatmul.bf16.gmra.mxu0 %v3044
        %v3181 = vpop.f32.mrf.mxu0
        %v3182 = vadd.f32 0.0, %v3181
        %v3183 = vpop.f32.mrf.mxu0
        %v3184 = vadd.f32 0.0, %v3183
        %3185 = vmatmul.bf16.gmra.mxu0 %v3045
        %v3186 = vpop.f32.mrf.mxu0
        %v3187 = vadd.f32 0.0, %v3186
        %v3188 = vpop.f32.mrf.mxu0
        %v3189 = vadd.f32 0.0, %v3188
        %3190 = vmatmul.bf16.gmra.mxu0 %v3046
        %v3191 = vpop.f32.mrf.mxu0
        %v3192 = vadd.f32 0.0, %v3191
        %v3193 = vpop.f32.mrf.mxu0
        %v3194 = vadd.f32 0.0, %v3193
        %3195 = vmatmul.bf16.gmra.mxu0 %v3047
        %v3196 = vpop.f32.mrf.mxu0
        %v3197 = vadd.f32 0.0, %v3196
        %v3198 = vpop.f32.mrf.mxu0
        %v3199 = vadd.f32 0.0, %v3198
        %3200 = vdwg.mxu0
        %v3201 = vadd.f32 %v2886, %v3122
        %v3202 = vadd.f32 %v2887, %v3124
        %v3203 = vadd.f32 %v2888, %v3127
        %v3204 = vadd.f32 %v2889, %v3129
        %v3205 = vadd.f32 %v2890, %v3132
        %v3206 = vadd.f32 %v2891, %v3134
        %v3207 = vadd.f32 %v2892, %v3137
        %v3208 = vadd.f32 %v2893, %v3139
        %v3209 = vadd.f32 %v2894, %v3142
        %v3210 = vadd.f32 %v2895, %v3144
        %v3211 = vadd.f32 %v2896, %v3147
        %v3212 = vadd.f32 %v2897, %v3149
        %v3213 = vadd.f32 %v2898, %v3152
        %v3214 = vadd.f32 %v2899, %v3154
        %v3215 = vadd.f32 %v2900, %v3157
        %v3216 = vadd.f32 %v2901, %v3159
        %v3217 = vadd.f32 %v2902, %v3162
        %v3218 = vadd.f32 %v2903, %v3164
        %v3219 = vadd.f32 %v2904, %v3167
        %v3220 = vadd.f32 %v2905, %v3169
        %v3221 = vadd.f32 %v2906, %v3172
        %v3222 = vadd.f32 %v2907, %v3174
        %v3223 = vadd.f32 %v2908, %v3177
        %v3224 = vadd.f32 %v2909, %v3179
        %v3225 = vadd.f32 %v2910, %v3182
        %v3226 = vadd.f32 %v2911, %v3184
        %v3227 = vadd.f32 %v2912, %v3187
        %v3228 = vadd.f32 %v2913, %v3189
        %v3229 = vadd.f32 %v2914, %v3192
        %v3230 = vadd.f32 %v2915, %v3194
        %v3231 = vadd.f32 %v2916, %v3197
        %v3232 = vadd.f32 %v2917, %v3199
        %v3233 = vld [vmem:[%s2918] sm:$0xf]
        %v3234 = vld [vmem:[%s2918 + $0x4] sm:$0xf]
        %v3235 = vld [vmem:[%s2918 + $0x8] sm:$0x1]
        %v3236 = vld [vmem:[%s2918 + $0xc] sm:$0xf]
        %v3237 = vld [vmem:[%s2918 + $0x10] sm:$0xf]
        %v3238 = vld [vmem:[%s2918 + $0x14] sm:$0x1]
        %v3239 = vld [vmem:[%s2918 + $0x18] sm:$0xf]
        %v3240 = vld [vmem:[%s2918 + $0x1c] sm:$0xf]
        %v3241 = vld [vmem:[%s2918 + $0x20] sm:$0x1]
        %v3242 = vld [vmem:[%s2918 + $0x24] sm:$0xf]
        %v3243 = vld [vmem:[%s2918 + $0x28] sm:$0xf]
        %v3244 = vld [vmem:[%s2918 + $0x2c] sm:$0x1]
        %v3245 = vld [vmem:[%s2918 + $0x30] sm:$0xf]
        %v3246 = vld [vmem:[%s2918 + $0x34] sm:$0xf]
        %v3247 = vld [vmem:[%s2918 + $0x38] sm:$0x1]
        %v3248 = vld [vmem:[%s2918 + $0x3c] sm:$0xf]
        %v3249 = vld [vmem:[%s2918 + $0x40] sm:$0xf]
        %v3250 = vld [vmem:[%s2918 + $0x44] sm:$0x1]
        %v3251 = vld [vmem:[%s2918 + $0x48] sm:$0xf]
        %v3252 = vld [vmem:[%s2918 + $0x4c] sm:$0xf]
        %v3253 = vld [vmem:[%s2918 + $0x50] sm:$0x1]
        %v3254 = vld [vmem:[%s2918 + $0x54] sm:$0xf]
        %v3255 = vld [vmem:[%s2918 + $0x58] sm:$0xf]
        %v3256 = vld [vmem:[%s2918 + $0x5c] sm:$0x1]
        %v3257 = vld [vmem:[%s2918 + $0x60] sm:$0xf]
        %v3258 = vld [vmem:[%s2918 + $0x64] sm:$0xf]
        %v3259 = vld [vmem:[%s2918 + $0x68] sm:$0x1]
        %v3260 = vld [vmem:[%s2918 + $0x6c] sm:$0xf]
        %v3261 = vld [vmem:[%s2918 + $0x70] sm:$0xf]
        %v3262 = vld [vmem:[%s2918 + $0x74] sm:$0x1]
        %v3263 = vld [vmem:[%s2918 + $0x78] sm:$0xf]
        %v3264 = vld [vmem:[%s2918 + $0x7c] sm:$0xf]
        %v3265 = vld [vmem:[%s2918 + $0x80] sm:$0x1]
        %v3266 = vld [vmem:[%s2918 + $0x84] sm:$0xf]
        %v3267 = vld [vmem:[%s2918 + $0x88] sm:$0xf]
        %v3268 = vld [vmem:[%s2918 + $0x8c] sm:$0x1]
        %v3269 = vld [vmem:[%s2918 + $0x90] sm:$0xf]
        %v3270 = vld [vmem:[%s2918 + $0x94] sm:$0xf]
        %v3271 = vld [vmem:[%s2918 + $0x98] sm:$0x1]
        %v3272 = vld [vmem:[%s2918 + $0x9c] sm:$0xf]
        %v3273 = vld [vmem:[%s2918 + $0xa0] sm:$0xf]
        %v3274 = vld [vmem:[%s2918 + $0xa4] sm:$0x1]
        %v3275 = vld [vmem:[%s2918 + $0xa8] sm:$0xf]
        %v3276 = vld [vmem:[%s2918 + $0xac] sm:$0xf]
        %v3277 = vld [vmem:[%s2918 + $0xb0] sm:$0x1]
        %v3278 = vld [vmem:[%s2918 + $0xb4] sm:$0xf]
        %v3279 = vld [vmem:[%s2918 + $0xb8] sm:$0xf]
        %v3280 = vld [vmem:[%s2918 + $0xbc] sm:$0x1]
        %v3282 = vshrl.u32 %v3233, 16
        %v3284 = vrot.slane %v3282, 4
        %v3285 = vshll.u32 %v3233, 16
        %v3287 = vrot.slane %v3285, 5
        %v3288 = vor.u32 %v3284, %v3287
        %v3289 = vrot.slane %v3288, 4
        %v3291 = vshll.u32 %v3234, 16
        %v3293 = vrot.slane %v3291, 5
        %v3294 = vsel %vm246, %v3289, %v3293
        %v3295 = vshrl.u32 %v3234, 16
        %v3297 = vrot.slane %v3295, 4
        %v3298 = vor.u32 %v3297, %v3293
        %v3299 = vrot.slane %v3298, 4
        %v3301 = vshll.u32 %v3235, 16
        %v3303 = vrot.slane %v3301, 5
        %v3304 = vsel %vm246, %v3299, %v3303
        %v3306 = vshrl.u32 %v3236, 16
        %v3308 = vrot.slane %v3306, 4
        %v3309 = vshll.u32 %v3236, 16
        %v3311 = vrot.slane %v3309, 5
        %v3312 = vor.u32 %v3308, %v3311
        %v3313 = vrot.slane %v3312, 4
        %v3315 = vshll.u32 %v3237, 16
        %v3317 = vrot.slane %v3315, 5
        %v3318 = vsel %vm246, %v3313, %v3317
        %v3319 = vshrl.u32 %v3237, 16
        %v3321 = vrot.slane %v3319, 4
        %v3322 = vor.u32 %v3321, %v3317
        %v3323 = vrot.slane %v3322, 4
        %v3325 = vshll.u32 %v3238, 16
        %v3327 = vrot.slane %v3325, 5
        %v3328 = vsel %vm246, %v3323, %v3327
        %v3330 = vshrl.u32 %v3239, 16
        %v3332 = vrot.slane %v3330, 4
        %v3333 = vshll.u32 %v3239, 16
        %v3335 = vrot.slane %v3333, 5
        %v3336 = vor.u32 %v3332, %v3335
        %v3337 = vrot.slane %v3336, 4
        %v3339 = vshll.u32 %v3240, 16
        %v3341 = vrot.slane %v3339, 5
        %v3342 = vsel %vm246, %v3337, %v3341
        %v3343 = vshrl.u32 %v3240, 16
        %v3345 = vrot.slane %v3343, 4
        %v3346 = vor.u32 %v3345, %v3341
        %v3347 = vrot.slane %v3346, 4
        %v3349 = vshll.u32 %v3241, 16
        %v3351 = vrot.slane %v3349, 5
        %v3352 = vsel %vm246, %v3347, %v3351
        %v3354 = vshrl.u32 %v3242, 16
        %v3356 = vrot.slane %v3354, 4
        %v3357 = vshll.u32 %v3242, 16
        %v3359 = vrot.slane %v3357, 5
        %v3360 = vor.u32 %v3356, %v3359
        %v3361 = vrot.slane %v3360, 4
        %v3363 = vshll.u32 %v3243, 16
        %v3365 = vrot.slane %v3363, 5
        %v3366 = vsel %vm246, %v3361, %v3365
        %v3367 = vshrl.u32 %v3243, 16
        %v3369 = vrot.slane %v3367, 4
        %v3370 = vor.u32 %v3369, %v3365
        %v3371 = vrot.slane %v3370, 4
        %v3373 = vshll.u32 %v3244, 16
        %v3375 = vrot.slane %v3373, 5
        %v3376 = vsel %vm246, %v3371, %v3375
        %v3378 = vshrl.u32 %v3245, 16
        %v3380 = vrot.slane %v3378, 4
        %v3381 = vshll.u32 %v3245, 16
        %v3383 = vrot.slane %v3381, 5
        %v3384 = vor.u32 %v3380, %v3383
        %v3385 = vrot.slane %v3384, 4
        %v3387 = vshll.u32 %v3246, 16
        %v3389 = vrot.slane %v3387, 5
        %v3390 = vsel %vm246, %v3385, %v3389
        %v3391 = vshrl.u32 %v3246, 16
        %v3393 = vrot.slane %v3391, 4
        %v3394 = vor.u32 %v3393, %v3389
        %v3395 = vrot.slane %v3394, 4
        %v3397 = vshll.u32 %v3247, 16
        %v3399 = vrot.slane %v3397, 5
        %v3400 = vsel %vm246, %v3395, %v3399
        %v3402 = vshrl.u32 %v3248, 16
        %v3404 = vrot.slane %v3402, 4
        %v3405 = vshll.u32 %v3248, 16
        %v3407 = vrot.slane %v3405, 5
        %v3408 = vor.u32 %v3404, %v3407
        %v3409 = vrot.slane %v3408, 4
        %v3411 = vshll.u32 %v3249, 16
        %v3413 = vrot.slane %v3411, 5
        %v3414 = vsel %vm246, %v3409, %v3413
        %v3415 = vshrl.u32 %v3249, 16
        %v3417 = vrot.slane %v3415, 4
        %v3418 = vor.u32 %v3417, %v3413
        %v3419 = vrot.slane %v3418, 4
        %v3421 = vshll.u32 %v3250, 16
        %v3423 = vrot.slane %v3421, 5
        %v3424 = vsel %vm246, %v3419, %v3423
        %v3426 = vshrl.u32 %v3251, 16
        %v3428 = vrot.slane %v3426, 4
        %v3429 = vshll.u32 %v3251, 16
        %v3431 = vrot.slane %v3429, 5
        %v3432 = vor.u32 %v3428, %v3431
        %v3433 = vrot.slane %v3432, 4
        %v3435 = vshll.u32 %v3252, 16
        %v3437 = vrot.slane %v3435, 5
        %v3438 = vsel %vm246, %v3433, %v3437
        %v3439 = vshrl.u32 %v3252, 16
        %v3441 = vrot.slane %v3439, 4
        %v3442 = vor.u32 %v3441, %v3437
        %v3443 = vrot.slane %v3442, 4
        %v3445 = vshll.u32 %v3253, 16
        %v3447 = vrot.slane %v3445, 5
        %v3448 = vsel %vm246, %v3443, %v3447
        %v3450 = vshrl.u32 %v3254, 16
        %v3452 = vrot.slane %v3450, 4
        %v3453 = vshll.u32 %v3254, 16
        %v3455 = vrot.slane %v3453, 5
        %v3456 = vor.u32 %v3452, %v3455
        %v3457 = vrot.slane %v3456, 4
        %v3459 = vshll.u32 %v3255, 16
        %v3461 = vrot.slane %v3459, 5
        %v3462 = vsel %vm246, %v3457, %v3461
        %v3463 = vshrl.u32 %v3255, 16
        %v3465 = vrot.slane %v3463, 4
        %v3466 = vor.u32 %v3465, %v3461
        %v3467 = vrot.slane %v3466, 4
        %v3469 = vshll.u32 %v3256, 16
        %v3471 = vrot.slane %v3469, 5
        %v3472 = vsel %vm246, %v3467, %v3471
        %v3474 = vshrl.u32 %v3257, 16
        %v3476 = vrot.slane %v3474, 4
        %v3477 = vshll.u32 %v3257, 16
        %v3479 = vrot.slane %v3477, 5
        %v3480 = vor.u32 %v3476, %v3479
        %v3481 = vrot.slane %v3480, 4
        %v3483 = vshll.u32 %v3258, 16
        %v3485 = vrot.slane %v3483, 5
        %v3486 = vsel %vm246, %v3481, %v3485
        %v3487 = vshrl.u32 %v3258, 16
        %v3489 = vrot.slane %v3487, 4
        %v3490 = vor.u32 %v3489, %v3485
        %v3491 = vrot.slane %v3490, 4
        %v3493 = vshll.u32 %v3259, 16
        %v3495 = vrot.slane %v3493, 5
        %v3496 = vsel %vm246, %v3491, %v3495
        %v3498 = vshrl.u32 %v3260, 16
        %v3500 = vrot.slane %v3498, 4
        %v3501 = vshll.u32 %v3260, 16
        %v3503 = vrot.slane %v3501, 5
        %v3504 = vor.u32 %v3500, %v3503
        %v3505 = vrot.slane %v3504, 4
        %v3507 = vshll.u32 %v3261, 16
        %v3509 = vrot.slane %v3507, 5
        %v3510 = vsel %vm246, %v3505, %v3509
        %v3511 = vshrl.u32 %v3261, 16
        %v3513 = vrot.slane %v3511, 4
        %v3514 = vor.u32 %v3513, %v3509
        %v3515 = vrot.slane %v3514, 4
        %v3517 = vshll.u32 %v3262, 16
        %v3519 = vrot.slane %v3517, 5
        %v3520 = vsel %vm246, %v3515, %v3519
        %v3522 = vshrl.u32 %v3263, 16
        %v3524 = vrot.slane %v3522, 4
        %v3525 = vshll.u32 %v3263, 16
        %v3527 = vrot.slane %v3525, 5
        %v3528 = vor.u32 %v3524, %v3527
        %v3529 = vrot.slane %v3528, 4
        %v3531 = vshll.u32 %v3264, 16
        %v3533 = vrot.slane %v3531, 5
        %v3534 = vsel %vm246, %v3529, %v3533
        %v3535 = vshrl.u32 %v3264, 16
        %v3537 = vrot.slane %v3535, 4
        %v3538 = vor.u32 %v3537, %v3533
        %v3539 = vrot.slane %v3538, 4
        %v3541 = vshll.u32 %v3265, 16
        %v3543 = vrot.slane %v3541, 5
        %v3544 = vsel %vm246, %v3539, %v3543
        %v3546 = vshrl.u32 %v3266, 16
        %v3548 = vrot.slane %v3546, 4
        %v3549 = vshll.u32 %v3266, 16
        %v3551 = vrot.slane %v3549, 5
        %v3552 = vor.u32 %v3548, %v3551
        %v3553 = vrot.slane %v3552, 4
        %v3555 = vshll.u32 %v3267, 16
        %v3557 = vrot.slane %v3555, 5
        %v3558 = vsel %vm246, %v3553, %v3557
        %v3559 = vshrl.u32 %v3267, 16
        %v3561 = vrot.slane %v3559, 4
        %v3562 = vor.u32 %v3561, %v3557
        %v3563 = vrot.slane %v3562, 4
        %v3565 = vshll.u32 %v3268, 16
        %v3567 = vrot.slane %v3565, 5
        %v3568 = vsel %vm246, %v3563, %v3567
        %v3570 = vshrl.u32 %v3269, 16
        %v3572 = vrot.slane %v3570, 4
        %v3573 = vshll.u32 %v3269, 16
        %v3575 = vrot.slane %v3573, 5
        %v3576 = vor.u32 %v3572, %v3575
        %v3577 = vrot.slane %v3576, 4
        %v3579 = vshll.u32 %v3270, 16
        %v3581 = vrot.slane %v3579, 5
        %v3582 = vsel %vm246, %v3577, %v3581
        %v3583 = vshrl.u32 %v3270, 16
        %v3585 = vrot.slane %v3583, 4
        %v3586 = vor.u32 %v3585, %v3581
        %v3587 = vrot.slane %v3586, 4
        %v3589 = vshll.u32 %v3271, 16
        %v3591 = vrot.slane %v3589, 5
        %v3592 = vsel %vm246, %v3587, %v3591
        %v3594 = vshrl.u32 %v3272, 16
        %v3596 = vrot.slane %v3594, 4
        %v3597 = vshll.u32 %v3272, 16
        %v3599 = vrot.slane %v3597, 5
        %v3600 = vor.u32 %v3596, %v3599
        %v3601 = vrot.slane %v3600, 4
        %v3603 = vshll.u32 %v3273, 16
        %v3605 = vrot.slane %v3603, 5
        %v3606 = vsel %vm246, %v3601, %v3605
        %v3607 = vshrl.u32 %v3273, 16
        %v3609 = vrot.slane %v3607, 4
        %v3610 = vor.u32 %v3609, %v3605
        %v3611 = vrot.slane %v3610, 4
        %v3613 = vshll.u32 %v3274, 16
        %v3615 = vrot.slane %v3613, 5
        %v3616 = vsel %vm246, %v3611, %v3615
        %v3618 = vshrl.u32 %v3275, 16
        %v3620 = vrot.slane %v3618, 4
        %v3621 = vshll.u32 %v3275, 16
        %v3623 = vrot.slane %v3621, 5
        %v3624 = vor.u32 %v3620, %v3623
        %v3625 = vrot.slane %v3624, 4
        %v3627 = vshll.u32 %v3276, 16
        %v3629 = vrot.slane %v3627, 5
        %v3630 = vsel %vm246, %v3625, %v3629
        %v3631 = vshrl.u32 %v3276, 16
        %v3633 = vrot.slane %v3631, 4
        %v3634 = vor.u32 %v3633, %v3629
        %v3635 = vrot.slane %v3634, 4
        %v3637 = vshll.u32 %v3277, 16
        %v3639 = vrot.slane %v3637, 5
        %v3640 = vsel %vm246, %v3635, %v3639
        %v3642 = vshrl.u32 %v3278, 16
        %v3644 = vrot.slane %v3642, 4
        %v3645 = vshll.u32 %v3278, 16
        %v3647 = vrot.slane %v3645, 5
        %v3648 = vor.u32 %v3644, %v3647
        %v3649 = vrot.slane %v3648, 4
        %v3651 = vshll.u32 %v3279, 16
        %v3653 = vrot.slane %v3651, 5
        %v3654 = vsel %vm246, %v3649, %v3653
        %v3655 = vshrl.u32 %v3279, 16
        %v3657 = vrot.slane %v3655, 4
        %v3658 = vor.u32 %v3657, %v3653
        %v3659 = vrot.slane %v3658, 4
        %v3661 = vshll.u32 %v3280, 16
        %v3663 = vrot.slane %v3661, 5
        %v3664 = vsel %vm246, %v3659, %v3663
        %s3665 = scalar_lea.vmem %s1, 448
        %v3666 = vld [vmem:[%s3665] sm:$0xf]
        %v3667 = vld [vmem:[%s3665 + $0x4] sm:$0xf]
        %v3668 = vld [vmem:[%s3665 + $0x8] sm:$0xf]
        %v3669 = vld [vmem:[%s3665 + $0xc] sm:$0xf]
        %v3670 = vld [vmem:[%s3665 + $0x10] sm:$0xf]
        %v3671 = vld [vmem:[%s3665 + $0x14] sm:$0xf]
        %v3672 = vld [vmem:[%s3665 + $0x18] sm:$0xf]
        %v3673 = vld [vmem:[%s3665 + $0x1c] sm:$0xf]
        %v3674 = vld [vmem:[%s3665 + $0x20] sm:$0xf]
        %v3675 = vld [vmem:[%s3665 + $0x24] sm:$0xf]
        %v3676 = vld [vmem:[%s3665 + $0x28] sm:$0xf]
        %v3677 = vld [vmem:[%s3665 + $0x2c] sm:$0xf]
        %v3678 = vld [vmem:[%s3665 + $0x30] sm:$0xf]
        %v3679 = vld [vmem:[%s3665 + $0x34] sm:$0xf]
        %v3680 = vld [vmem:[%s3665 + $0x38] sm:$0xf]
        %v3681 = vld [vmem:[%s3665 + $0x3c] sm:$0xf]
        %v3682 = vunpack.c.l.b16 %v3294
        %v3683 = vunpack.c.l.b16 %v3304
        %v3684 = vunpack.c.l.b16 %v3318
        %v3685 = vunpack.c.l.b16 %v3328
        %v3686 = vunpack.c.l.b16 %v3342
        %v3687 = vunpack.c.l.b16 %v3352
        %v3688 = vunpack.c.l.b16 %v3366
        %v3689 = vunpack.c.l.b16 %v3376
        %v3690 = vunpack.c.l.b16 %v3390
        %v3691 = vunpack.c.l.b16 %v3400
        %v3692 = vunpack.c.l.b16 %v3414
        %v3693 = vunpack.c.l.b16 %v3424
        %v3694 = vunpack.c.l.b16 %v3438
        %v3695 = vunpack.c.l.b16 %v3448
        %v3696 = vunpack.c.l.b16 %v3462
        %v3697 = vunpack.c.l.b16 %v3472
        %v3698 = vunpack.c.l.b16 %v3486
        %v3699 = vunpack.c.l.b16 %v3496
        %v3700 = vunpack.c.l.b16 %v3510
        %v3701 = vunpack.c.l.b16 %v3520
        %v3702 = vunpack.c.l.b16 %v3534
        %v3703 = vunpack.c.l.b16 %v3544
        %v3704 = vunpack.c.l.b16 %v3558
        %v3705 = vunpack.c.l.b16 %v3568
        %v3706 = vunpack.c.l.b16 %v3582
        %v3707 = vunpack.c.l.b16 %v3592
        %v3708 = vunpack.c.l.b16 %v3606
        %v3709 = vunpack.c.l.b16 %v3616
        %v3710 = vunpack.c.l.b16 %v3630
        %v3711 = vunpack.c.l.b16 %v3640
        %v3712 = vunpack.c.l.b16 %v3654
        %v3713 = vunpack.c.l.b16 %v3664
        %v3714 = vpack.c.b16 %v3683, %v3682
        %v3715 = vpack.c.b16 %v3685, %v3684
        %v3716 = vpack.c.b16 %v3687, %v3686
        %v3717 = vpack.c.b16 %v3689, %v3688
        %v3718 = vpack.c.b16 %v3691, %v3690
        %v3719 = vpack.c.b16 %v3693, %v3692
        %v3720 = vpack.c.b16 %v3695, %v3694
        %v3721 = vpack.c.b16 %v3697, %v3696
        %v3722 = vpack.c.b16 %v3699, %v3698
        %v3723 = vpack.c.b16 %v3701, %v3700
        %v3724 = vpack.c.b16 %v3703, %v3702
        %v3725 = vpack.c.b16 %v3705, %v3704
        %v3726 = vpack.c.b16 %v3707, %v3706
        %v3727 = vpack.c.b16 %v3709, %v3708
        %v3728 = vpack.c.b16 %v3711, %v3710
        %v3729 = vpack.c.b16 %v3713, %v3712
        %v3762 = vunpack.c.l.b16 %v3666
        %v3763 = vunpack.c.l.b16 %v3667
        %v3764 = vunpack.c.l.b16 %v3668
        %v3765 = vunpack.c.l.b16 %v3669
        %v3766 = vunpack.c.l.b16 %v3670
        %v3767 = vunpack.c.l.b16 %v3671
        %v3768 = vunpack.c.l.b16 %v3672
        %v3769 = vunpack.c.l.b16 %v3673
        %v3770 = vunpack.c.l.b16 %v3674
        %v3771 = vunpack.c.l.b16 %v3675
        %v3772 = vunpack.c.l.b16 %v3676
        %v3773 = vunpack.c.l.b16 %v3677
        %v3774 = vunpack.c.l.b16 %v3678
        %v3775 = vunpack.c.l.b16 %v3679
        %v3776 = vunpack.c.l.b16 %v3680
        %v3777 = vunpack.c.l.b16 %v3681
        %v3778 = vpack.c.b16 %v3763, %v3762
        %v3779 = vpack.c.b16 %v3765, %v3764
        %v3780 = vpack.c.b16 %v3767, %v3766
        %v3781 = vpack.c.b16 %v3769, %v3768
        %v3782 = vpack.c.b16 %v3771, %v3770
        %v3783 = vpack.c.b16 %v3773, %v3772
        %v3784 = vpack.c.b16 %v3775, %v3774
        %v3785 = vpack.c.b16 %v3777, %v3776
        %3794 = vmatpush.bf16.msra.mxu0 %v3785
        %3795 = vmatpush.bf16.msra.mxu0 %v3784
        %3796 = vmatpush.bf16.msra.mxu0 %v3783
        %3797 = vmatpush.bf16.msra.mxu0 %v3782
        %3798 = vmatpush.bf16.msra.mxu0 %v3781
        %3799 = vmatpush.bf16.msra.mxu0 %v3780
        %3800 = vmatpush.bf16.msra.mxu0 %v3779
        %3801 = vmatpush.bf16.msra.mxu0 %v3778
        %3802 = vmatmul.bf16.gmra.mxu0 %v3714
        %v3803 = vpop.f32.mrf.mxu0
        %v3804 = vadd.f32 0.0, %v3803
        %v3805 = vpop.f32.mrf.mxu0
        %v3806 = vadd.f32 0.0, %v3805
        %3807 = vmatmul.bf16.gmra.mxu0 %v3715
        %v3808 = vpop.f32.mrf.mxu0
        %v3809 = vadd.f32 0.0, %v3808
        %v3810 = vpop.f32.mrf.mxu0
        %v3811 = vadd.f32 0.0, %v3810
        %3812 = vmatmul.bf16.gmra.mxu0 %v3716
        %v3813 = vpop.f32.mrf.mxu0
        %v3814 = vadd.f32 0.0, %v3813
        %v3815 = vpop.f32.mrf.mxu0
        %v3816 = vadd.f32 0.0, %v3815
        %3817 = vmatmul.bf16.gmra.mxu0 %v3717
        %v3818 = vpop.f32.mrf.mxu0
        %v3819 = vadd.f32 0.0, %v3818
        %v3820 = vpop.f32.mrf.mxu0
        %v3821 = vadd.f32 0.0, %v3820
        %3822 = vmatmul.bf16.gmra.mxu0 %v3718
        %v3823 = vpop.f32.mrf.mxu0
        %v3824 = vadd.f32 0.0, %v3823
        %v3825 = vpop.f32.mrf.mxu0
        %v3826 = vadd.f32 0.0, %v3825
        %3827 = vmatmul.bf16.gmra.mxu0 %v3719
        %v3828 = vpop.f32.mrf.mxu0
        %v3829 = vadd.f32 0.0, %v3828
        %v3830 = vpop.f32.mrf.mxu0
        %v3831 = vadd.f32 0.0, %v3830
        %3832 = vmatmul.bf16.gmra.mxu0 %v3720
        %v3833 = vpop.f32.mrf.mxu0
        %v3834 = vadd.f32 0.0, %v3833
        %v3835 = vpop.f32.mrf.mxu0
        %v3836 = vadd.f32 0.0, %v3835
        %3837 = vmatmul.bf16.gmra.mxu0 %v3721
        %v3838 = vpop.f32.mrf.mxu0
        %v3839 = vadd.f32 0.0, %v3838
        %v3840 = vpop.f32.mrf.mxu0
        %v3841 = vadd.f32 0.0, %v3840
        %3842 = vmatmul.bf16.gmra.mxu0 %v3722
        %v3843 = vpop.f32.mrf.mxu0
        %v3844 = vadd.f32 0.0, %v3843
        %v3845 = vpop.f32.mrf.mxu0
        %v3846 = vadd.f32 0.0, %v3845
        %3847 = vmatmul.bf16.gmra.mxu0 %v3723
        %v3848 = vpop.f32.mrf.mxu0
        %v3849 = vadd.f32 0.0, %v3848
        %v3850 = vpop.f32.mrf.mxu0
        %v3851 = vadd.f32 0.0, %v3850
        %3852 = vmatmul.bf16.gmra.mxu0 %v3724
        %v3853 = vpop.f32.mrf.mxu0
        %v3854 = vadd.f32 0.0, %v3853
        %v3855 = vpop.f32.mrf.mxu0
        %v3856 = vadd.f32 0.0, %v3855
        %3857 = vmatmul.bf16.gmra.mxu0 %v3725
        %v3858 = vpop.f32.mrf.mxu0
        %v3859 = vadd.f32 0.0, %v3858
        %v3860 = vpop.f32.mrf.mxu0
        %v3861 = vadd.f32 0.0, %v3860
        %3862 = vmatmul.bf16.gmra.mxu0 %v3726
        %v3863 = vpop.f32.mrf.mxu0
        %v3864 = vadd.f32 0.0, %v3863
        %v3865 = vpop.f32.mrf.mxu0
        %v3866 = vadd.f32 0.0, %v3865
        %3867 = vmatmul.bf16.gmra.mxu0 %v3727
        %v3868 = vpop.f32.mrf.mxu0
        %v3869 = vadd.f32 0.0, %v3868
        %v3870 = vpop.f32.mrf.mxu0
        %v3871 = vadd.f32 0.0, %v3870
        %3872 = vmatmul.bf16.gmra.mxu0 %v3728
        %v3873 = vpop.f32.mrf.mxu0
        %v3874 = vadd.f32 0.0, %v3873
        %v3875 = vpop.f32.mrf.mxu0
        %v3876 = vadd.f32 0.0, %v3875
        %3877 = vmatmul.bf16.gmra.mxu0 %v3729
        %v3878 = vpop.f32.mrf.mxu0
        %v3879 = vadd.f32 0.0, %v3878
        %v3880 = vpop.f32.mrf.mxu0
        %v3881 = vadd.f32 0.0, %v3880
        %3882 = vdwg.mxu0
        %v3883 = vadd.f32 %v3201, %v3804
        %v3884 = vadd.f32 %v3202, %v3806
        %v3885 = vadd.f32 %v3203, %v3809
        %v3886 = vadd.f32 %v3204, %v3811
        %v3887 = vadd.f32 %v3205, %v3814
        %v3888 = vadd.f32 %v3206, %v3816
        %v3889 = vadd.f32 %v3207, %v3819
        %v3890 = vadd.f32 %v3208, %v3821
        %v3891 = vadd.f32 %v3209, %v3824
        %v3892 = vadd.f32 %v3210, %v3826
        %v3893 = vadd.f32 %v3211, %v3829
        %v3894 = vadd.f32 %v3212, %v3831
        %v3895 = vadd.f32 %v3213, %v3834
        %v3896 = vadd.f32 %v3214, %v3836
        %v3897 = vadd.f32 %v3215, %v3839
        %v3898 = vadd.f32 %v3216, %v3841
        %v3899 = vadd.f32 %v3217, %v3844
        %v3900 = vadd.f32 %v3218, %v3846
        %v3901 = vadd.f32 %v3219, %v3849
        %v3902 = vadd.f32 %v3220, %v3851
        %v3903 = vadd.f32 %v3221, %v3854
        %v3904 = vadd.f32 %v3222, %v3856
        %v3905 = vadd.f32 %v3223, %v3859
        %v3906 = vadd.f32 %v3224, %v3861
        %v3907 = vadd.f32 %v3225, %v3864
        %v3908 = vadd.f32 %v3226, %v3866
        %v3909 = vadd.f32 %v3227, %v3869
        %v3910 = vadd.f32 %v3228, %v3871
        %v3911 = vadd.f32 %v3229, %v3874
        %v3912 = vadd.f32 %v3230, %v3876
        %v3913 = vadd.f32 %v3231, %v3879
        %v3914 = vadd.f32 %v3232, %v3881
        %v3915 = vld [vmem:[%s2918] sm:$0xe]
        %v3916 = vld [vmem:[%s2918 + $0xc] sm:$0xe]
        %v3917 = vld [vmem:[%s2918 + $0x18] sm:$0xe]
        %v3918 = vld [vmem:[%s2918 + $0x24] sm:$0xe]
        %v3919 = vld [vmem:[%s2918 + $0x30] sm:$0xe]
        %v3920 = vld [vmem:[%s2918 + $0x3c] sm:$0xe]
        %v3921 = vld [vmem:[%s2918 + $0x48] sm:$0xe]
        %v3922 = vld [vmem:[%s2918 + $0x54] sm:$0xe]
        %v3923 = vld [vmem:[%s2918 + $0x60] sm:$0xe]
        %v3924 = vld [vmem:[%s2918 + $0x6c] sm:$0xe]
        %v3925 = vld [vmem:[%s2918 + $0x78] sm:$0xe]
        %v3926 = vld [vmem:[%s2918 + $0x84] sm:$0xe]
        %v3927 = vld [vmem:[%s2918 + $0x90] sm:$0xe]
        %v3928 = vld [vmem:[%s2918 + $0x9c] sm:$0xe]
        %v3929 = vld [vmem:[%s2918 + $0xa8] sm:$0xe]
        %v3930 = vld [vmem:[%s2918 + $0xb4] sm:$0xe]
        %v3979 = vrot.slane %v3915, 5
        %v3980 = vrot.slane %v3979, 4
        %v3981 = vrot.slane %v3234, 5
        %v3982 = vsel %vm1132, %v3980, %v3981
        %v3983 = vrot.slane %v3981, 4
        %v3984 = vrot.slane %v3235, 5
        %v3985 = vsel %vm1132, %v3983, %v3984
        %v3986 = vrot.slane %v3916, 5
        %v3987 = vrot.slane %v3986, 4
        %v3988 = vrot.slane %v3237, 5
        %v3989 = vsel %vm1132, %v3987, %v3988
        %v3990 = vrot.slane %v3988, 4
        %v3991 = vrot.slane %v3238, 5
        %v3992 = vsel %vm1132, %v3990, %v3991
        %v3993 = vrot.slane %v3917, 5
        %v3994 = vrot.slane %v3993, 4
        %v3995 = vrot.slane %v3240, 5
        %v3996 = vsel %vm1132, %v3994, %v3995
        %v3997 = vrot.slane %v3995, 4
        %v3998 = vrot.slane %v3241, 5
        %v3999 = vsel %vm1132, %v3997, %v3998
        %v4000 = vrot.slane %v3918, 5
        %v4001 = vrot.slane %v4000, 4
        %v4002 = vrot.slane %v3243, 5
        %v4003 = vsel %vm1132, %v4001, %v4002
        %v4004 = vrot.slane %v4002, 4
        %v4005 = vrot.slane %v3244, 5
        %v4006 = vsel %vm1132, %v4004, %v4005
        %v4007 = vrot.slane %v3919, 5
        %v4008 = vrot.slane %v4007, 4
        %v4009 = vrot.slane %v3246, 5
        %v4010 = vsel %vm1132, %v4008, %v4009
        %v4011 = vrot.slane %v4009, 4
        %v4012 = vrot.slane %v3247, 5
        %v4013 = vsel %vm1132, %v4011, %v4012
        %v4014 = vrot.slane %v3920, 5
        %v4015 = vrot.slane %v4014, 4
        %v4016 = vrot.slane %v3249, 5
        %v4017 = vsel %vm1132, %v4015, %v4016
        %v4018 = vrot.slane %v4016, 4
        %v4019 = vrot.slane %v3250, 5
        %v4020 = vsel %vm1132, %v4018, %v4019
        %v4021 = vrot.slane %v3921, 5
        %v4022 = vrot.slane %v4021, 4
        %v4023 = vrot.slane %v3252, 5
        %v4024 = vsel %vm1132, %v4022, %v4023
        %v4025 = vrot.slane %v4023, 4
        %v4026 = vrot.slane %v3253, 5
        %v4027 = vsel %vm1132, %v4025, %v4026
        %v4028 = vrot.slane %v3922, 5
        %v4029 = vrot.slane %v4028, 4
        %v4030 = vrot.slane %v3255, 5
        %v4031 = vsel %vm1132, %v4029, %v4030
        %v4032 = vrot.slane %v4030, 4
        %v4033 = vrot.slane %v3256, 5
        %v4034 = vsel %vm1132, %v4032, %v4033
        %v4035 = vrot.slane %v3923, 5
        %v4036 = vrot.slane %v4035, 4
        %v4037 = vrot.slane %v3258, 5
        %v4038 = vsel %vm1132, %v4036, %v4037
        %v4039 = vrot.slane %v4037, 4
        %v4040 = vrot.slane %v3259, 5
        %v4041 = vsel %vm1132, %v4039, %v4040
        %v4042 = vrot.slane %v3924, 5
        %v4043 = vrot.slane %v4042, 4
        %v4044 = vrot.slane %v3261, 5
        %v4045 = vsel %vm1132, %v4043, %v4044
        %v4046 = vrot.slane %v4044, 4
        %v4047 = vrot.slane %v3262, 5
        %v4048 = vsel %vm1132, %v4046, %v4047
        %v4049 = vrot.slane %v3925, 5
        %v4050 = vrot.slane %v4049, 4
        %v4051 = vrot.slane %v3264, 5
        %v4052 = vsel %vm1132, %v4050, %v4051
        %v4053 = vrot.slane %v4051, 4
        %v4054 = vrot.slane %v3265, 5
        %v4055 = vsel %vm1132, %v4053, %v4054
        %v4056 = vrot.slane %v3926, 5
        %v4057 = vrot.slane %v4056, 4
        %v4058 = vrot.slane %v3267, 5
        %v4059 = vsel %vm1132, %v4057, %v4058
        %v4060 = vrot.slane %v4058, 4
        %v4061 = vrot.slane %v3268, 5
        %v4062 = vsel %vm1132, %v4060, %v4061
        %v4063 = vrot.slane %v3927, 5
        %v4064 = vrot.slane %v4063, 4
        %v4065 = vrot.slane %v3270, 5
        %v4066 = vsel %vm1132, %v4064, %v4065
        %v4067 = vrot.slane %v4065, 4
        %v4068 = vrot.slane %v3271, 5
        %v4069 = vsel %vm1132, %v4067, %v4068
        %v4070 = vrot.slane %v3928, 5
        %v4071 = vrot.slane %v4070, 4
        %v4072 = vrot.slane %v3273, 5
        %v4073 = vsel %vm1132, %v4071, %v4072
        %v4074 = vrot.slane %v4072, 4
        %v4075 = vrot.slane %v3274, 5
        %v4076 = vsel %vm1132, %v4074, %v4075
        %v4077 = vrot.slane %v3929, 5
        %v4078 = vrot.slane %v4077, 4
        %v4079 = vrot.slane %v3276, 5
        %v4080 = vsel %vm1132, %v4078, %v4079
        %v4081 = vrot.slane %v4079, 4
        %v4082 = vrot.slane %v3277, 5
        %v4083 = vsel %vm1132, %v4081, %v4082
        %v4084 = vrot.slane %v3930, 5
        %v4085 = vrot.slane %v4084, 4
        %v4086 = vrot.slane %v3279, 5
        %v4087 = vsel %vm1132, %v4085, %v4086
        %v4088 = vrot.slane %v4086, 4
        %v4089 = vrot.slane %v3280, 5
        %v4090 = vsel %vm1132, %v4088, %v4089
        %s4091 = scalar_lea.vmem %s1, 512
        %v4092 = vld [vmem:[%s4091] sm:$0xf]
        %v4093 = vld [vmem:[%s4091 + $0x4] sm:$0xf]
        %v4094 = vld [vmem:[%s4091 + $0x8] sm:$0xf]
        %v4095 = vld [vmem:[%s4091 + $0xc] sm:$0xf]
        %v4096 = vld [vmem:[%s4091 + $0x10] sm:$0xf]
        %v4097 = vld [vmem:[%s4091 + $0x14] sm:$0xf]
        %v4098 = vld [vmem:[%s4091 + $0x18] sm:$0xf]
        %v4099 = vld [vmem:[%s4091 + $0x1c] sm:$0xf]
        %v4100 = vld [vmem:[%s4091 + $0x20] sm:$0xf]
        %v4101 = vld [vmem:[%s4091 + $0x24] sm:$0xf]
        %v4102 = vld [vmem:[%s4091 + $0x28] sm:$0xf]
        %v4103 = vld [vmem:[%s4091 + $0x2c] sm:$0xf]
        %v4104 = vld [vmem:[%s4091 + $0x30] sm:$0xf]
        %v4105 = vld [vmem:[%s4091 + $0x34] sm:$0xf]
        %v4106 = vld [vmem:[%s4091 + $0x38] sm:$0xf]
        %v4107 = vld [vmem:[%s4091 + $0x3c] sm:$0xf]
        %v4108 = vunpack.c.l.b16 %v3982
        %v4109 = vunpack.c.l.b16 %v3985
        %v4110 = vunpack.c.l.b16 %v3989
        %v4111 = vunpack.c.l.b16 %v3992
        %v4112 = vunpack.c.l.b16 %v3996
        %v4113 = vunpack.c.l.b16 %v3999
        %v4114 = vunpack.c.l.b16 %v4003
        %v4115 = vunpack.c.l.b16 %v4006
        %v4116 = vunpack.c.l.b16 %v4010
        %v4117 = vunpack.c.l.b16 %v4013
        %v4118 = vunpack.c.l.b16 %v4017
        %v4119 = vunpack.c.l.b16 %v4020
        %v4120 = vunpack.c.l.b16 %v4024
        %v4121 = vunpack.c.l.b16 %v4027
        %v4122 = vunpack.c.l.b16 %v4031
        %v4123 = vunpack.c.l.b16 %v4034
        %v4124 = vunpack.c.l.b16 %v4038
        %v4125 = vunpack.c.l.b16 %v4041
        %v4126 = vunpack.c.l.b16 %v4045
        %v4127 = vunpack.c.l.b16 %v4048
        %v4128 = vunpack.c.l.b16 %v4052
        %v4129 = vunpack.c.l.b16 %v4055
        %v4130 = vunpack.c.l.b16 %v4059
        %v4131 = vunpack.c.l.b16 %v4062
        %v4132 = vunpack.c.l.b16 %v4066
        %v4133 = vunpack.c.l.b16 %v4069
        %v4134 = vunpack.c.l.b16 %v4073
        %v4135 = vunpack.c.l.b16 %v4076
        %v4136 = vunpack.c.l.b16 %v4080
        %v4137 = vunpack.c.l.b16 %v4083
        %v4138 = vunpack.c.l.b16 %v4087
        %v4139 = vunpack.c.l.b16 %v4090
        %v4140 = vpack.c.b16 %v4109, %v4108
        %v4141 = vpack.c.b16 %v4111, %v4110
        %v4142 = vpack.c.b16 %v4113, %v4112
        %v4143 = vpack.c.b16 %v4115, %v4114
        %v4144 = vpack.c.b16 %v4117, %v4116
        %v4145 = vpack.c.b16 %v4119, %v4118
        %v4146 = vpack.c.b16 %v4121, %v4120
        %v4147 = vpack.c.b16 %v4123, %v4122
        %v4148 = vpack.c.b16 %v4125, %v4124
        %v4149 = vpack.c.b16 %v4127, %v4126
        %v4150 = vpack.c.b16 %v4129, %v4128
        %v4151 = vpack.c.b16 %v4131, %v4130
        %v4152 = vpack.c.b16 %v4133, %v4132
        %v4153 = vpack.c.b16 %v4135, %v4134
        %v4154 = vpack.c.b16 %v4137, %v4136
        %v4155 = vpack.c.b16 %v4139, %v4138
        %v4188 = vunpack.c.l.b16 %v4092
        %v4189 = vunpack.c.l.b16 %v4093
        %v4190 = vunpack.c.l.b16 %v4094
        %v4191 = vunpack.c.l.b16 %v4095
        %v4192 = vunpack.c.l.b16 %v4096
        %v4193 = vunpack.c.l.b16 %v4097
        %v4194 = vunpack.c.l.b16 %v4098
        %v4195 = vunpack.c.l.b16 %v4099
        %v4196 = vunpack.c.l.b16 %v4100
        %v4197 = vunpack.c.l.b16 %v4101
        %v4198 = vunpack.c.l.b16 %v4102
        %v4199 = vunpack.c.l.b16 %v4103
        %v4200 = vunpack.c.l.b16 %v4104
        %v4201 = vunpack.c.l.b16 %v4105
        %v4202 = vunpack.c.l.b16 %v4106
        %v4203 = vunpack.c.l.b16 %v4107
        %v4204 = vpack.c.b16 %v4189, %v4188
        %v4205 = vpack.c.b16 %v4191, %v4190
        %v4206 = vpack.c.b16 %v4193, %v4192
        %v4207 = vpack.c.b16 %v4195, %v4194
        %v4208 = vpack.c.b16 %v4197, %v4196
        %v4209 = vpack.c.b16 %v4199, %v4198
        %v4210 = vpack.c.b16 %v4201, %v4200
        %v4211 = vpack.c.b16 %v4203, %v4202
        %4220 = vmatpush.bf16.msra.mxu0 %v4211
        %4221 = vmatpush.bf16.msra.mxu0 %v4210
        %4222 = vmatpush.bf16.msra.mxu0 %v4209
        %4223 = vmatpush.bf16.msra.mxu0 %v4208
        %4224 = vmatpush.bf16.msra.mxu0 %v4207
        %4225 = vmatpush.bf16.msra.mxu0 %v4206
        %4226 = vmatpush.bf16.msra.mxu0 %v4205
        %4227 = vmatpush.bf16.msra.mxu0 %v4204
        %4228 = vmatmul.bf16.gmra.mxu0 %v4140
        %v4229 = vpop.f32.mrf.mxu0
        %v4230 = vadd.f32 0.0, %v4229
        %v4231 = vpop.f32.mrf.mxu0
        %v4232 = vadd.f32 0.0, %v4231
        %4233 = vmatmul.bf16.gmra.mxu0 %v4141
        %v4234 = vpop.f32.mrf.mxu0
        %v4235 = vadd.f32 0.0, %v4234
        %v4236 = vpop.f32.mrf.mxu0
        %v4237 = vadd.f32 0.0, %v4236
        %4238 = vmatmul.bf16.gmra.mxu0 %v4142
        %v4239 = vpop.f32.mrf.mxu0
        %v4240 = vadd.f32 0.0, %v4239
        %v4241 = vpop.f32.mrf.mxu0
        %v4242 = vadd.f32 0.0, %v4241
        %4243 = vmatmul.bf16.gmra.mxu0 %v4143
        %v4244 = vpop.f32.mrf.mxu0
        %v4245 = vadd.f32 0.0, %v4244
        %v4246 = vpop.f32.mrf.mxu0
        %v4247 = vadd.f32 0.0, %v4246
        %4248 = vmatmul.bf16.gmra.mxu0 %v4144
        %v4249 = vpop.f32.mrf.mxu0
        %v4250 = vadd.f32 0.0, %v4249
        %v4251 = vpop.f32.mrf.mxu0
        %v4252 = vadd.f32 0.0, %v4251
        %4253 = vmatmul.bf16.gmra.mxu0 %v4145
        %v4254 = vpop.f32.mrf.mxu0
        %v4255 = vadd.f32 0.0, %v4254
        %v4256 = vpop.f32.mrf.mxu0
        %v4257 = vadd.f32 0.0, %v4256
        %4258 = vmatmul.bf16.gmra.mxu0 %v4146
        %v4259 = vpop.f32.mrf.mxu0
        %v4260 = vadd.f32 0.0, %v4259
        %v4261 = vpop.f32.mrf.mxu0
        %v4262 = vadd.f32 0.0, %v4261
        %4263 = vmatmul.bf16.gmra.mxu0 %v4147
        %v4264 = vpop.f32.mrf.mxu0
        %v4265 = vadd.f32 0.0, %v4264
        %v4266 = vpop.f32.mrf.mxu0
        %v4267 = vadd.f32 0.0, %v4266
        %4268 = vmatmul.bf16.gmra.mxu0 %v4148
        %v4269 = vpop.f32.mrf.mxu0
        %v4270 = vadd.f32 0.0, %v4269
        %v4271 = vpop.f32.mrf.mxu0
        %v4272 = vadd.f32 0.0, %v4271
        %4273 = vmatmul.bf16.gmra.mxu0 %v4149
        %v4274 = vpop.f32.mrf.mxu0
        %v4275 = vadd.f32 0.0, %v4274
        %v4276 = vpop.f32.mrf.mxu0
        %v4277 = vadd.f32 0.0, %v4276
        %4278 = vmatmul.bf16.gmra.mxu0 %v4150
        %v4279 = vpop.f32.mrf.mxu0
        %v4280 = vadd.f32 0.0, %v4279
        %v4281 = vpop.f32.mrf.mxu0
        %v4282 = vadd.f32 0.0, %v4281
        %4283 = vmatmul.bf16.gmra.mxu0 %v4151
        %v4284 = vpop.f32.mrf.mxu0
        %v4285 = vadd.f32 0.0, %v4284
        %v4286 = vpop.f32.mrf.mxu0
        %v4287 = vadd.f32 0.0, %v4286
        %4288 = vmatmul.bf16.gmra.mxu0 %v4152
        %v4289 = vpop.f32.mrf.mxu0
        %v4290 = vadd.f32 0.0, %v4289
        %v4291 = vpop.f32.mrf.mxu0
        %v4292 = vadd.f32 0.0, %v4291
        %4293 = vmatmul.bf16.gmra.mxu0 %v4153
        %v4294 = vpop.f32.mrf.mxu0
        %v4295 = vadd.f32 0.0, %v4294
        %v4296 = vpop.f32.mrf.mxu0
        %v4297 = vadd.f32 0.0, %v4296
        %4298 = vmatmul.bf16.gmra.mxu0 %v4154
        %v4299 = vpop.f32.mrf.mxu0
        %v4300 = vadd.f32 0.0, %v4299
        %v4301 = vpop.f32.mrf.mxu0
        %v4302 = vadd.f32 0.0, %v4301
        %4303 = vmatmul.bf16.gmra.mxu0 %v4155
        %v4304 = vpop.f32.mrf.mxu0
        %v4305 = vadd.f32 0.0, %v4304
        %v4306 = vpop.f32.mrf.mxu0
        %v4307 = vadd.f32 0.0, %v4306
        %4308 = vdwg.mxu0
        %v4309 = vadd.f32 %v3883, %v4230
        %v4310 = vadd.f32 %v3884, %v4232
        %v4311 = vadd.f32 %v3885, %v4235
        %v4312 = vadd.f32 %v3886, %v4237
        %v4313 = vadd.f32 %v3887, %v4240
        %v4314 = vadd.f32 %v3888, %v4242
        %v4315 = vadd.f32 %v3889, %v4245
        %v4316 = vadd.f32 %v3890, %v4247
        %v4317 = vadd.f32 %v3891, %v4250
        %v4318 = vadd.f32 %v3892, %v4252
        %v4319 = vadd.f32 %v3893, %v4255
        %v4320 = vadd.f32 %v3894, %v4257
        %v4321 = vadd.f32 %v3895, %v4260
        %v4322 = vadd.f32 %v3896, %v4262
        %v4323 = vadd.f32 %v3897, %v4265
        %v4324 = vadd.f32 %v3898, %v4267
        %v4325 = vadd.f32 %v3899, %v4270
        %v4326 = vadd.f32 %v3900, %v4272
        %v4327 = vadd.f32 %v3901, %v4275
        %v4328 = vadd.f32 %v3902, %v4277
        %v4329 = vadd.f32 %v3903, %v4280
        %v4330 = vadd.f32 %v3904, %v4282
        %v4331 = vadd.f32 %v3905, %v4285
        %v4332 = vadd.f32 %v3906, %v4287
        %v4333 = vadd.f32 %v3907, %v4290
        %v4334 = vadd.f32 %v3908, %v4292
        %v4335 = vadd.f32 %v3909, %v4295
        %v4336 = vadd.f32 %v3910, %v4297
        %v4337 = vadd.f32 %v3911, %v4300
        %v4338 = vadd.f32 %v3912, %v4302
        %v4339 = vadd.f32 %v3913, %v4305
        %v4340 = vadd.f32 %v3914, %v4307
        %v4341 = vmax.f32 %v4309, 0.0
        %v4342 = vmax.f32 %v4310, 0.0
        %v4343 = vmax.f32 %v4311, 0.0
        %v4344 = vmax.f32 %v4312, 0.0
        %v4345 = vmax.f32 %v4313, 0.0
        %v4346 = vmax.f32 %v4314, 0.0
        %v4347 = vmax.f32 %v4315, 0.0
        %v4348 = vmax.f32 %v4316, 0.0
        %v4349 = vmax.f32 %v4317, 0.0
        %v4350 = vmax.f32 %v4318, 0.0
        %v4351 = vmax.f32 %v4319, 0.0
        %v4352 = vmax.f32 %v4320, 0.0
        %v4353 = vmax.f32 %v4321, 0.0
        %v4354 = vmax.f32 %v4322, 0.0
        %v4355 = vmax.f32 %v4323, 0.0
        %v4356 = vmax.f32 %v4324, 0.0
        %v4357 = vmax.f32 %v4325, 0.0
        %v4358 = vmax.f32 %v4326, 0.0
        %v4359 = vmax.f32 %v4327, 0.0
        %v4360 = vmax.f32 %v4328, 0.0
        %v4361 = vmax.f32 %v4329, 0.0
        %v4362 = vmax.f32 %v4330, 0.0
        %v4363 = vmax.f32 %v4331, 0.0
        %v4364 = vmax.f32 %v4332, 0.0
        %v4365 = vmax.f32 %v4333, 0.0
        %v4366 = vmax.f32 %v4334, 0.0
        %v4367 = vmax.f32 %v4335, 0.0
        %v4368 = vmax.f32 %v4336, 0.0
        %v4369 = vmax.f32 %v4337, 0.0
        %v4370 = vmax.f32 %v4338, 0.0
        %v4371 = vmax.f32 %v4339, 0.0
        %v4372 = vmax.f32 %v4340, 0.0
        %4373 = vst [vmem:[%s167] sm:$0xff] %v4341
        %4374 = vst [vmem:[%s167 + $0x8] sm:$0xff] %v4342
        %4375 = vst [vmem:[%s167 + $0x10] sm:$0xff] %v4343
        %4376 = vst [vmem:[%s167 + $0x18] sm:$0xff] %v4344
        %4377 = vst [vmem:[%s167 + $0x20] sm:$0xff] %v4345
        %4378 = vst [vmem:[%s167 + $0x28] sm:$0xff] %v4346
        %4379 = vst [vmem:[%s167 + $0x30] sm:$0xff] %v4347
        %4380 = vst [vmem:[%s167 + $0x38] sm:$0xff] %v4348
        %4381 = vst [vmem:[%s167 + $0x40] sm:$0xff] %v4349
        %4382 = vst [vmem:[%s167 + $0x48] sm:$0xff] %v4350
        %4383 = vst [vmem:[%s167 + $0x50] sm:$0xff] %v4351
        %4384 = vst [vmem:[%s167 + $0x58] sm:$0xff] %v4352
        %4385 = vst [vmem:[%s167 + $0x60] sm:$0xff] %v4353
        %4386 = vst [vmem:[%s167 + $0x68] sm:$0xff] %v4354
        %4387 = vst [vmem:[%s167 + $0x70] sm:$0xff] %v4355
        %4388 = vst [vmem:[%s167 + $0x78] sm:$0xff] %v4356
        %4389 = vst [vmem:[%s167 + $0x80] sm:$0xff] %v4357
        %4390 = vst [vmem:[%s167 + $0x88] sm:$0xff] %v4358
        %4391 = vst [vmem:[%s167 + $0x90] sm:$0xff] %v4359
        %4392 = vst [vmem:[%s167 + $0x98] sm:$0xff] %v4360
        %4393 = vst [vmem:[%s167 + $0xa0] sm:$0xff] %v4361
        %4394 = vst [vmem:[%s167 + $0xa8] sm:$0xff] %v4362
        %4395 = vst [vmem:[%s167 + $0xb0] sm:$0xff] %v4363
        %4396 = vst [vmem:[%s167 + $0xb8] sm:$0xff] %v4364
        %4397 = vst [vmem:[%s167 + $0xc0] sm:$0xff] %v4365
        %4398 = vst [vmem:[%s167 + $0xc8] sm:$0xff] %v4366
        %4399 = vst [vmem:[%s167 + $0xd0] sm:$0xff] %v4367
        %4400 = vst [vmem:[%s167 + $0xd8] sm:$0xff] %v4368
        %4401 = vst [vmem:[%s167 + $0xe0] sm:$0xff] %v4369
        %4402 = vst [vmem:[%s167 + $0xe8] sm:$0xff] %v4370
        %4403 = vst [vmem:[%s167 + $0xf0] sm:$0xff] %v4371
        %4404 = vst [vmem:[%s167 + $0xf8] sm:$0xff] %v4372
        %v4405 = vadd.f32 %v4341, %v4342
        %v4406 = vadd.f32 %v4405, %v4343
        %v4407 = vadd.f32 %v4406, %v4344
        %v4408 = vadd.f32 %v4407, %v4345
        %v4409 = vadd.f32 %v4408, %v4346
        %v4410 = vadd.f32 %v4409, %v4347
        %v4411 = vadd.f32 %v4410, %v4348
        %v4412 = vadd.f32 %v4411, %v4349
        %v4413 = vadd.f32 %v4412, %v4350
        %v4414 = vadd.f32 %v4413, %v4351
        %v4415 = vadd.f32 %v4414, %v4352
        %v4416 = vadd.f32 %v4415, %v4353
        %v4417 = vadd.f32 %v4416, %v4354
        %v4418 = vadd.f32 %v4417, %v4355
        %v4419 = vadd.f32 %v4418, %v4356
        %v4420 = vadd.f32 %v4419, %v4357
        %v4421 = vadd.f32 %v4420, %v4358
        %v4422 = vadd.f32 %v4421, %v4359
        %v4423 = vadd.f32 %v4422, %v4360
        %v4424 = vadd.f32 %v4423, %v4361
        %v4425 = vadd.f32 %v4424, %v4362
        %v4426 = vadd.f32 %v4425, %v4363
        %v4427 = vadd.f32 %v4426, %v4364
        %v4428 = vadd.f32 %v4427, %v4365
        %v4429 = vadd.f32 %v4428, %v4366
        %v4430 = vadd.f32 %v4429, %v4367
        %v4431 = vadd.f32 %v4430, %v4368
        %v4432 = vadd.f32 %v4431, %v4369
        %v4433 = vadd.f32 %v4432, %v4370
        %v4434 = vadd.f32 %v4433, %v4371
        %v4435 = vadd.f32 %v4434, %v4372
        %v4436 = vrot.slane %v4435, 4
        %v4437 = vadd.f32 %v4435, %v4436
        %v4438 = vrot.slane %v4437, 2
        %v4439 = vadd.f32 %v4437, %v4438
        %v4440 = vrot.slane %v4439, 1
        %v4441 = vadd.f32 %v4439, %v4440
        %4442 = vst [vmem:[%s174] sm:$0x1] %v4441
        %v4443 = vmul.f32 %v4341, %v4341
        %v4444 = vmul.f32 %v4342, %v4342
        %v4445 = vmul.f32 %v4343, %v4343
        %v4446 = vmul.f32 %v4344, %v4344
        %v4447 = vmul.f32 %v4345, %v4345
        %v4448 = vmul.f32 %v4346, %v4346
        %v4449 = vmul.f32 %v4347, %v4347
        %v4450 = vmul.f32 %v4348, %v4348
        %v4451 = vmul.f32 %v4349, %v4349
        %v4452 = vmul.f32 %v4350, %v4350
        %v4453 = vmul.f32 %v4351, %v4351
        %v4454 = vmul.f32 %v4352, %v4352
        %v4455 = vmul.f32 %v4353, %v4353
        %v4456 = vmul.f32 %v4354, %v4354
        %v4457 = vmul.f32 %v4355, %v4355
        %v4458 = vmul.f32 %v4356, %v4356
        %v4459 = vmul.f32 %v4357, %v4357
        %v4460 = vmul.f32 %v4358, %v4358
        %v4461 = vmul.f32 %v4359, %v4359
        %v4462 = vmul.f32 %v4360, %v4360
        %v4463 = vmul.f32 %v4361, %v4361
        %v4464 = vmul.f32 %v4362, %v4362
        %v4465 = vmul.f32 %v4363, %v4363
        %v4466 = vmul.f32 %v4364, %v4364
        %v4467 = vmul.f32 %v4365, %v4365
        %v4468 = vmul.f32 %v4366, %v4366
        %v4469 = vmul.f32 %v4367, %v4367
        %v4470 = vmul.f32 %v4368, %v4368
        %v4471 = vmul.f32 %v4369, %v4369
        %v4472 = vmul.f32 %v4370, %v4370
        %v4473 = vmul.f32 %v4371, %v4371
        %v4474 = vmul.f32 %v4372, %v4372
        %v4475 = vadd.f32 %v4443, %v4444
        %v4476 = vadd.f32 %v4475, %v4445
        %v4477 = vadd.f32 %v4476, %v4446
        %v4478 = vadd.f32 %v4477, %v4447
        %v4479 = vadd.f32 %v4478, %v4448
        %v4480 = vadd.f32 %v4479, %v4449
        %v4481 = vadd.f32 %v4480, %v4450
        %v4482 = vadd.f32 %v4481, %v4451
        %v4483 = vadd.f32 %v4482, %v4452
        %v4484 = vadd.f32 %v4483, %v4453
        %v4485 = vadd.f32 %v4484, %v4454
        %v4486 = vadd.f32 %v4485, %v4455
        %v4487 = vadd.f32 %v4486, %v4456
        %v4488 = vadd.f32 %v4487, %v4457
        %v4489 = vadd.f32 %v4488, %v4458
        %v4490 = vadd.f32 %v4489, %v4459
        %v4491 = vadd.f32 %v4490, %v4460
        %v4492 = vadd.f32 %v4491, %v4461
        %v4493 = vadd.f32 %v4492, %v4462
        %v4494 = vadd.f32 %v4493, %v4463
        %v4495 = vadd.f32 %v4494, %v4464
        %v4496 = vadd.f32 %v4495, %v4465
        %v4497 = vadd.f32 %v4496, %v4466
        %v4498 = vadd.f32 %v4497, %v4467
        %v4499 = vadd.f32 %v4498, %v4468
        %v4500 = vadd.f32 %v4499, %v4469
        %v4501 = vadd.f32 %v4500, %v4470
        %v4502 = vadd.f32 %v4501, %v4471
        %v4503 = vadd.f32 %v4502, %v4472
        %v4504 = vadd.f32 %v4503, %v4473
        %v4505 = vadd.f32 %v4504, %v4474
        %v4506 = vrot.slane %v4505, 4
        %v4507 = vadd.f32 %v4505, %v4506
        %v4508 = vrot.slane %v4507, 2
        %v4509 = vadd.f32 %v4507, %v4508
        %v4510 = vrot.slane %v4509, 1
        %v4511 = vadd.f32 %v4509, %v4510
        %4512 = vst [vmem:[%s174 + $0x1] sm:$0x1] %v4511
        %s4513 = sand.u32 %s76, 1
        %s4514 = scalar_lea.sflag [#allocation3], %s4513
        %s4515 = sand.u32 %s76, 1
        %s4516 = smul.addr %s4515, 256
        %s4517 = scalar_lea.vmem [#allocation2], %s4516
        %s4518 = sand.u32 %s102, 1
        %s4519 = scalar_lea.sflag [#allocation5], %s4518
        %s4520 = sand.u32 %s102, 1
        %s4521 = smul.addr %s4520, 2
        %s4522 = scalar_lea.vmem [#allocation4], %s4521
        // Predicated region
        $region29: #{tpu_custom_call.1} parent=27 // pred_check
          %p4523 = pneg %p86
        $region30: #{tpu_custom_call.1} parent=27 // pred_check_branch
          %4525 = sbr.rel (%p4523) target = $region32
        $region31: #{tpu_custom_call.1} parent=27 // pred_region
          %4527 = vsyncadd %s4514, 0
          %s4528 = smul.addr %s21, 32
          %s4529 = smul.addr %s4528, 8
          %s4530 = scalar_lea.hbm %s2, %s4529
          %s4531 = sshll.u32 %s4517, 4
          %s4532 = int_to_ptr.vmem [resolvable:$true] %s4531
          %s4533 = sshll.u32 %s4530, 4
          %s4534 = int_to_ptr.hbm [resolvable:$true] %s4533
          %4539 = dma.vmem_to_hbm [thread:$0]  %s4532, 4096, %s4534, %s4514, 128, 128, 8
        $region32: #{tpu_custom_call.1} parent=27 // pred_fallthru
          _
        // Predicated region
        $region33: #{tpu_custom_call.1} parent=27 // pred_check
          %p4540 = pneg %p112
        $region34: #{tpu_custom_call.1} parent=27 // pred_check_branch
          %4542 = sbr.rel (%p4540) target = $region36
        $region35: #{tpu_custom_call.1} parent=27 // pred_region
          %4544 = vsyncadd %s4519, 0
          %s4545 = smul.addr %s21, 2
          %s4546 = scalar_lea.hbm %s3, %s4545
          %s4548 = sshll.u32 %s4522, 4
          %s4549 = int_to_ptr.vmem [resolvable:$true] %s4548
          %s4550 = sshll.u32 %s4546, 4
          %s4551 = int_to_ptr.hbm [resolvable:$true] %s4550
          %4553 = dma.vmem_to_hbm [thread:$0]  %s4549, 32, %s4551, %s4519
        $region36: #{tpu_custom_call.1} parent=27 // pred_fallthru
          _
      $region28: #{tpu_custom_call.1} parent=5 // pred_fallthru
        _
      %p4554 = scmp.le.s32.totalorder 2, %s16
      // Predicated region
      $region37: #{tpu_custom_call.1} parent=5 // pred_check
        %p4555 = pneg %p4554
      $region38: #{tpu_custom_call.1} parent=5 // pred_check_branch
        %4557 = sbr.rel (%p4555) target = $region40
      $region39: #{tpu_custom_call.1} parent=5 // pred_region
        %s4558 = ssub.s32 %s16, 2
        // Predicated region
        $region41: #{tpu_custom_call.1} parent=39 // pred_check
          %p4559 = pneg %p92
        $region42: #{tpu_custom_call.1} parent=39 // pred_check_branch
          %4561 = sbr.rel (%p4559) target = $region44
        $region43: #{tpu_custom_call.1} parent=39 // pred_region
          %s4562 = sand.u32 %s77, 1
          %s4563 = scalar_lea.sflag [#allocation3], %s4562
          %s4564 = sand.u32 %s77, 1
          %s4565 = smul.addr %s4564, 256
          %s4566 = scalar_lea.vmem [#allocation2], %s4565
          %4568 = dma.done %s4563, 4096
        $region44: #{tpu_custom_call.1} parent=39 // pred_fallthru
          _
        // Predicated region
        $region45: #{tpu_custom_call.1} parent=39 // pred_check
          %p4569 = pneg %p118
        $region46: #{tpu_custom_call.1} parent=39 // pred_check_branch
          %4571 = sbr.rel (%p4569) target = $region48
        $region47: #{tpu_custom_call.1} parent=39 // pred_region
          %s4572 = sand.u32 %s103, 1
          %s4573 = scalar_lea.sflag [#allocation5], %s4572
          %s4574 = sand.u32 %s103, 1
          %s4575 = smul.addr %s4574, 2
          %s4576 = scalar_lea.vmem [#allocation4], %s4575
          %4578 = dma.done %s4573, 32
        $region48: #{tpu_custom_call.1} parent=39 // pred_fallthru
          _
      $region40: #{tpu_custom_call.1} parent=5 // pred_fallthru
        _
    $region6: #{tpu_custom_call.1} parent=1 // loop_footer
      %s20 = sadd.s32 1, %s16
    $region7: #{tpu_custom_call.1} parent=1 // loop_footer_branch
      %15 = sbr.rel target = $region3
    $region8: #{tpu_custom_call.1} parent=1 // loop_exit
      _
    %4579 = vsyncpa [#allocation3], 1
    %s4580 = scalar_lea.sflag [#allocation3], 1
    %4581 = vsyncpa %s4580, 1
    %4582 = vsyncpa [#allocation5], 1
    %s4583 = scalar_lea.sflag [#allocation5], 1
    %4584 = vsyncpa %s4583, 1

</llo_original>
